<compile_context>
chip_gen: v6e
topology: v6e:2x2x1
jax: 0.10.0
libtpu: 0.0.40
codegen_flags: <defaults>
</compile_context>

<pallas_src>
import functools

import jax
import jax.numpy as jnp
from jax.experimental import pallas as pl
from jax.experimental.pallas import tpu as pltpu

# Head class counts (synthetic `targets` spec; order matches the PyTorch module).
TARGETS = {
    "wealth": 5,
    "water_src": 7,
    "toilet_type": 4,
    "roof": 6,
    "cooking_fuel": 5,
    "drought": 3,
    "pop_density": 8,
    "livestock_bin": 2,
    "agriculture_land_bin": 2,
}
FEAT_C = 1024          # fixed by nn.Linear(1024, 512) in the classifier
HEAD_PAD = 128         # lane-dense padded width of the concatenated head logits

_VMEM_BUDGET_BYTES = 40 * 1024 * 1024   # per-step working-set budget for tile sizing
_VMEM_LIMIT_BYTES = 48 * 1024 * 1024    # explicit scoped-VMEM limit (< v7x 64 MiB)


def _round_up(x, m):
    return -(-x // m) * m


# ----------- fused conv + ReLU + global-avg-pool + classifier + heads ----------- #

def _fused_forward_kernel(a_ref, w_ref, b_ref, w1_ref, b1_ref, w2_ref, b2_ref,
                          wh_ref, bh_ref, out_ref, acc_ref, *,
                          inv_hw, n_pad_rows):
    """One M tile of: acc += sum_rows(relu(patches @ W + bias)); epilogue = heads.

    a_ref:  [B, tm, Kp] im2col rows (Kp lane-aligned to 128).
    w_ref:  [Kp, 1024] resident conv weights, b_ref: [1, 1024].
    w1/b1/w2/b2/wh/bh: resident classifier + concatenated-head params.
    out_ref: [B, HEAD_PAD] logits (written only on the last M tile).
    acc_ref: [B, 1024] f32 VMEM accumulator (pooled features, pre-scale).
    """
    m_idx = pl.program_id(0)

    @pl.when(m_idx == 0)
    def _():
        acc_ref[...] = jnp.zeros_like(acc_ref)

    bsz, tm, kp = a_ref.shape
    n = w_ref.shape[1]

    # One batched matmul over all B*tm rows: fills the MXU far better than B
    # separate [tm,Kp] matmuls and ends with a single full-tile accumulate.
    y = jnp.dot(a_ref[...].reshape(bsz * tm, kp), w_ref[...],
                preferred_element_type=jnp.float32)              # [B*tm, N]
    y = jnp.maximum(y + b_ref[...], 0.0)
    acc_ref[...] += jnp.sum(y.reshape(bsz, tm, n), axis=1)       # [B, N]

    @pl.when(m_idx == pl.num_programs(0) - 1)
    def _():
        acc = acc_ref[...]
        if n_pad_rows:
            # Zero-padded im2col rows each contributed exactly relu(bias);
            # remove them analytically instead of masking [tm, N] tiles.
            acc = acc - n_pad_rows * jnp.maximum(b_ref[...], 0.0)
        pooled = acc * inv_hw                                    # AdaptiveAvgPool2d(1)

        # Classifier (dropout = identity in eval) + all 9 heads concatenated.
        h1 = jnp.maximum(
            jnp.dot(pooled, w1_ref[...], preferred_element_type=jnp.float32)
            + b1_ref[...], 0.0)                                  # [B, 512]
        h2 = jnp.maximum(
            jnp.dot(h1, w2_ref[...], preferred_element_type=jnp.float32)
            + b2_ref[...], 0.0)                                  # [B, 256]
        out_ref[...] = (
            jnp.dot(h2, wh_ref[...], preferred_element_type=jnp.float32)
            + bh_ref[...])                                       # [B, HEAD_PAD]


def fused_forward_pallas(patches, w_mat, b, w1, b1, w2, b2, wh, bh, *, tm_max=512):
    """patches: [B, M, Kp] (Kp lane-padded), returns [B, HEAD_PAD] logits."""
    B, M, Kp = patches.shape
    N = w_mat.shape[1]

    def footprint(tm):
        a_bytes = 2 * B * tm * Kp * 4                # double-buffered patches tile
        w_bytes = 2 * Kp * N * 4                     # resident conv weights
        inter = 3 * B * tm * N * 4                   # matmul / relu intermediates
        cls = 2 * 4 * int(w1.size + b1.size + w2.size + b2.size + wh.size + bh.size)
        misc = 4 * (2 * B * N + 2 * B * HEAD_PAD + N)
        return a_bytes + w_bytes + inter + cls + misc

    # Largest 8-aligned tm that fits the per-generation-safe VMEM budget.
    tm = min(tm_max, _round_up(M, 8))
    while tm > 8 and footprint(tm) > _VMEM_BUDGET_BYTES:
        tm = max(8, _round_up(tm // 2, 8))

    m_pad = _round_up(M, tm)
    if m_pad != M:
        patches = jnp.pad(patches, ((0, 0), (0, m_pad - M), (0, 0)))

    kernel = functools.partial(
        _fused_forward_kernel,
        inv_hw=1.0 / float(M),
        n_pad_rows=float(m_pad - M))

    flops = (2 * B * m_pad * Kp * N
             + 2 * B * (w1.shape[0] * w1.shape[1]
                        + w2.shape[0] * w2.shape[1]
                        + wh.shape[0] * wh.shape[1]))
    bytes_accessed = 4 * int(B * m_pad * Kp + Kp * N + N
                             + w1.size + b1.size + w2.size + b2.size
                             + wh.size + bh.size + B * HEAD_PAD)

    def resident(shape):
        return pl.BlockSpec(shape, lambda m, _nd=len(shape): (0,) * _nd)

    return pl.pallas_call(
        kernel,
        out_shape=jax.ShapeDtypeStruct((B, HEAD_PAD), jnp.float32),
        grid=(m_pad // tm,),                         # single M reduction axis
        in_specs=[
            pl.BlockSpec((B, tm, Kp), lambda m: (0, m, 0)),
            resident(w_mat.shape), resident(b.shape),
            resident(w1.shape), resident(b1.shape),
            resident(w2.shape), resident(b2.shape),
            resident(wh.shape), resident(bh.shape),
        ],
        out_specs=pl.BlockSpec((B, HEAD_PAD), lambda m: (0, 0)),
        scratch_shapes=[pltpu.VMEM((B, N), jnp.float32)],
        compiler_params=pltpu.CompilerParams(
            dimension_semantics=("arbitrary",),
            vmem_limit_bytes=_VMEM_LIMIT_BYTES),
        cost_estimate=pl.CostEstimate(
            flops=int(flops), transcendentals=0, bytes_accessed=bytes_accessed),
    )(patches, w_mat, b, w1, b1, w2, b2, wh, bh)


# --------------------------- glue (plain JAX) --------------------------- #

def im2col(x_nhwc, ksize, stride, pad):
    B, H, W, C = x_nhwc.shape
    xp = jnp.pad(x_nhwc, ((0, 0), (pad, pad), (pad, pad), (0, 0)))
    Ho = (H + 2 * pad - ksize) // stride + 1
    Wo = (W + 2 * pad - ksize) // stride + 1
    cols = []
    for i in range(ksize):
        for j in range(ksize):
            cols.append(xp[:, i:i + stride * Ho:stride, j:j + stride * Wo:stride, :])
    p = jnp.concatenate(cols, axis=-1)                  # [B, Ho, Wo, k*k*C]
    return p.reshape(B, Ho * Wo, ksize * ksize * C), Ho, Wo


def init_params(key, c_in):
    ks = jax.random.split(key, 10)
    total = sum(TARGETS.values())
    inv = lambda f: 1.0 / jnp.sqrt(jnp.float32(f))
    return {
        # backbone stand-in conv: [kh, kw, Cin, Cout]
        "wc": jax.random.normal(ks[0], (3, 3, c_in, FEAT_C), jnp.float32) * 0.05,
        "bc": jax.random.normal(ks[1], (1, FEAT_C), jnp.float32) * 0.01,
        # classifier
        "w1": jax.random.normal(ks[2], (FEAT_C, 512), jnp.float32) * inv(FEAT_C),
        "b1": jax.random.normal(ks[3], (1, 512), jnp.float32) * inv(FEAT_C),
        "w2": jax.random.normal(ks[4], (512, 256), jnp.float32) * inv(512),
        "b2": jax.random.normal(ks[5], (1, 256), jnp.float32) * inv(512),
        # 9 heads concatenated along the output axis
        "wh": jax.random.normal(ks[6], (256, total), jnp.float32) * inv(256),
        "bh": jax.random.normal(ks[7], (1, total), jnp.float32) * inv(256),
    }


def sentinel_densenet_forward(x_nchw, params):
    B, c_in, H, W = x_nchw.shape
    x = jnp.transpose(x_nchw, (0, 2, 3, 1))                 # -> NHWC
    patches, Ho, Wo = im2col(x, ksize=3, stride=2, pad=1)   # [B, Ho*Wo, 9*c_in]

    # Lane-align the contraction dim (zero rows/cols are exact no-ops).
    K = 9 * c_in
    Kp = _round_up(K, 128)
    patches = jnp.pad(patches, ((0, 0), (0, 0), (0, Kp - K)))
    wc_mat = jnp.pad(params["wc"].reshape(K, FEAT_C), ((0, Kp - K), (0, 0)))

    # Lane-pad the concatenated head output to 128 columns (zero weights).
    total = sum(TARGETS.values())
    wh = jnp.pad(params["wh"], ((0, 0), (0, HEAD_PAD - total)))
    bh = jnp.pad(params["bh"], ((0, 0), (0, HEAD_PAD - total)))

    # Single fused kernel: conv + ReLU + global-avg-pool + classifier + heads.
    logits = fused_forward_pallas(patches, wc_mat, params["bc"],
                                  params["w1"], params["b1"],
                                  params["w2"], params["b2"], wh, bh)
    outs, off = [], 0
    for name, n in TARGETS.items():
        outs.append(logits[:, off:off + n])
        off += n
    return tuple(outs)


def reference_forward(x_nchw, params):
    """Pure-jnp reference for correctness checking."""
    B, c_in, _, _ = x_nchw.shape
    x = jnp.transpose(x_nchw, (0, 2, 3, 1))
    patches, Ho, Wo = im2col(x, 3, 2, 1)                # [B, HW, 9*c_in]
    wc_mat = params["wc"].reshape(9 * c_in, FEAT_C)
    feat = jnp.maximum(patches @ wc_mat + params["bc"], 0.0)    # [B, HW, 1024]
    pooled = feat.mean(axis=1)
    h1 = jnp.maximum(pooled @ params["w1"] + params["b1"], 0.0)
    h2 = jnp.maximum(h1 @ params["w2"] + params["b2"], 0.0)
    logits = h2 @ params["wh"] + params["bh"]
    outs, off = [], 0
    for name, n in TARGETS.items():
        outs.append(logits[:, off:off + n])
        off += n
    return tuple(outs)


if __name__ == "__main__":
    key = jax.random.PRNGKey(0)
    kx, kp = jax.random.split(key)
    B, C_IN, H, W = 2, 4, 16, 16
    x = jax.random.normal(kx, (B, C_IN, H, W), jnp.float32)     # NCHW like PyTorch
    params = init_params(kp, C_IN)

    outs = jax.block_until_ready(
        jax.jit(sentinel_densenet_forward)(x, params))
    refs = reference_forward(x, params)

    for name, o, r in zip(TARGETS.keys(), outs, refs):
        assert o.shape == (B, TARGETS[name]), (name, o.shape)
        assert jnp.allclose(o, r, atol=1e-4, rtol=1e-4), name

    print("KERNEL_OK")
</pallas_src>

<mosaic_0001>
module attributes {stable_mosaic.version = 11 : i64} {
  func.func @_fused_forward_kernel(%arg0: i32, %arg1: memref<2x64x128xf32, #tpu.memory_space<vmem>>, %arg2: memref<128x1024xf32, #tpu.memory_space<vmem>>, %arg3: memref<1x1024xf32, #tpu.memory_space<vmem>>, %arg4: memref<1024x512xf32, #tpu.memory_space<vmem>>, %arg5: memref<1x512xf32, #tpu.memory_space<vmem>>, %arg6: memref<512x256xf32, #tpu.memory_space<vmem>>, %arg7: memref<1x256xf32, #tpu.memory_space<vmem>>, %arg8: memref<256x128xf32, #tpu.memory_space<vmem>>, %arg9: memref<1x128xf32, #tpu.memory_space<vmem>>, %arg10: memref<2x128xf32, #tpu.memory_space<vmem>>, %arg11: memref<2x1024xf32, #tpu.memory_space<vmem>>) attributes {dimension_semantics = [#tpu.dimension_semantics<arbitrary>], iteration_bounds = array<i64: 1>, scalar_prefetch = 0 : i64, scratch_operands = 1 : i64, tpu.core_type = #tpu.core_type<tc>, window_params = [{transform_indices = @transform_0, window_bounds = array<i64: 2, 64, 128>}, {pipeline_mode = #tpu.pipeline_mode<synchronous>, transform_indices = @transform_1, window_bounds = array<i64: 128, 1024>}, {pipeline_mode = #tpu.pipeline_mode<synchronous>, transform_indices = @transform_2, window_bounds = array<i64: 1, 1024>}, {pipeline_mode = #tpu.pipeline_mode<synchronous>, transform_indices = @transform_3, window_bounds = array<i64: 1024, 512>}, {pipeline_mode = #tpu.pipeline_mode<synchronous>, transform_indices = @transform_4, window_bounds = array<i64: 1, 512>}, {pipeline_mode = #tpu.pipeline_mode<synchronous>, transform_indices = @transform_5, window_bounds = array<i64: 512, 256>}, {pipeline_mode = #tpu.pipeline_mode<synchronous>, transform_indices = @transform_6, window_bounds = array<i64: 1, 256>}, {pipeline_mode = #tpu.pipeline_mode<synchronous>, transform_indices = @transform_7, window_bounds = array<i64: 256, 128>}, {pipeline_mode = #tpu.pipeline_mode<synchronous>, transform_indices = @transform_8, window_bounds = array<i64: 1, 128>}, {pipeline_mode = #tpu.pipeline_mode<synchronous>, transform_indices = @transform_9, window_bounds = array<i64: 2, 128>}]} {
    %c0_i32 = arith.constant 0 : i32
    %0 = arith.cmpi eq, %arg0, %c0_i32 : i32
    %1 = arith.extui %0 : i1 to i32
    %c0_i32_0 = arith.constant 0 : i32
    %2 = arith.cmpi ne, %1, %c0_i32_0 : i32
    scf.if %2 {
      %cst_15 = arith.constant 0.000000e+00 : f32
      %20 = vector.broadcast %cst_15 : f32 to vector<2x1024xf32>
      %c0_16 = arith.constant 0 : index
      %c0_17 = arith.constant 0 : index
      %21 = vector.load %arg11[%c0_16, %c0_17] : memref<2x1024xf32, #tpu.memory_space<vmem>>, vector<2x1024xf32>
      tpu.vector_store %arg11[%c0_16, %c0_17], %20 {strides = array<i32>} : memref<2x1024xf32, #tpu.memory_space<vmem>>, vector<2x1024xf32>,
    } else {
    }
    %c0 = arith.constant 0 : index
    %c0_1 = arith.constant 0 : index
    %c0_2 = arith.constant 0 : index
    %3 = vector.load %arg1[%c0, %c0_1, %c0_2] : memref<2x64x128xf32, #tpu.memory_space<vmem>>, vector<2x64x128xf32>
    %4 = vector.shape_cast %3 : vector<2x64x128xf32> to vector<128x128xf32>
    %c0_3 = arith.constant 0 : index
    %c0_4 = arith.constant 0 : index
    %5 = vector.load %arg2[%c0_3, %c0_4] : memref<128x1024xf32, #tpu.memory_space<vmem>>, vector<128x1024xf32>
    %cst = arith.constant dense<0.000000e+00> : vector<128x1024xf32>
    %6 = tpu.matmul %4, %5, %cst {dimension_numbers = #tpu.dot_dimension_numbers<[1], [0], [0], [1], [0, 0, 1, 1], [], []>} : vector<128x128xf32>, vector<128x1024xf32>, vector<128x1024xf32> -> vector<128x1024xf32>
    %c0_5 = arith.constant 0 : index
    %c0_6 = arith.constant 0 : index
    %7 = vector.load %arg3[%c0_5, %c0_6] : memref<1x1024xf32, #tpu.memory_space<vmem>>, vector<1x1024xf32>
    %8 = vector.broadcast %7 : vector<1x1024xf32> to vector<128x1024xf32>
    %9 = arith.addf %6, %8 : vector<128x1024xf32>
    %cst_7 = arith.constant 0.000000e+00 : f32
    %10 = vector.broadcast %cst_7 : f32 to vector<128x1024xf32>
    %11 = arith.maximumf %9, %10 : vector<128x1024xf32>
    %c0_8 = arith.constant 0 : index
    %c0_9 = arith.constant 0 : index
    %12 = vector.load %arg11[%c0_8, %c0_9] : memref<2x1024xf32, #tpu.memory_space<vmem>>, vector<2x1024xf32>
    %13 = vector.shape_cast %11 : vector<128x1024xf32> to vector<2x64x1024xf32>
    %cst_10 = arith.constant dense<0.000000e+00> : vector<2x1024xf32>
    %14 = vector.multi_reduction <add>, %13, %cst_10 [1] : vector<2x64x1024xf32> to vector<2x1024xf32>
    %15 = arith.addf %12, %14 : vector<2x1024xf32>
    %c0_11 = arith.constant 0 : index
    %c0_12 = arith.constant 0 : index
    %16 = vector.load %arg11[%c0_11, %c0_12] : memref<2x1024xf32, #tpu.memory_space<vmem>>, vector<2x1024xf32>
    tpu.vector_store %arg11[%c0_11, %c0_12], %15 {strides = array<i32>} : memref<2x1024xf32, #tpu.memory_space<vmem>>, vector<2x1024xf32>,
    %c0_i32_13 = arith.constant 0 : i32
    %17 = arith.cmpi eq, %arg0, %c0_i32_13 : i32
    %18 = arith.extui %17 : i1 to i32
    %c0_i32_14 = arith.constant 0 : i32
    %19 = arith.cmpi ne, %18, %c0_i32_14 : i32
    scf.if %19 {
      %c0_15 = arith.constant 0 : index
      %c0_16 = arith.constant 0 : index
      %20 = vector.load %arg11[%c0_15, %c0_16] : memref<2x1024xf32, #tpu.memory_space<vmem>>, vector<2x1024xf32>
      %cst_17 = arith.constant 1.562500e-02 : f32
      %21 = vector.broadcast %cst_17 : f32 to vector<2x1024xf32>
      %22 = arith.mulf %20, %21 : vector<2x1024xf32>
      %c0_18 = arith.constant 0 : index
      %c0_19 = arith.constant 0 : index
      %23 = vector.load %arg4[%c0_18, %c0_19] : memref<1024x512xf32, #tpu.memory_space<vmem>>, vector<1024x512xf32>
      %cst_20 = arith.constant dense<0.000000e+00> : vector<2x512xf32>
      %24 = tpu.matmul %22, %23, %cst_20 {dimension_numbers = #tpu.dot_dimension_numbers<[1], [0], [0], [1], [0, 0, 1, 1], [], []>} : vector<2x1024xf32>, vector<1024x512xf32>, vector<2x512xf32> -> vector<2x512xf32>
      %c0_21 = arith.constant 0 : index
      %c0_22 = arith.constant 0 : index
      %25 = vector.load %arg5[%c0_21, %c0_22] : memref<1x512xf32, #tpu.memory_space<vmem>>, vector<1x512xf32>
      %26 = vector.broadcast %25 : vector<1x512xf32> to vector<2x512xf32>
      %27 = arith.addf %24, %26 : vector<2x512xf32>
      %cst_23 = arith.constant 0.000000e+00 : f32
      %28 = vector.broadcast %cst_23 : f32 to vector<2x512xf32>
      %29 = arith.maximumf %27, %28 : vector<2x512xf32>
      %c0_24 = arith.constant 0 : index
      %c0_25 = arith.constant 0 : index
      %30 = vector.load %arg6[%c0_24, %c0_25] : memref<512x256xf32, #tpu.memory_space<vmem>>, vector<512x256xf32>
      %cst_26 = arith.constant dense<0.000000e+00> : vector<2x256xf32>
      %31 = tpu.matmul %29, %30, %cst_26 {dimension_numbers = #tpu.dot_dimension_numbers<[1], [0], [0], [1], [0, 0, 1, 1], [], []>} : vector<2x512xf32>, vector<512x256xf32>, vector<2x256xf32> -> vector<2x256xf32>
      %c0_27 = arith.constant 0 : index
      %c0_28 = arith.constant 0 : index
      %32 = vector.load %arg7[%c0_27, %c0_28] : memref<1x256xf32, #tpu.memory_space<vmem>>, vector<1x256xf32>
      %33 = vector.broadcast %32 : vector<1x256xf32> to vector<2x256xf32>
      %34 = arith.addf %31, %33 : vector<2x256xf32>
      %cst_29 = arith.constant 0.000000e+00 : f32
      %35 = vector.broadcast %cst_29 : f32 to vector<2x256xf32>
      %36 = arith.maximumf %34, %35 : vector<2x256xf32>
      %c0_30 = arith.constant 0 : index
      %c0_31 = arith.constant 0 : index
      %37 = vector.load %arg8[%c0_30, %c0_31] : memref<256x128xf32, #tpu.memory_space<vmem>>, vector<256x128xf32>
      %cst_32 = arith.constant dense<0.000000e+00> : vector<2x128xf32>
      %38 = tpu.matmul %36, %37, %cst_32 {dimension_numbers = #tpu.dot_dimension_numbers<[1], [0], [0], [1], [0, 0, 1, 1], [], []>} : vector<2x256xf32>, vector<256x128xf32>, vector<2x128xf32> -> vector<2x128xf32>
      %c0_33 = arith.constant 0 : index
      %c0_34 = arith.constant 0 : index
      %39 = vector.load %arg9[%c0_33, %c0_34] : memref<1x128xf32, #tpu.memory_space<vmem>>, vector<1x128xf32>
      %40 = vector.broadcast %39 : vector<1x128xf32> to vector<2x128xf32>
      %41 = arith.addf %38, %40 : vector<2x128xf32>
      %c0_35 = arith.constant 0 : index
      %c0_36 = arith.constant 0 : index
      %42 = vector.load %arg10[%c0_35, %c0_36] : memref<2x128xf32, #tpu.memory_space<vmem>>, vector<2x128xf32>
      tpu.vector_store %arg10[%c0_35, %c0_36], %41 {strides = array<i32>} : memref<2x128xf32, #tpu.memory_space<vmem>>, vector<2x128xf32>,
    } else {
    }
    return
  }
  func.func @transform_0(%arg0: i32) -> (i32, i32, i32) {
    %c0_i32 = arith.constant 0 : i32
    %c0_i32_0 = arith.constant 0 : i32
    %c0_i32_1 = arith.constant 0 : i32
    return %c0_i32, %arg0, %c0_i32_0 : i32, i32, i32
  }
  func.func @transform_1(%arg0: i32) -> (i32, i32) {
    %c0_i32 = arith.constant 0 : i32
    %c0_i32_0 = arith.constant 0 : i32
    %c0_i32_1 = arith.constant 0 : i32
    return %c0_i32, %c0_i32_0 : i32, i32
  }
  func.func @transform_2(%arg0: i32) -> (i32, i32) {
    %c0_i32 = arith.constant 0 : i32
    %c0_i32_0 = arith.constant 0 : i32
    %c0_i32_1 = arith.constant 0 : i32
    return %c0_i32, %c0_i32_0 : i32, i32
  }
  func.func @transform_3(%arg0: i32) -> (i32, i32) {
    %c0_i32 = arith.constant 0 : i32
    %c0_i32_0 = arith.constant 0 : i32
    %c0_i32_1 = arith.constant 0 : i32
    return %c0_i32, %c0_i32_0 : i32, i32
  }
  func.func @transform_4(%arg0: i32) -> (i32, i32) {
    %c0_i32 = arith.constant 0 : i32
    %c0_i32_0 = arith.constant 0 : i32
    %c0_i32_1 = arith.constant 0 : i32
    return %c0_i32, %c0_i32_0 : i32, i32
  }
  func.func @transform_5(%arg0: i32) -> (i32, i32) {
    %c0_i32 = arith.constant 0 : i32
    %c0_i32_0 = arith.constant 0 : i32
    %c0_i32_1 = arith.constant 0 : i32
    return %c0_i32, %c0_i32_0 : i32, i32
  }
  func.func @transform_6(%arg0: i32) -> (i32, i32) {
    %c0_i32 = arith.constant 0 : i32
    %c0_i32_0 = arith.constant 0 : i32
    %c0_i32_1 = arith.constant 0 : i32
    return %c0_i32, %c0_i32_0 : i32, i32
  }
  func.func @transform_7(%arg0: i32) -> (i32, i32) {
    %c0_i32 = arith.constant 0 : i32
    %c0_i32_0 = arith.constant 0 : i32
    %c0_i32_1 = arith.constant 0 : i32
    return %c0_i32, %c0_i32_0 : i32, i32
  }
  func.func @transform_8(%arg0: i32) -> (i32, i32) {
    %c0_i32 = arith.constant 0 : i32
    %c0_i32_0 = arith.constant 0 : i32
    %c0_i32_1 = arith.constant 0 : i32
    return %c0_i32, %c0_i32_0 : i32, i32
  }
  func.func @transform_9(%arg0: i32) -> (i32, i32) {
    %c0_i32 = arith.constant 0 : i32
    %c0_i32_0 = arith.constant 0 : i32
    %c0_i32_1 = arith.constant 0 : i32
    return %c0_i32, %c0_i32_0 : i32, i32
  }
}

</mosaic_0001>

<llo_original>
// kernel: sentinel_densenet_forward.1
$region0: #{sentinel_densenet_forward.1}
  #allocation0 [shape = 'u32[]', space=smem, size = 0x4, offset = 0x4, fixed_abs, tag = 'smem constant byte address 0x4 - core index']
  #allocation1 [shape = 'u32[144,128]{1,0:T(1,128)}', space=vmem, size = 0x12000, scoped, tag = 'internal scratch']
  #allocation2 [shape = 'f32[2,1024]{1,0:T(2,128)}', space=vmem, size = 0x2000, scoped, tag = 'scratch operand']
  %s0 = inlined_call_operand.vmem [shape: f32[2,64,128], index: 0, kind: input, shape index: {}]
  %s1 = inlined_call_operand.vmem [shape: f32[128,1024], index: 1, kind: input, shape index: {}]
  %s2 = inlined_call_operand.vmem [shape: f32[1,1024], index: 2, kind: input, shape index: {}]
  %s3 = inlined_call_operand.vmem [shape: f32[1024,512], index: 3, kind: input, shape index: {}]
  %s4 = inlined_call_operand.vmem [shape: f32[1,512], index: 4, kind: input, shape index: {}]
  %s5 = inlined_call_operand.vmem [shape: f32[512,256], index: 5, kind: input, shape index: {}]
  %s6 = inlined_call_operand.vmem [shape: f32[1,256], index: 6, kind: input, shape index: {}]
  %s7 = inlined_call_operand.vmem [shape: f32[256,128], index: 7, kind: input, shape index: {}]
  %s8 = inlined_call_operand.vmem [shape: f32[1,128], index: 8, kind: input, shape index: {}]
  %s9 = inlined_call_operand.vmem [shape: f32[2,128], index: 9, kind: output, shape index: {}]
  %s10 = sld [smem:[#allocation0]]
  $region54: #{sentinel_densenet_forward.1} parent=0
    _
  %s12 = ssub.s32 1, %s10
  %s13 = scalar_select 0, %s12, %s10
  // Predicated region
  $region2: #{sentinel_densenet_forward.1} parent=0 // pred_check
    _
  $region3: #{sentinel_densenet_forward.1} parent=0 // pred_check_branch
    %15 = sbr.rel (0) target = $region5
  $region4: #{sentinel_densenet_forward.1} parent=0 // pred_region
    _
  $region5: #{sentinel_densenet_forward.1} parent=0 // pred_fallthru
    _
  // Predicated region
  $region6: #{sentinel_densenet_forward.1} parent=0 // pred_check
    _
  $region7: #{sentinel_densenet_forward.1} parent=0 // pred_check_branch
    %17 = sbr.rel (0) target = $region9
  $region8: #{sentinel_densenet_forward.1} parent=0 // pred_region
    _
  $region9: #{sentinel_densenet_forward.1} parent=0 // pred_fallthru
    _
  // Predicated region
  $region10: #{sentinel_densenet_forward.1} parent=0 // pred_check
    _
  $region11: #{sentinel_densenet_forward.1} parent=0 // pred_check_branch
    %19 = sbr.rel (0) target = $region13
  $region12: #{sentinel_densenet_forward.1} parent=0 // pred_region
    _
  $region13: #{sentinel_densenet_forward.1} parent=0 // pred_fallthru
    _
  // Predicated region
  $region14: #{sentinel_densenet_forward.1} parent=0 // pred_check
    _
  $region15: #{sentinel_densenet_forward.1} parent=0 // pred_check_branch
    %21 = sbr.rel (0) target = $region17
  $region16: #{sentinel_densenet_forward.1} parent=0 // pred_region
    _
  $region17: #{sentinel_densenet_forward.1} parent=0 // pred_fallthru
    _
  // Predicated region
  $region18: #{sentinel_densenet_forward.1} parent=0 // pred_check
    _
  $region19: #{sentinel_densenet_forward.1} parent=0 // pred_check_branch
    %23 = sbr.rel (0) target = $region21
  $region20: #{sentinel_densenet_forward.1} parent=0 // pred_region
    _
  $region21: #{sentinel_densenet_forward.1} parent=0 // pred_fallthru
    _
  // Predicated region
  $region22: #{sentinel_densenet_forward.1} parent=0 // pred_check
    _
  $region23: #{sentinel_densenet_forward.1} parent=0 // pred_check_branch
    %25 = sbr.rel (0) target = $region25
  $region24: #{sentinel_densenet_forward.1} parent=0 // pred_region
    _
  $region25: #{sentinel_densenet_forward.1} parent=0 // pred_fallthru
    _
  // Predicated region
  $region26: #{sentinel_densenet_forward.1} parent=0 // pred_check
    _
  $region27: #{sentinel_densenet_forward.1} parent=0 // pred_check_branch
    %27 = sbr.rel (0) target = $region29
  $region28: #{sentinel_densenet_forward.1} parent=0 // pred_region
    _
  $region29: #{sentinel_densenet_forward.1} parent=0 // pred_fallthru
    _
  // Predicated region
  $region30: #{sentinel_densenet_forward.1} parent=0 // pred_check
    _
  $region31: #{sentinel_densenet_forward.1} parent=0 // pred_check_branch
    %29 = sbr.rel (0) target = $region33
  $region32: #{sentinel_densenet_forward.1} parent=0 // pred_region
    _
  $region33: #{sentinel_densenet_forward.1} parent=0 // pred_fallthru
    _
  // Predicated region
  $region34: #{sentinel_densenet_forward.1} parent=0 // pred_check
    _
  $region35: #{sentinel_densenet_forward.1} parent=0 // pred_check_branch
    %31 = sbr.rel (0) target = $region37
  $region36: #{sentinel_densenet_forward.1} parent=0 // pred_region
    _
  $region37: #{sentinel_densenet_forward.1} parent=0 // pred_fallthru
    _
  %p32 = scmp.eq.s32.totalorder 0, 0
  // Predicated region
  $region38: #{sentinel_densenet_forward.1} parent=0 // pred_check
    %p33 = pneg %p32
  $region39: #{sentinel_densenet_forward.1} parent=0 // pred_check_branch
    %35 = sbr.rel (%p33) target = $region41
  $region40: #{sentinel_densenet_forward.1} parent=0 // pred_region
    %36 = vst [vmem:[#allocation2] sm:$0xff] 0.0
    %37 = vst [vmem:[#allocation2 + $0x8] sm:$0xff] 0.0
  $region41: #{sentinel_densenet_forward.1} parent=0 // pred_fallthru
    _
  %v38 = vld [vmem:[%s0] sm:$0xff]
  %v39 = vld [vmem:[%s0 + $0x8] sm:$0xff]
  %v40 = vld [vmem:[%s0 + $0x10] sm:$0xff]
  %v41 = vld [vmem:[%s0 + $0x18] sm:$0xff]
  %v42 = vld [vmem:[%s0 + $0x20] sm:$0xff]
  %v43 = vld [vmem:[%s0 + $0x28] sm:$0xff]
  %v44 = vld [vmem:[%s0 + $0x30] sm:$0xff]
  %v45 = vld [vmem:[%s0 + $0x38] sm:$0xff]
  %v46 = vld [vmem:[%s0 + $0x40] sm:$0xff]
  %v47 = vld [vmem:[%s0 + $0x48] sm:$0xff]
  %v48 = vld [vmem:[%s0 + $0x50] sm:$0xff]
  %v49 = vld [vmem:[%s0 + $0x58] sm:$0xff]
  %v50 = vld [vmem:[%s0 + $0x60] sm:$0xff]
  %v51 = vld [vmem:[%s0 + $0x68] sm:$0xff]
  %v52 = vld [vmem:[%s0 + $0x70] sm:$0xff]
  %v53 = vld [vmem:[%s0 + $0x78] sm:$0xff]
  %v54 = vld [vmem:[%s1] sm:$0xff]
  %v55 = vld [vmem:[%s1 + $0x8] sm:$0xff]
  %v56 = vld [vmem:[%s1 + $0x10] sm:$0xff]
  %v57 = vld [vmem:[%s1 + $0x18] sm:$0xff]
  %v58 = vld [vmem:[%s1 + $0x20] sm:$0xff]
  %v59 = vld [vmem:[%s1 + $0x28] sm:$0xff]
  %v60 = vld [vmem:[%s1 + $0x30] sm:$0xff]
  %v61 = vld [vmem:[%s1 + $0x38] sm:$0xff]
  %v62 = vld [vmem:[%s1 + $0x40] sm:$0xff]
  %v63 = vld [vmem:[%s1 + $0x48] sm:$0xff]
  %v64 = vld [vmem:[%s1 + $0x50] sm:$0xff]
  %v65 = vld [vmem:[%s1 + $0x58] sm:$0xff]
  %v66 = vld [vmem:[%s1 + $0x60] sm:$0xff]
  %v67 = vld [vmem:[%s1 + $0x68] sm:$0xff]
  %v68 = vld [vmem:[%s1 + $0x70] sm:$0xff]
  %v69 = vld [vmem:[%s1 + $0x78] sm:$0xff]
  %v70 = vld [vmem:[%s1 + $0x80] sm:$0xff]
  %v71 = vld [vmem:[%s1 + $0x88] sm:$0xff]
  %v72 = vld [vmem:[%s1 + $0x90] sm:$0xff]
  %v73 = vld [vmem:[%s1 + $0x98] sm:$0xff]
  %v74 = vld [vmem:[%s1 + $0xa0] sm:$0xff]
  %v75 = vld [vmem:[%s1 + $0xa8] sm:$0xff]
  %v76 = vld [vmem:[%s1 + $0xb0] sm:$0xff]
  %v77 = vld [vmem:[%s1 + $0xb8] sm:$0xff]
  %v78 = vld [vmem:[%s1 + $0xc0] sm:$0xff]
  %v79 = vld [vmem:[%s1 + $0xc8] sm:$0xff]
  %v80 = vld [vmem:[%s1 + $0xd0] sm:$0xff]
  %v81 = vld [vmem:[%s1 + $0xd8] sm:$0xff]
  %v82 = vld [vmem:[%s1 + $0xe0] sm:$0xff]
  %v83 = vld [vmem:[%s1 + $0xe8] sm:$0xff]
  %v84 = vld [vmem:[%s1 + $0xf0] sm:$0xff]
  %v85 = vld [vmem:[%s1 + $0xf8] sm:$0xff]
  %v86 = vld [vmem:[%s1 + $0x100] sm:$0xff]
  %v87 = vld [vmem:[%s1 + $0x108] sm:$0xff]
  %v88 = vld [vmem:[%s1 + $0x110] sm:$0xff]
  %v89 = vld [vmem:[%s1 + $0x118] sm:$0xff]
  %v90 = vld [vmem:[%s1 + $0x120] sm:$0xff]
  %v91 = vld [vmem:[%s1 + $0x128] sm:$0xff]
  %v92 = vld [vmem:[%s1 + $0x130] sm:$0xff]
  %v93 = vld [vmem:[%s1 + $0x138] sm:$0xff]
  %v94 = vld [vmem:[%s1 + $0x140] sm:$0xff]
  %v95 = vld [vmem:[%s1 + $0x148] sm:$0xff]
  %v96 = vld [vmem:[%s1 + $0x150] sm:$0xff]
  %v97 = vld [vmem:[%s1 + $0x158] sm:$0xff]
  %v98 = vld [vmem:[%s1 + $0x160] sm:$0xff]
  %v99 = vld [vmem:[%s1 + $0x168] sm:$0xff]
  %v100 = vld [vmem:[%s1 + $0x170] sm:$0xff]
  %v101 = vld [vmem:[%s1 + $0x178] sm:$0xff]
  %v102 = vld [vmem:[%s1 + $0x180] sm:$0xff]
  %v103 = vld [vmem:[%s1 + $0x188] sm:$0xff]
  %v104 = vld [vmem:[%s1 + $0x190] sm:$0xff]
  %v105 = vld [vmem:[%s1 + $0x198] sm:$0xff]
  %v106 = vld [vmem:[%s1 + $0x1a0] sm:$0xff]
  %v107 = vld [vmem:[%s1 + $0x1a8] sm:$0xff]
  %v108 = vld [vmem:[%s1 + $0x1b0] sm:$0xff]
  %v109 = vld [vmem:[%s1 + $0x1b8] sm:$0xff]
  %v110 = vld [vmem:[%s1 + $0x1c0] sm:$0xff]
  %v111 = vld [vmem:[%s1 + $0x1c8] sm:$0xff]
  %v112 = vld [vmem:[%s1 + $0x1d0] sm:$0xff]
  %v113 = vld [vmem:[%s1 + $0x1d8] sm:$0xff]
  %v114 = vld [vmem:[%s1 + $0x1e0] sm:$0xff]
  %v115 = vld [vmem:[%s1 + $0x1e8] sm:$0xff]
  %v116 = vld [vmem:[%s1 + $0x1f0] sm:$0xff]
  %v117 = vld [vmem:[%s1 + $0x1f8] sm:$0xff]
  %v118 = vld [vmem:[%s1 + $0x200] sm:$0xff]
  %v119 = vld [vmem:[%s1 + $0x208] sm:$0xff]
  %v120 = vld [vmem:[%s1 + $0x210] sm:$0xff]
  %v121 = vld [vmem:[%s1 + $0x218] sm:$0xff]
  %v122 = vld [vmem:[%s1 + $0x220] sm:$0xff]
  %v123 = vld [vmem:[%s1 + $0x228] sm:$0xff]
  %v124 = vld [vmem:[%s1 + $0x230] sm:$0xff]
  %v125 = vld [vmem:[%s1 + $0x238] sm:$0xff]
  %v126 = vld [vmem:[%s1 + $0x240] sm:$0xff]
  %v127 = vld [vmem:[%s1 + $0x248] sm:$0xff]
  %v128 = vld [vmem:[%s1 + $0x250] sm:$0xff]
  %v129 = vld [vmem:[%s1 + $0x258] sm:$0xff]
  %v130 = vld [vmem:[%s1 + $0x260] sm:$0xff]
  %v131 = vld [vmem:[%s1 + $0x268] sm:$0xff]
  %v132 = vld [vmem:[%s1 + $0x270] sm:$0xff]
  %v133 = vld [vmem:[%s1 + $0x278] sm:$0xff]
  %v134 = vld [vmem:[%s1 + $0x280] sm:$0xff]
  %v135 = vld [vmem:[%s1 + $0x288] sm:$0xff]
  %v136 = vld [vmem:[%s1 + $0x290] sm:$0xff]
  %v137 = vld [vmem:[%s1 + $0x298] sm:$0xff]
  %v138 = vld [vmem:[%s1 + $0x2a0] sm:$0xff]
  %v139 = vld [vmem:[%s1 + $0x2a8] sm:$0xff]
  %v140 = vld [vmem:[%s1 + $0x2b0] sm:$0xff]
  %v141 = vld [vmem:[%s1 + $0x2b8] sm:$0xff]
  %v142 = vld [vmem:[%s1 + $0x2c0] sm:$0xff]
  %v143 = vld [vmem:[%s1 + $0x2c8] sm:$0xff]
  %v144 = vld [vmem:[%s1 + $0x2d0] sm:$0xff]
  %v145 = vld [vmem:[%s1 + $0x2d8] sm:$0xff]
  %v146 = vld [vmem:[%s1 + $0x2e0] sm:$0xff]
  %v147 = vld [vmem:[%s1 + $0x2e8] sm:$0xff]
  %v148 = vld [vmem:[%s1 + $0x2f0] sm:$0xff]
  %v149 = vld [vmem:[%s1 + $0x2f8] sm:$0xff]
  %v150 = vld [vmem:[%s1 + $0x300] sm:$0xff]
  %v151 = vld [vmem:[%s1 + $0x308] sm:$0xff]
  %v152 = vld [vmem:[%s1 + $0x310] sm:$0xff]
  %v153 = vld [vmem:[%s1 + $0x318] sm:$0xff]
  %v154 = vld [vmem:[%s1 + $0x320] sm:$0xff]
  %v155 = vld [vmem:[%s1 + $0x328] sm:$0xff]
  %v156 = vld [vmem:[%s1 + $0x330] sm:$0xff]
  %v157 = vld [vmem:[%s1 + $0x338] sm:$0xff]
  %v158 = vld [vmem:[%s1 + $0x340] sm:$0xff]
  %v159 = vld [vmem:[%s1 + $0x348] sm:$0xff]
  %v160 = vld [vmem:[%s1 + $0x350] sm:$0xff]
  %v161 = vld [vmem:[%s1 + $0x358] sm:$0xff]
  %v162 = vld [vmem:[%s1 + $0x360] sm:$0xff]
  %v163 = vld [vmem:[%s1 + $0x368] sm:$0xff]
  %v164 = vld [vmem:[%s1 + $0x370] sm:$0xff]
  %v165 = vld [vmem:[%s1 + $0x378] sm:$0xff]
  %v166 = vld [vmem:[%s1 + $0x380] sm:$0xff]
  %v167 = vld [vmem:[%s1 + $0x388] sm:$0xff]
  %v168 = vld [vmem:[%s1 + $0x390] sm:$0xff]
  %v169 = vld [vmem:[%s1 + $0x398] sm:$0xff]
  %v170 = vld [vmem:[%s1 + $0x3a0] sm:$0xff]
  %v171 = vld [vmem:[%s1 + $0x3a8] sm:$0xff]
  %v172 = vld [vmem:[%s1 + $0x3b0] sm:$0xff]
  %v173 = vld [vmem:[%s1 + $0x3b8] sm:$0xff]
  %v174 = vld [vmem:[%s1 + $0x3c0] sm:$0xff]
  %v175 = vld [vmem:[%s1 + $0x3c8] sm:$0xff]
  %v176 = vld [vmem:[%s1 + $0x3d0] sm:$0xff]
  %v177 = vld [vmem:[%s1 + $0x3d8] sm:$0xff]
  %v178 = vld [vmem:[%s1 + $0x3e0] sm:$0xff]
  %v179 = vld [vmem:[%s1 + $0x3e8] sm:$0xff]
  %v180 = vld [vmem:[%s1 + $0x3f0] sm:$0xff]
  %v181 = vld [vmem:[%s1 + $0x3f8] sm:$0xff]
  %v182 = vld [vmem:[%s2] sm:$0xff]
  %v184 = vlaneseq
  %v185 = vshrl.u32 %v184, 7
  %v186 = vsub.s32 0, %v185
  %v187 = vrot.slane %v182, %v186
  %v188 = vlaneseq
  %v189 = vshrl.u32 %v188, 7
  %v190 = vsub.s32 1, %v189
  %v191 = vrot.slane %v182, %v190
  %v192 = vlaneseq
  %v193 = vshrl.u32 %v192, 7
  %v194 = vsub.s32 2, %v193
  %v195 = vrot.slane %v182, %v194
  %v196 = vlaneseq
  %v197 = vshrl.u32 %v196, 7
  %v198 = vsub.s32 3, %v197
  %v199 = vrot.slane %v182, %v198
  %v200 = vlaneseq
  %v201 = vshrl.u32 %v200, 7
  %v202 = vsub.s32 4, %v201
  %v203 = vrot.slane %v182, %v202
  %v204 = vlaneseq
  %v205 = vshrl.u32 %v204, 7
  %v206 = vsub.s32 5, %v205
  %v207 = vrot.slane %v182, %v206
  %v208 = vlaneseq
  %v209 = vshrl.u32 %v208, 7
  %v210 = vsub.s32 6, %v209
  %v211 = vrot.slane %v182, %v210
  %v212 = vlaneseq
  %v213 = vshrl.u32 %v212, 7
  %v214 = vsub.s32 7, %v213
  %v215 = vrot.slane %v182, %v214
  %224 = vmatprep.subr.mxu0 %v175
  %225 = vmatpush1.msra.mxu0 %v174
  %226 = vmatprep.subr.mxu0 %v167
  %227 = vmatpush1.msra.mxu0 %v166
  %228 = vmatprep.subr.mxu0 %v159
  %229 = vmatpush1.msra.mxu0 %v158
  %230 = vmatprep.subr.mxu0 %v151
  %231 = vmatpush1.msra.mxu0 %v150
  %232 = vmatprep.subr.mxu0 %v143
  %233 = vmatpush1.msra.mxu0 %v142
  %234 = vmatprep.subr.mxu0 %v135
  %235 = vmatpush1.msra.mxu0 %v134
  %236 = vmatprep.subr.mxu0 %v127
  %237 = vmatpush1.msra.mxu0 %v126
  %238 = vmatprep.subr.mxu0 %v119
  %239 = vmatpush1.msra.mxu0 %v118
  %240 = vmatprep.subr.mxu0 %v111
  %241 = vmatpush1.msra.mxu0 %v110
  %242 = vmatprep.subr.mxu0 %v103
  %243 = vmatpush1.msra.mxu0 %v102
  %244 = vmatprep.subr.mxu0 %v95
  %245 = vmatpush1.msra.mxu0 %v94
  %246 = vmatprep.subr.mxu0 %v87
  %247 = vmatpush1.msra.mxu0 %v86
  %248 = vmatprep.subr.mxu0 %v79
  %249 = vmatpush1.msra.mxu0 %v78
  %250 = vmatprep.subr.mxu0 %v71
  %251 = vmatpush1.msra.mxu0 %v70
  %252 = vmatprep.subr.mxu0 %v63
  %253 = vmatpush1.msra.mxu0 %v62
  %254 = vmatprep.subr.mxu0 %v55
  %255 = vmatpush1.msra.mxu0 %v54
  %256 = vmatprep.subr.mxu0 0.0
  %257 = vmatpush2.msra.mxu0 0.0
  %258 = vmatprep.subr.mxu0 0.0
  %259 = vmatpush2.msra.mxu0 0.0
  %260 = vmatprep.subr.mxu0 0.0
  %261 = vmatpush2.msra.mxu0 0.0
  %262 = vmatprep.subr.mxu0 0.0
  %263 = vmatpush2.msra.mxu0 0.0
  %264 = vmatprep.subr.mxu0 0.0
  %265 = vmatpush2.msra.mxu0 0.0
  %266 = vmatprep.subr.mxu0 0.0
  %267 = vmatpush2.msra.mxu0 0.0
  %268 = vmatprep.subr.mxu0 0.0
  %269 = vmatpush2.msra.mxu0 0.0
  %270 = vmatprep.subr.mxu0 0.0
  %271 = vmatpush2.msra.mxu0 0.0
  %272 = vmatprep.subr.mxu0 0.0
  %273 = vmatpush2.msra.mxu0 0.0
  %274 = vmatprep.subr.mxu0 0.0
  %275 = vmatpush2.msra.mxu0 0.0
  %276 = vmatprep.subr.mxu0 0.0
  %277 = vmatpush2.msra.mxu0 0.0
  %278 = vmatprep.subr.mxu0 0.0
  %279 = vmatpush2.msra.mxu0 0.0
  %280 = vmatprep.subr.mxu0 0.0
  %281 = vmatpush2.msra.mxu0 0.0
  %282 = vmatprep.subr.mxu0 0.0
  %283 = vmatpush2.msra.mxu0 0.0
  %284 = vmatprep.subr.mxu0 0.0
  %285 = vmatpush2.msra.mxu0 0.0
  %286 = vmatprep.subr.mxu0 0.0
  %287 = vmatpush2.msra.mxu0 0.0
  %288 = vmatprep.mubr.f32.mxu0 0.0
  %289 = vmatmul.mubr.f32.gmra.mxu0 %v38
  %v290 = vpop.f32.mrf.mxu0
  %v291 = vadd.f32 %v187, %v290
  %v292 = vpop.f32.mrf.mxu0
  %v293 = vadd.f32 %v191, %v292
  %294 = vmatprep.mubr.f32.mxu0 0.0
  %295 = vmatmul.mubr.f32.gmra.mxu0 %v39
  %v296 = vpop.f32.mrf.mxu0
  %v297 = vadd.f32 %v187, %v296
  %v298 = vpop.f32.mrf.mxu0
  %v299 = vadd.f32 %v191, %v298
  %300 = vmatprep.mubr.f32.mxu0 0.0
  %301 = vmatmul.mubr.f32.gmra.mxu0 %v40
  %v302 = vpop.f32.mrf.mxu0
  %v303 = vadd.f32 %v187, %v302
  %v304 = vpop.f32.mrf.mxu0
  %v305 = vadd.f32 %v191, %v304
  %306 = vmatprep.mubr.f32.mxu0 0.0
  %307 = vmatmul.mubr.f32.gmra.mxu0 %v41
  %v308 = vpop.f32.mrf.mxu0
  %v309 = vadd.f32 %v187, %v308
  %v310 = vpop.f32.mrf.mxu0
  %v311 = vadd.f32 %v191, %v310
  %312 = vmatprep.mubr.f32.mxu0 0.0
  %313 = vmatmul.mubr.f32.gmra.mxu0 %v42
  %v314 = vpop.f32.mrf.mxu0
  %v315 = vadd.f32 %v187, %v314
  %v316 = vpop.f32.mrf.mxu0
  %v317 = vadd.f32 %v191, %v316
  %318 = vmatprep.mubr.f32.mxu0 0.0
  %319 = vmatmul.mubr.f32.gmra.mxu0 %v43
  %v320 = vpop.f32.mrf.mxu0
  %v321 = vadd.f32 %v187, %v320
  %v322 = vpop.f32.mrf.mxu0
  %v323 = vadd.f32 %v191, %v322
  %324 = vmatprep.mubr.f32.mxu0 0.0
  %325 = vmatmul.mubr.f32.gmra.mxu0 %v44
  %v326 = vpop.f32.mrf.mxu0
  %v327 = vadd.f32 %v187, %v326
  %v328 = vpop.f32.mrf.mxu0
  %v329 = vadd.f32 %v191, %v328
  %330 = vmatprep.mubr.f32.mxu0 0.0
  %331 = vmatmul.mubr.f32.gmra.mxu0 %v45
  %v332 = vpop.f32.mrf.mxu0
  %v333 = vadd.f32 %v187, %v332
  %v334 = vpop.f32.mrf.mxu0
  %v335 = vadd.f32 %v191, %v334
  %336 = vmatprep.mubr.f32.mxu0 0.0
  %337 = vmatmul.mubr.f32.gmra.mxu0 %v46
  %v338 = vpop.f32.mrf.mxu0
  %v339 = vadd.f32 %v187, %v338
  %v340 = vpop.f32.mrf.mxu0
  %v341 = vadd.f32 %v191, %v340
  %342 = vmatprep.mubr.f32.mxu0 0.0
  %343 = vmatmul.mubr.f32.gmra.mxu0 %v47
  %v344 = vpop.f32.mrf.mxu0
  %v345 = vadd.f32 %v187, %v344
  %v346 = vpop.f32.mrf.mxu0
  %v347 = vadd.f32 %v191, %v346
  %348 = vmatprep.mubr.f32.mxu0 0.0
  %349 = vmatmul.mubr.f32.gmra.mxu0 %v48
  %v350 = vpop.f32.mrf.mxu0
  %v351 = vadd.f32 %v187, %v350
  %v352 = vpop.f32.mrf.mxu0
  %v353 = vadd.f32 %v191, %v352
  %354 = vmatprep.mubr.f32.mxu0 0.0
  %355 = vmatmul.mubr.f32.gmra.mxu0 %v49
  %v356 = vpop.f32.mrf.mxu0
  %v357 = vadd.f32 %v187, %v356
  %v358 = vpop.f32.mrf.mxu0
  %v359 = vadd.f32 %v191, %v358
  %360 = vmatprep.mubr.f32.mxu0 0.0
  %361 = vmatmul.mubr.f32.gmra.mxu0 %v50
  %v362 = vpop.f32.mrf.mxu0
  %v363 = vadd.f32 %v187, %v362
  %v364 = vpop.f32.mrf.mxu0
  %v365 = vadd.f32 %v191, %v364
  %366 = vmatprep.mubr.f32.mxu0 0.0
  %367 = vmatmul.mubr.f32.gmra.mxu0 %v51
  %v368 = vpop.f32.mrf.mxu0
  %v369 = vadd.f32 %v187, %v368
  %v370 = vpop.f32.mrf.mxu0
  %v371 = vadd.f32 %v191, %v370
  %372 = vmatprep.mubr.f32.mxu0 0.0
  %373 = vmatmul.mubr.f32.gmra.mxu0 %v52
  %v374 = vpop.f32.mrf.mxu0
  %v375 = vadd.f32 %v187, %v374
  %v376 = vpop.f32.mrf.mxu0
  %v377 = vadd.f32 %v191, %v376
  %378 = vmatprep.mubr.f32.mxu0 0.0
  %379 = vmatmul.mubr.f32.gmra.mxu0 %v53
  %v380 = vpop.f32.mrf.mxu0
  %v381 = vadd.f32 %v187, %v380
  %v382 = vpop.f32.mrf.mxu0
  %v383 = vadd.f32 %v191, %v382
  %384 = vdwg.mxu0
  %385 = vmatprep.subr.mxu0 %v177
  %386 = vmatpush1.msra.mxu0 %v176
  %387 = vmatprep.subr.mxu0 %v169
  %388 = vmatpush1.msra.mxu0 %v168
  %389 = vmatprep.subr.mxu0 %v161
  %390 = vmatpush1.msra.mxu0 %v160
  %391 = vmatprep.subr.mxu0 %v153
  %392 = vmatpush1.msra.mxu0 %v152
  %393 = vmatprep.subr.mxu0 %v145
  %394 = vmatpush1.msra.mxu0 %v144
  %395 = vmatprep.subr.mxu0 %v137
  %396 = vmatpush1.msra.mxu0 %v136
  %397 = vmatprep.subr.mxu0 %v129
  %398 = vmatpush1.msra.mxu0 %v128
  %399 = vmatprep.subr.mxu0 %v121
  %400 = vmatpush1.msra.mxu0 %v120
  %401 = vmatprep.subr.mxu0 %v113
  %402 = vmatpush1.msra.mxu0 %v112
  %403 = vmatprep.subr.mxu0 %v105
  %404 = vmatpush1.msra.mxu0 %v104
  %405 = vmatprep.subr.mxu0 %v97
  %406 = vmatpush1.msra.mxu0 %v96
  %407 = vmatprep.subr.mxu0 %v89
  %408 = vmatpush1.msra.mxu0 %v88
  %409 = vmatprep.subr.mxu0 %v81
  %410 = vmatpush1.msra.mxu0 %v80
  %411 = vmatprep.subr.mxu0 %v73
  %412 = vmatpush1.msra.mxu0 %v72
  %413 = vmatprep.subr.mxu0 %v65
  %414 = vmatpush1.msra.mxu0 %v64
  %415 = vmatprep.subr.mxu0 %v57
  %416 = vmatpush1.msra.mxu0 %v56
  %417 = vmatprep.subr.mxu0 0.0
  %418 = vmatpush2.msra.mxu0 0.0
  %419 = vmatprep.subr.mxu0 0.0
  %420 = vmatpush2.msra.mxu0 0.0
  %421 = vmatprep.subr.mxu0 0.0
  %422 = vmatpush2.msra.mxu0 0.0
  %423 = vmatprep.subr.mxu0 0.0
  %424 = vmatpush2.msra.mxu0 0.0
  %425 = vmatprep.subr.mxu0 0.0
  %426 = vmatpush2.msra.mxu0 0.0
  %427 = vmatprep.subr.mxu0 0.0
  %428 = vmatpush2.msra.mxu0 0.0
  %429 = vmatprep.subr.mxu0 0.0
  %430 = vmatpush2.msra.mxu0 0.0
  %431 = vmatprep.subr.mxu0 0.0
  %432 = vmatpush2.msra.mxu0 0.0
  %433 = vmatprep.subr.mxu0 0.0
  %434 = vmatpush2.msra.mxu0 0.0
  %435 = vmatprep.subr.mxu0 0.0
  %436 = vmatpush2.msra.mxu0 0.0
  %437 = vmatprep.subr.mxu0 0.0
  %438 = vmatpush2.msra.mxu0 0.0
  %439 = vmatprep.subr.mxu0 0.0
  %440 = vmatpush2.msra.mxu0 0.0
  %441 = vmatprep.subr.mxu0 0.0
  %442 = vmatpush2.msra.mxu0 0.0
  %443 = vmatprep.subr.mxu0 0.0
  %444 = vmatpush2.msra.mxu0 0.0
  %445 = vmatprep.subr.mxu0 0.0
  %446 = vmatpush2.msra.mxu0 0.0
  %447 = vmatprep.subr.mxu0 0.0
  %448 = vmatpush2.msra.mxu0 0.0
  %449 = vmatprep.mubr.f32.mxu0 0.0
  %450 = vmatmul.mubr.f32.gmra.mxu0 %v38
  %v451 = vpop.f32.mrf.mxu0
  %v452 = vadd.f32 %v195, %v451
  %v453 = vpop.f32.mrf.mxu0
  %v454 = vadd.f32 %v199, %v453
  %455 = vmatprep.mubr.f32.mxu0 0.0
  %456 = vmatmul.mubr.f32.gmra.mxu0 %v39
  %v457 = vpop.f32.mrf.mxu0
  %v458 = vadd.f32 %v195, %v457
  %v459 = vpop.f32.mrf.mxu0
  %v460 = vadd.f32 %v199, %v459
  %461 = vmatprep.mubr.f32.mxu0 0.0
  %462 = vmatmul.mubr.f32.gmra.mxu0 %v40
  %v463 = vpop.f32.mrf.mxu0
  %v464 = vadd.f32 %v195, %v463
  %v465 = vpop.f32.mrf.mxu0
  %v466 = vadd.f32 %v199, %v465
  %467 = vmatprep.mubr.f32.mxu0 0.0
  %468 = vmatmul.mubr.f32.gmra.mxu0 %v41
  %v469 = vpop.f32.mrf.mxu0
  %v470 = vadd.f32 %v195, %v469
  %v471 = vpop.f32.mrf.mxu0
  %v472 = vadd.f32 %v199, %v471
  %473 = vmatprep.mubr.f32.mxu0 0.0
  %474 = vmatmul.mubr.f32.gmra.mxu0 %v42
  %v475 = vpop.f32.mrf.mxu0
  %v476 = vadd.f32 %v195, %v475
  %v477 = vpop.f32.mrf.mxu0
  %v478 = vadd.f32 %v199, %v477
  %479 = vmatprep.mubr.f32.mxu0 0.0
  %480 = vmatmul.mubr.f32.gmra.mxu0 %v43
  %v481 = vpop.f32.mrf.mxu0
  %v482 = vadd.f32 %v195, %v481
  %v483 = vpop.f32.mrf.mxu0
  %v484 = vadd.f32 %v199, %v483
  %485 = vmatprep.mubr.f32.mxu0 0.0
  %486 = vmatmul.mubr.f32.gmra.mxu0 %v44
  %v487 = vpop.f32.mrf.mxu0
  %v488 = vadd.f32 %v195, %v487
  %v489 = vpop.f32.mrf.mxu0
  %v490 = vadd.f32 %v199, %v489
  %491 = vmatprep.mubr.f32.mxu0 0.0
  %492 = vmatmul.mubr.f32.gmra.mxu0 %v45
  %v493 = vpop.f32.mrf.mxu0
  %v494 = vadd.f32 %v195, %v493
  %v495 = vpop.f32.mrf.mxu0
  %v496 = vadd.f32 %v199, %v495
  %497 = vmatprep.mubr.f32.mxu0 0.0
  %498 = vmatmul.mubr.f32.gmra.mxu0 %v46
  %v499 = vpop.f32.mrf.mxu0
  %v500 = vadd.f32 %v195, %v499
  %v501 = vpop.f32.mrf.mxu0
  %v502 = vadd.f32 %v199, %v501
  %503 = vmatprep.mubr.f32.mxu0 0.0
  %504 = vmatmul.mubr.f32.gmra.mxu0 %v47
  %v505 = vpop.f32.mrf.mxu0
  %v506 = vadd.f32 %v195, %v505
  %v507 = vpop.f32.mrf.mxu0
  %v508 = vadd.f32 %v199, %v507
  %509 = vmatprep.mubr.f32.mxu0 0.0
  %510 = vmatmul.mubr.f32.gmra.mxu0 %v48
  %v511 = vpop.f32.mrf.mxu0
  %v512 = vadd.f32 %v195, %v511
  %v513 = vpop.f32.mrf.mxu0
  %v514 = vadd.f32 %v199, %v513
  %515 = vmatprep.mubr.f32.mxu0 0.0
  %516 = vmatmul.mubr.f32.gmra.mxu0 %v49
  %v517 = vpop.f32.mrf.mxu0
  %v518 = vadd.f32 %v195, %v517
  %v519 = vpop.f32.mrf.mxu0
  %v520 = vadd.f32 %v199, %v519
  %521 = vmatprep.mubr.f32.mxu0 0.0
  %522 = vmatmul.mubr.f32.gmra.mxu0 %v50
  %v523 = vpop.f32.mrf.mxu0
  %v524 = vadd.f32 %v195, %v523
  %v525 = vpop.f32.mrf.mxu0
  %v526 = vadd.f32 %v199, %v525
  %527 = vmatprep.mubr.f32.mxu0 0.0
  %528 = vmatmul.mubr.f32.gmra.mxu0 %v51
  %v529 = vpop.f32.mrf.mxu0
  %v530 = vadd.f32 %v195, %v529
  %v531 = vpop.f32.mrf.mxu0
  %v532 = vadd.f32 %v199, %v531
  %533 = vmatprep.mubr.f32.mxu0 0.0
  %534 = vmatmul.mubr.f32.gmra.mxu0 %v52
  %v535 = vpop.f32.mrf.mxu0
  %v536 = vadd.f32 %v195, %v535
  %v537 = vpop.f32.mrf.mxu0
  %v538 = vadd.f32 %v199, %v537
  %539 = vmatprep.mubr.f32.mxu0 0.0
  %540 = vmatmul.mubr.f32.gmra.mxu0 %v53
  %v541 = vpop.f32.mrf.mxu0
  %v542 = vadd.f32 %v195, %v541
  %v543 = vpop.f32.mrf.mxu0
  %v544 = vadd.f32 %v199, %v543
  %545 = vdwg.mxu0
  %546 = vmatprep.subr.mxu0 %v179
  %547 = vmatpush1.msra.mxu0 %v178
  %548 = vmatprep.subr.mxu0 %v171
  %549 = vmatpush1.msra.mxu0 %v170
  %550 = vmatprep.subr.mxu0 %v163
  %551 = vmatpush1.msra.mxu0 %v162
  %552 = vmatprep.subr.mxu0 %v155
  %553 = vmatpush1.msra.mxu0 %v154
  %554 = vmatprep.subr.mxu0 %v147
  %555 = vmatpush1.msra.mxu0 %v146
  %556 = vmatprep.subr.mxu0 %v139
  %557 = vmatpush1.msra.mxu0 %v138
  %558 = vmatprep.subr.mxu0 %v131
  %559 = vmatpush1.msra.mxu0 %v130
  %560 = vmatprep.subr.mxu0 %v123
  %561 = vmatpush1.msra.mxu0 %v122
  %562 = vmatprep.subr.mxu0 %v115
  %563 = vmatpush1.msra.mxu0 %v114
  %564 = vmatprep.subr.mxu0 %v107
  %565 = vmatpush1.msra.mxu0 %v106
  %566 = vmatprep.subr.mxu0 %v99
  %567 = vmatpush1.msra.mxu0 %v98
  %568 = vmatprep.subr.mxu0 %v91
  %569 = vmatpush1.msra.mxu0 %v90
  %570 = vmatprep.subr.mxu0 %v83
  %571 = vmatpush1.msra.mxu0 %v82
  %572 = vmatprep.subr.mxu0 %v75
  %573 = vmatpush1.msra.mxu0 %v74
  %574 = vmatprep.subr.mxu0 %v67
  %575 = vmatpush1.msra.mxu0 %v66
  %576 = vmatprep.subr.mxu0 %v59
  %577 = vmatpush1.msra.mxu0 %v58
  %578 = vmatprep.subr.mxu0 0.0
  %579 = vmatpush2.msra.mxu0 0.0
  %580 = vmatprep.subr.mxu0 0.0
  %581 = vmatpush2.msra.mxu0 0.0
  %582 = vmatprep.subr.mxu0 0.0
  %583 = vmatpush2.msra.mxu0 0.0
  %584 = vmatprep.subr.mxu0 0.0
  %585 = vmatpush2.msra.mxu0 0.0
  %586 = vmatprep.subr.mxu0 0.0
  %587 = vmatpush2.msra.mxu0 0.0
  %588 = vmatprep.subr.mxu0 0.0
  %589 = vmatpush2.msra.mxu0 0.0
  %590 = vmatprep.subr.mxu0 0.0
  %591 = vmatpush2.msra.mxu0 0.0
  %592 = vmatprep.subr.mxu0 0.0
  %593 = vmatpush2.msra.mxu0 0.0
  %594 = vmatprep.subr.mxu0 0.0
  %595 = vmatpush2.msra.mxu0 0.0
  %596 = vmatprep.subr.mxu0 0.0
  %597 = vmatpush2.msra.mxu0 0.0
  %598 = vmatprep.subr.mxu0 0.0
  %599 = vmatpush2.msra.mxu0 0.0
  %600 = vmatprep.subr.mxu0 0.0
  %601 = vmatpush2.msra.mxu0 0.0
  %602 = vmatprep.subr.mxu0 0.0
  %603 = vmatpush2.msra.mxu0 0.0
  %604 = vmatprep.subr.mxu0 0.0
  %605 = vmatpush2.msra.mxu0 0.0
  %606 = vmatprep.subr.mxu0 0.0
  %607 = vmatpush2.msra.mxu0 0.0
  %608 = vmatprep.subr.mxu0 0.0
  %609 = vmatpush2.msra.mxu0 0.0
  %610 = vmatprep.mubr.f32.mxu0 0.0
  %611 = vmatmul.mubr.f32.gmra.mxu0 %v38
  %v612 = vpop.f32.mrf.mxu0
  %v613 = vadd.f32 %v203, %v612
  %v614 = vpop.f32.mrf.mxu0
  %v615 = vadd.f32 %v207, %v614
  %616 = vmatprep.mubr.f32.mxu0 0.0
  %617 = vmatmul.mubr.f32.gmra.mxu0 %v39
  %v618 = vpop.f32.mrf.mxu0
  %v619 = vadd.f32 %v203, %v618
  %v620 = vpop.f32.mrf.mxu0
  %v621 = vadd.f32 %v207, %v620
  %622 = vmatprep.mubr.f32.mxu0 0.0
  %623 = vmatmul.mubr.f32.gmra.mxu0 %v40
  %v624 = vpop.f32.mrf.mxu0
  %v625 = vadd.f32 %v203, %v624
  %v626 = vpop.f32.mrf.mxu0
  %v627 = vadd.f32 %v207, %v626
  %628 = vmatprep.mubr.f32.mxu0 0.0
  %629 = vmatmul.mubr.f32.gmra.mxu0 %v41
  %v630 = vpop.f32.mrf.mxu0
  %v631 = vadd.f32 %v203, %v630
  %v632 = vpop.f32.mrf.mxu0
  %v633 = vadd.f32 %v207, %v632
  %634 = vmatprep.mubr.f32.mxu0 0.0
  %635 = vmatmul.mubr.f32.gmra.mxu0 %v42
  %v636 = vpop.f32.mrf.mxu0
  %v637 = vadd.f32 %v203, %v636
  %v638 = vpop.f32.mrf.mxu0
  %v639 = vadd.f32 %v207, %v638
  %640 = vmatprep.mubr.f32.mxu0 0.0
  %641 = vmatmul.mubr.f32.gmra.mxu0 %v43
  %v642 = vpop.f32.mrf.mxu0
  %v643 = vadd.f32 %v203, %v642
  %v644 = vpop.f32.mrf.mxu0
  %v645 = vadd.f32 %v207, %v644
  %646 = vmatprep.mubr.f32.mxu0 0.0
  %647 = vmatmul.mubr.f32.gmra.mxu0 %v44
  %v648 = vpop.f32.mrf.mxu0
  %v649 = vadd.f32 %v203, %v648
  %v650 = vpop.f32.mrf.mxu0
  %v651 = vadd.f32 %v207, %v650
  %652 = vmatprep.mubr.f32.mxu0 0.0
  %653 = vmatmul.mubr.f32.gmra.mxu0 %v45
  %v654 = vpop.f32.mrf.mxu0
  %v655 = vadd.f32 %v203, %v654
  %v656 = vpop.f32.mrf.mxu0
  %v657 = vadd.f32 %v207, %v656
  %658 = vmatprep.mubr.f32.mxu0 0.0
  %659 = vmatmul.mubr.f32.gmra.mxu0 %v46
  %v660 = vpop.f32.mrf.mxu0
  %v661 = vadd.f32 %v203, %v660
  %v662 = vpop.f32.mrf.mxu0
  %v663 = vadd.f32 %v207, %v662
  %664 = vmatprep.mubr.f32.mxu0 0.0
  %665 = vmatmul.mubr.f32.gmra.mxu0 %v47
  %v666 = vpop.f32.mrf.mxu0
  %v667 = vadd.f32 %v203, %v666
  %v668 = vpop.f32.mrf.mxu0
  %v669 = vadd.f32 %v207, %v668
  %670 = vmatprep.mubr.f32.mxu0 0.0
  %671 = vmatmul.mubr.f32.gmra.mxu0 %v48
  %v672 = vpop.f32.mrf.mxu0
  %v673 = vadd.f32 %v203, %v672
  %v674 = vpop.f32.mrf.mxu0
  %v675 = vadd.f32 %v207, %v674
  %676 = vmatprep.mubr.f32.mxu0 0.0
  %677 = vmatmul.mubr.f32.gmra.mxu0 %v49
  %v678 = vpop.f32.mrf.mxu0
  %v679 = vadd.f32 %v203, %v678
  %v680 = vpop.f32.mrf.mxu0
  %v681 = vadd.f32 %v207, %v680
  %682 = vmatprep.mubr.f32.mxu0 0.0
  %683 = vmatmul.mubr.f32.gmra.mxu0 %v50
  %v684 = vpop.f32.mrf.mxu0
  %v685 = vadd.f32 %v203, %v684
  %v686 = vpop.f32.mrf.mxu0
  %v687 = vadd.f32 %v207, %v686
  %688 = vmatprep.mubr.f32.mxu0 0.0
  %689 = vmatmul.mubr.f32.gmra.mxu0 %v51
  %v690 = vpop.f32.mrf.mxu0
  %v691 = vadd.f32 %v203, %v690
  %v692 = vpop.f32.mrf.mxu0
  %v693 = vadd.f32 %v207, %v692
  %694 = vmatprep.mubr.f32.mxu0 0.0
  %695 = vmatmul.mubr.f32.gmra.mxu0 %v52
  %v696 = vpop.f32.mrf.mxu0
  %v697 = vadd.f32 %v203, %v696
  %v698 = vpop.f32.mrf.mxu0
  %v699 = vadd.f32 %v207, %v698
  %700 = vmatprep.mubr.f32.mxu0 0.0
  %701 = vmatmul.mubr.f32.gmra.mxu0 %v53
  %v702 = vpop.f32.mrf.mxu0
  %v703 = vadd.f32 %v203, %v702
  %v704 = vpop.f32.mrf.mxu0
  %v705 = vadd.f32 %v207, %v704
  %706 = vdwg.mxu0
  %707 = vmatprep.subr.mxu0 %v181
  %708 = vmatpush1.msra.mxu0 %v180
  %709 = vmatprep.subr.mxu0 %v173
  %710 = vmatpush1.msra.mxu0 %v172
  %711 = vmatprep.subr.mxu0 %v165
  %712 = vmatpush1.msra.mxu0 %v164
  %713 = vmatprep.subr.mxu0 %v157
  %714 = vmatpush1.msra.mxu0 %v156
  %715 = vmatprep.subr.mxu0 %v149
  %716 = vmatpush1.msra.mxu0 %v148
  %717 = vmatprep.subr.mxu0 %v141
  %718 = vmatpush1.msra.mxu0 %v140
  %719 = vmatprep.subr.mxu0 %v133
  %720 = vmatpush1.msra.mxu0 %v132
  %721 = vmatprep.subr.mxu0 %v125
  %722 = vmatpush1.msra.mxu0 %v124
  %723 = vmatprep.subr.mxu0 %v117
  %724 = vmatpush1.msra.mxu0 %v116
  %725 = vmatprep.subr.mxu0 %v109
  %726 = vmatpush1.msra.mxu0 %v108
  %727 = vmatprep.subr.mxu0 %v101
  %728 = vmatpush1.msra.mxu0 %v100
  %729 = vmatprep.subr.mxu0 %v93
  %730 = vmatpush1.msra.mxu0 %v92
  %731 = vmatprep.subr.mxu0 %v85
  %732 = vmatpush1.msra.mxu0 %v84
  %733 = vmatprep.subr.mxu0 %v77
  %734 = vmatpush1.msra.mxu0 %v76
  %735 = vmatprep.subr.mxu0 %v69
  %736 = vmatpush1.msra.mxu0 %v68
  %737 = vmatprep.subr.mxu0 %v61
  %738 = vmatpush1.msra.mxu0 %v60
  %739 = vmatprep.subr.mxu0 0.0
  %740 = vmatpush2.msra.mxu0 0.0
  %741 = vmatprep.subr.mxu0 0.0
  %742 = vmatpush2.msra.mxu0 0.0
  %743 = vmatprep.subr.mxu0 0.0
  %744 = vmatpush2.msra.mxu0 0.0
  %745 = vmatprep.subr.mxu0 0.0
  %746 = vmatpush2.msra.mxu0 0.0
  %747 = vmatprep.subr.mxu0 0.0
  %748 = vmatpush2.msra.mxu0 0.0
  %749 = vmatprep.subr.mxu0 0.0
  %750 = vmatpush2.msra.mxu0 0.0
  %751 = vmatprep.subr.mxu0 0.0
  %752 = vmatpush2.msra.mxu0 0.0
  %753 = vmatprep.subr.mxu0 0.0
  %754 = vmatpush2.msra.mxu0 0.0
  %755 = vmatprep.subr.mxu0 0.0
  %756 = vmatpush2.msra.mxu0 0.0
  %757 = vmatprep.subr.mxu0 0.0
  %758 = vmatpush2.msra.mxu0 0.0
  %759 = vmatprep.subr.mxu0 0.0
  %760 = vmatpush2.msra.mxu0 0.0
  %761 = vmatprep.subr.mxu0 0.0
  %762 = vmatpush2.msra.mxu0 0.0
  %763 = vmatprep.subr.mxu0 0.0
  %764 = vmatpush2.msra.mxu0 0.0
  %765 = vmatprep.subr.mxu0 0.0
  %766 = vmatpush2.msra.mxu0 0.0
  %767 = vmatprep.subr.mxu0 0.0
  %768 = vmatpush2.msra.mxu0 0.0
  %769 = vmatprep.subr.mxu0 0.0
  %770 = vmatpush2.msra.mxu0 0.0
  %771 = vmatprep.mubr.f32.mxu0 0.0
  %772 = vmatmul.mubr.f32.gmra.mxu0 %v38
  %v773 = vpop.f32.mrf.mxu0
  %v774 = vadd.f32 %v211, %v773
  %v775 = vpop.f32.mrf.mxu0
  %v776 = vadd.f32 %v215, %v775
  %777 = vmatprep.mubr.f32.mxu0 0.0
  %778 = vmatmul.mubr.f32.gmra.mxu0 %v39
  %v779 = vpop.f32.mrf.mxu0
  %v780 = vadd.f32 %v211, %v779
  %v781 = vpop.f32.mrf.mxu0
  %v782 = vadd.f32 %v215, %v781
  %783 = vmatprep.mubr.f32.mxu0 0.0
  %784 = vmatmul.mubr.f32.gmra.mxu0 %v40
  %v785 = vpop.f32.mrf.mxu0
  %v786 = vadd.f32 %v211, %v785
  %v787 = vpop.f32.mrf.mxu0
  %v788 = vadd.f32 %v215, %v787
  %789 = vmatprep.mubr.f32.mxu0 0.0
  %790 = vmatmul.mubr.f32.gmra.mxu0 %v41
  %v791 = vpop.f32.mrf.mxu0
  %v792 = vadd.f32 %v211, %v791
  %v793 = vpop.f32.mrf.mxu0
  %v794 = vadd.f32 %v215, %v793
  %795 = vmatprep.mubr.f32.mxu0 0.0
  %796 = vmatmul.mubr.f32.gmra.mxu0 %v42
  %v797 = vpop.f32.mrf.mxu0
  %v798 = vadd.f32 %v211, %v797
  %v799 = vpop.f32.mrf.mxu0
  %v800 = vadd.f32 %v215, %v799
  %801 = vmatprep.mubr.f32.mxu0 0.0
  %802 = vmatmul.mubr.f32.gmra.mxu0 %v43
  %v803 = vpop.f32.mrf.mxu0
  %v804 = vadd.f32 %v211, %v803
  %v805 = vpop.f32.mrf.mxu0
  %v806 = vadd.f32 %v215, %v805
  %807 = vmatprep.mubr.f32.mxu0 0.0
  %808 = vmatmul.mubr.f32.gmra.mxu0 %v44
  %v809 = vpop.f32.mrf.mxu0
  %v810 = vadd.f32 %v211, %v809
  %v811 = vpop.f32.mrf.mxu0
  %v812 = vadd.f32 %v215, %v811
  %813 = vmatprep.mubr.f32.mxu0 0.0
  %814 = vmatmul.mubr.f32.gmra.mxu0 %v45
  %v815 = vpop.f32.mrf.mxu0
  %v816 = vadd.f32 %v211, %v815
  %v817 = vpop.f32.mrf.mxu0
  %v818 = vadd.f32 %v215, %v817
  %819 = vmatprep.mubr.f32.mxu0 0.0
  %820 = vmatmul.mubr.f32.gmra.mxu0 %v46
  %v821 = vpop.f32.mrf.mxu0
  %v822 = vadd.f32 %v211, %v821
  %v823 = vpop.f32.mrf.mxu0
  %v824 = vadd.f32 %v215, %v823
  %825 = vmatprep.mubr.f32.mxu0 0.0
  %826 = vmatmul.mubr.f32.gmra.mxu0 %v47
  %v827 = vpop.f32.mrf.mxu0
  %v828 = vadd.f32 %v211, %v827
  %v829 = vpop.f32.mrf.mxu0
  %v830 = vadd.f32 %v215, %v829
  %831 = vmatprep.mubr.f32.mxu0 0.0
  %832 = vmatmul.mubr.f32.gmra.mxu0 %v48
  %v833 = vpop.f32.mrf.mxu0
  %v834 = vadd.f32 %v211, %v833
  %v835 = vpop.f32.mrf.mxu0
  %v836 = vadd.f32 %v215, %v835
  %837 = vmatprep.mubr.f32.mxu0 0.0
  %838 = vmatmul.mubr.f32.gmra.mxu0 %v49
  %v839 = vpop.f32.mrf.mxu0
  %v840 = vadd.f32 %v211, %v839
  %v841 = vpop.f32.mrf.mxu0
  %v842 = vadd.f32 %v215, %v841
  %843 = vmatprep.mubr.f32.mxu0 0.0
  %844 = vmatmul.mubr.f32.gmra.mxu0 %v50
  %v845 = vpop.f32.mrf.mxu0
  %v846 = vadd.f32 %v211, %v845
  %v847 = vpop.f32.mrf.mxu0
  %v848 = vadd.f32 %v215, %v847
  %849 = vmatprep.mubr.f32.mxu0 0.0
  %850 = vmatmul.mubr.f32.gmra.mxu0 %v51
  %v851 = vpop.f32.mrf.mxu0
  %v852 = vadd.f32 %v211, %v851
  %v853 = vpop.f32.mrf.mxu0
  %v854 = vadd.f32 %v215, %v853
  %855 = vmatprep.mubr.f32.mxu0 0.0
  %856 = vmatmul.mubr.f32.gmra.mxu0 %v52
  %v857 = vpop.f32.mrf.mxu0
  %v858 = vadd.f32 %v211, %v857
  %v859 = vpop.f32.mrf.mxu0
  %v860 = vadd.f32 %v215, %v859
  %861 = vmatprep.mubr.f32.mxu0 0.0
  %862 = vmatmul.mubr.f32.gmra.mxu0 %v53
  %v863 = vpop.f32.mrf.mxu0
  %v864 = vadd.f32 %v211, %v863
  %v865 = vpop.f32.mrf.mxu0
  %v866 = vadd.f32 %v215, %v865
  %867 = vdwg.mxu0
  %v868 = vmax.f32 %v291, 0.0
  %v869 = vmax.f32 %v293, 0.0
  %v870 = vmax.f32 %v452, 0.0
  %v871 = vmax.f32 %v454, 0.0
  %v872 = vmax.f32 %v613, 0.0
  %v873 = vmax.f32 %v615, 0.0
  %v874 = vmax.f32 %v774, 0.0
  %v875 = vmax.f32 %v776, 0.0
  %v876 = vmax.f32 %v297, 0.0
  %v877 = vmax.f32 %v299, 0.0
  %v878 = vmax.f32 %v458, 0.0
  %v879 = vmax.f32 %v460, 0.0
  %v880 = vmax.f32 %v619, 0.0
  %v881 = vmax.f32 %v621, 0.0
  %v882 = vmax.f32 %v780, 0.0
  %v883 = vmax.f32 %v782, 0.0
  %v884 = vmax.f32 %v303, 0.0
  %v885 = vmax.f32 %v305, 0.0
  %v886 = vmax.f32 %v464, 0.0
  %v887 = vmax.f32 %v466, 0.0
  %v888 = vmax.f32 %v625, 0.0
  %v889 = vmax.f32 %v627, 0.0
  %v890 = vmax.f32 %v786, 0.0
  %v891 = vmax.f32 %v788, 0.0
  %v892 = vmax.f32 %v309, 0.0
  %v893 = vmax.f32 %v311, 0.0
  %v894 = vmax.f32 %v470, 0.0
  %v895 = vmax.f32 %v472, 0.0
  %v896 = vmax.f32 %v631, 0.0
  %v897 = vmax.f32 %v633, 0.0
  %v898 = vmax.f32 %v792, 0.0
  %v899 = vmax.f32 %v794, 0.0
  %v900 = vmax.f32 %v315, 0.0
  %v901 = vmax.f32 %v317, 0.0
  %v902 = vmax.f32 %v476, 0.0
  %v903 = vmax.f32 %v478, 0.0
  %v904 = vmax.f32 %v637, 0.0
  %v905 = vmax.f32 %v639, 0.0
  %v906 = vmax.f32 %v798, 0.0
  %v907 = vmax.f32 %v800, 0.0
  %v908 = vmax.f32 %v321, 0.0
  %v909 = vmax.f32 %v323, 0.0
  %v910 = vmax.f32 %v482, 0.0
  %v911 = vmax.f32 %v484, 0.0
  %v912 = vmax.f32 %v643, 0.0
  %v913 = vmax.f32 %v645, 0.0
  %v914 = vmax.f32 %v804, 0.0
  %v915 = vmax.f32 %v806, 0.0
  %v916 = vmax.f32 %v327, 0.0
  %v917 = vmax.f32 %v329, 0.0
  %v918 = vmax.f32 %v488, 0.0
  %v919 = vmax.f32 %v490, 0.0
  %v920 = vmax.f32 %v649, 0.0
  %v921 = vmax.f32 %v651, 0.0
  %v922 = vmax.f32 %v810, 0.0
  %v923 = vmax.f32 %v812, 0.0
  %v924 = vmax.f32 %v333, 0.0
  %v925 = vmax.f32 %v335, 0.0
  %v926 = vmax.f32 %v494, 0.0
  %v927 = vmax.f32 %v496, 0.0
  %v928 = vmax.f32 %v655, 0.0
  %v929 = vmax.f32 %v657, 0.0
  %v930 = vmax.f32 %v816, 0.0
  %v931 = vmax.f32 %v818, 0.0
  %v932 = vmax.f32 %v339, 0.0
  %v933 = vmax.f32 %v341, 0.0
  %v934 = vmax.f32 %v500, 0.0
  %v935 = vmax.f32 %v502, 0.0
  %v936 = vmax.f32 %v661, 0.0
  %v937 = vmax.f32 %v663, 0.0
  %v938 = vmax.f32 %v822, 0.0
  %v939 = vmax.f32 %v824, 0.0
  %v940 = vmax.f32 %v345, 0.0
  %v941 = vmax.f32 %v347, 0.0
  %v942 = vmax.f32 %v506, 0.0
  %v943 = vmax.f32 %v508, 0.0
  %v944 = vmax.f32 %v667, 0.0
  %v945 = vmax.f32 %v669, 0.0
  %v946 = vmax.f32 %v828, 0.0
  %v947 = vmax.f32 %v830, 0.0
  %v948 = vmax.f32 %v351, 0.0
  %v949 = vmax.f32 %v353, 0.0
  %v950 = vmax.f32 %v512, 0.0
  %v951 = vmax.f32 %v514, 0.0
  %v952 = vmax.f32 %v673, 0.0
  %v953 = vmax.f32 %v675, 0.0
  %v954 = vmax.f32 %v834, 0.0
  %v955 = vmax.f32 %v836, 0.0
  %v956 = vmax.f32 %v357, 0.0
  %v957 = vmax.f32 %v359, 0.0
  %v958 = vmax.f32 %v518, 0.0
  %v959 = vmax.f32 %v520, 0.0
  %v960 = vmax.f32 %v679, 0.0
  %v961 = vmax.f32 %v681, 0.0
  %v962 = vmax.f32 %v840, 0.0
  %v963 = vmax.f32 %v842, 0.0
  %v964 = vmax.f32 %v363, 0.0
  %v965 = vmax.f32 %v365, 0.0
  %v966 = vmax.f32 %v524, 0.0
  %v967 = vmax.f32 %v526, 0.0
  %v968 = vmax.f32 %v685, 0.0
  %v969 = vmax.f32 %v687, 0.0
  %v970 = vmax.f32 %v846, 0.0
  %v971 = vmax.f32 %v848, 0.0
  %v972 = vmax.f32 %v369, 0.0
  %v973 = vmax.f32 %v371, 0.0
  %v974 = vmax.f32 %v530, 0.0
  %v975 = vmax.f32 %v532, 0.0
  %v976 = vmax.f32 %v691, 0.0
  %v977 = vmax.f32 %v693, 0.0
  %v978 = vmax.f32 %v852, 0.0
  %v979 = vmax.f32 %v854, 0.0
  %v980 = vmax.f32 %v375, 0.0
  %v981 = vmax.f32 %v377, 0.0
  %v982 = vmax.f32 %v536, 0.0
  %v983 = vmax.f32 %v538, 0.0
  %v984 = vmax.f32 %v697, 0.0
  %v985 = vmax.f32 %v699, 0.0
  %v986 = vmax.f32 %v858, 0.0
  %v987 = vmax.f32 %v860, 0.0
  %v988 = vmax.f32 %v381, 0.0
  %v989 = vmax.f32 %v383, 0.0
  %v990 = vmax.f32 %v542, 0.0
  %v991 = vmax.f32 %v544, 0.0
  %v992 = vmax.f32 %v703, 0.0
  %v993 = vmax.f32 %v705, 0.0
  %v994 = vmax.f32 %v864, 0.0
  %v995 = vmax.f32 %v866, 0.0
  %v996 = vld [vmem:[#allocation2] sm:$0xff]
  %v997 = vld [vmem:[#allocation2 + $0x8] sm:$0xff]
  %v998 = vadd.f32 %v868, %v876
  %v999 = vadd.f32 %v998, %v884
  %v1000 = vadd.f32 %v999, %v892
  %v1001 = vadd.f32 %v1000, %v900
  %v1002 = vadd.f32 %v1001, %v908
  %v1003 = vadd.f32 %v1002, %v916
  %v1004 = vadd.f32 %v1003, %v924
  %v1005 = vrot.slane %v1004, 4
  %v1006 = vadd.f32 %v1004, %v1005
  %v1007 = vrot.slane %v1006, 2
  %v1008 = vadd.f32 %v1006, %v1007
  %v1009 = vrot.slane %v1008, 1
  %v1010 = vadd.f32 %v1008, %v1009
  %v1011 = vadd.f32 %v869, %v877
  %v1012 = vadd.f32 %v1011, %v885
  %v1013 = vadd.f32 %v1012, %v893
  %v1014 = vadd.f32 %v1013, %v901
  %v1015 = vadd.f32 %v1014, %v909
  %v1016 = vadd.f32 %v1015, %v917
  %v1017 = vadd.f32 %v1016, %v925
  %v1018 = vrot.slane %v1017, 4
  %v1019 = vadd.f32 %v1017, %v1018
  %v1020 = vrot.slane %v1019, 2
  %v1021 = vadd.f32 %v1019, %v1020
  %v1022 = vrot.slane %v1021, 1
  %v1023 = vadd.f32 %v1021, %v1022
  %v1024 = vadd.f32 %v870, %v878
  %v1025 = vadd.f32 %v1024, %v886
  %v1026 = vadd.f32 %v1025, %v894
  %v1027 = vadd.f32 %v1026, %v902
  %v1028 = vadd.f32 %v1027, %v910
  %v1029 = vadd.f32 %v1028, %v918
  %v1030 = vadd.f32 %v1029, %v926
  %v1031 = vrot.slane %v1030, 4
  %v1032 = vadd.f32 %v1030, %v1031
  %v1033 = vrot.slane %v1032, 2
  %v1034 = vadd.f32 %v1032, %v1033
  %v1035 = vrot.slane %v1034, 1
  %v1036 = vadd.f32 %v1034, %v1035
  %v1037 = vadd.f32 %v871, %v879
  %v1038 = vadd.f32 %v1037, %v887
  %v1039 = vadd.f32 %v1038, %v895
  %v1040 = vadd.f32 %v1039, %v903
  %v1041 = vadd.f32 %v1040, %v911
  %v1042 = vadd.f32 %v1041, %v919
  %v1043 = vadd.f32 %v1042, %v927
  %v1044 = vrot.slane %v1043, 4
  %v1045 = vadd.f32 %v1043, %v1044
  %v1046 = vrot.slane %v1045, 2
  %v1047 = vadd.f32 %v1045, %v1046
  %v1048 = vrot.slane %v1047, 1
  %v1049 = vadd.f32 %v1047, %v1048
  %v1050 = vadd.f32 %v872, %v880
  %v1051 = vadd.f32 %v1050, %v888
  %v1052 = vadd.f32 %v1051, %v896
  %v1053 = vadd.f32 %v1052, %v904
  %v1054 = vadd.f32 %v1053, %v912
  %v1055 = vadd.f32 %v1054, %v920
  %v1056 = vadd.f32 %v1055, %v928
  %v1057 = vrot.slane %v1056, 4
  %v1058 = vadd.f32 %v1056, %v1057
  %v1059 = vrot.slane %v1058, 2
  %v1060 = vadd.f32 %v1058, %v1059
  %v1061 = vrot.slane %v1060, 1
  %v1062 = vadd.f32 %v1060, %v1061
  %v1063 = vadd.f32 %v873, %v881
  %v1064 = vadd.f32 %v1063, %v889
  %v1065 = vadd.f32 %v1064, %v897
  %v1066 = vadd.f32 %v1065, %v905
  %v1067 = vadd.f32 %v1066, %v913
  %v1068 = vadd.f32 %v1067, %v921
  %v1069 = vadd.f32 %v1068, %v929
  %v1070 = vrot.slane %v1069, 4
  %v1071 = vadd.f32 %v1069, %v1070
  %v1072 = vrot.slane %v1071, 2
  %v1073 = vadd.f32 %v1071, %v1072
  %v1074 = vrot.slane %v1073, 1
  %v1075 = vadd.f32 %v1073, %v1074
  %v1076 = vadd.f32 %v874, %v882
  %v1077 = vadd.f32 %v1076, %v890
  %v1078 = vadd.f32 %v1077, %v898
  %v1079 = vadd.f32 %v1078, %v906
  %v1080 = vadd.f32 %v1079, %v914
  %v1081 = vadd.f32 %v1080, %v922
  %v1082 = vadd.f32 %v1081, %v930
  %v1083 = vrot.slane %v1082, 4
  %v1084 = vadd.f32 %v1082, %v1083
  %v1085 = vrot.slane %v1084, 2
  %v1086 = vadd.f32 %v1084, %v1085
  %v1087 = vrot.slane %v1086, 1
  %v1088 = vadd.f32 %v1086, %v1087
  %v1089 = vadd.f32 %v875, %v883
  %v1090 = vadd.f32 %v1089, %v891
  %v1091 = vadd.f32 %v1090, %v899
  %v1092 = vadd.f32 %v1091, %v907
  %v1093 = vadd.f32 %v1092, %v915
  %v1094 = vadd.f32 %v1093, %v923
  %v1095 = vadd.f32 %v1094, %v931
  %v1096 = vrot.slane %v1095, 4
  %v1097 = vadd.f32 %v1095, %v1096
  %v1098 = vrot.slane %v1097, 2
  %v1099 = vadd.f32 %v1097, %v1098
  %v1100 = vrot.slane %v1099, 1
  %v1101 = vadd.f32 %v1099, %v1100
  %v1102 = vadd.f32 %v932, %v940
  %v1103 = vadd.f32 %v1102, %v948
  %v1104 = vadd.f32 %v1103, %v956
  %v1105 = vadd.f32 %v1104, %v964
  %v1106 = vadd.f32 %v1105, %v972
  %v1107 = vadd.f32 %v1106, %v980
  %v1108 = vadd.f32 %v1107, %v988
  %v1109 = vrot.slane %v1108, 4
  %v1110 = vadd.f32 %v1108, %v1109
  %v1111 = vrot.slane %v1110, 2
  %v1112 = vadd.f32 %v1110, %v1111
  %v1113 = vrot.slane %v1112, 1
  %v1114 = vadd.f32 %v1112, %v1113
  %v1115 = vadd.f32 %v933, %v941
  %v1116 = vadd.f32 %v1115, %v949
  %v1117 = vadd.f32 %v1116, %v957
  %v1118 = vadd.f32 %v1117, %v965
  %v1119 = vadd.f32 %v1118, %v973
  %v1120 = vadd.f32 %v1119, %v981
  %v1121 = vadd.f32 %v1120, %v989
  %v1122 = vrot.slane %v1121, 4
  %v1123 = vadd.f32 %v1121, %v1122
  %v1124 = vrot.slane %v1123, 2
  %v1125 = vadd.f32 %v1123, %v1124
  %v1126 = vrot.slane %v1125, 1
  %v1127 = vadd.f32 %v1125, %v1126
  %v1128 = vadd.f32 %v934, %v942
  %v1129 = vadd.f32 %v1128, %v950
  %v1130 = vadd.f32 %v1129, %v958
  %v1131 = vadd.f32 %v1130, %v966
  %v1132 = vadd.f32 %v1131, %v974
  %v1133 = vadd.f32 %v1132, %v982
  %v1134 = vadd.f32 %v1133, %v990
  %v1135 = vrot.slane %v1134, 4
  %v1136 = vadd.f32 %v1134, %v1135
  %v1137 = vrot.slane %v1136, 2
  %v1138 = vadd.f32 %v1136, %v1137
  %v1139 = vrot.slane %v1138, 1
  %v1140 = vadd.f32 %v1138, %v1139
  %v1141 = vadd.f32 %v935, %v943
  %v1142 = vadd.f32 %v1141, %v951
  %v1143 = vadd.f32 %v1142, %v959
  %v1144 = vadd.f32 %v1143, %v967
  %v1145 = vadd.f32 %v1144, %v975
  %v1146 = vadd.f32 %v1145, %v983
  %v1147 = vadd.f32 %v1146, %v991
  %v1148 = vrot.slane %v1147, 4
  %v1149 = vadd.f32 %v1147, %v1148
  %v1150 = vrot.slane %v1149, 2
  %v1151 = vadd.f32 %v1149, %v1150
  %v1152 = vrot.slane %v1151, 1
  %v1153 = vadd.f32 %v1151, %v1152
  %v1154 = vadd.f32 %v936, %v944
  %v1155 = vadd.f32 %v1154, %v952
  %v1156 = vadd.f32 %v1155, %v960
  %v1157 = vadd.f32 %v1156, %v968
  %v1158 = vadd.f32 %v1157, %v976
  %v1159 = vadd.f32 %v1158, %v984
  %v1160 = vadd.f32 %v1159, %v992
  %v1161 = vrot.slane %v1160, 4
  %v1162 = vadd.f32 %v1160, %v1161
  %v1163 = vrot.slane %v1162, 2
  %v1164 = vadd.f32 %v1162, %v1163
  %v1165 = vrot.slane %v1164, 1
  %v1166 = vadd.f32 %v1164, %v1165
  %v1167 = vadd.f32 %v937, %v945
  %v1168 = vadd.f32 %v1167, %v953
  %v1169 = vadd.f32 %v1168, %v961
  %v1170 = vadd.f32 %v1169, %v969
  %v1171 = vadd.f32 %v1170, %v977
  %v1172 = vadd.f32 %v1171, %v985
  %v1173 = vadd.f32 %v1172, %v993
  %v1174 = vrot.slane %v1173, 4
  %v1175 = vadd.f32 %v1173, %v1174
  %v1176 = vrot.slane %v1175, 2
  %v1177 = vadd.f32 %v1175, %v1176
  %v1178 = vrot.slane %v1177, 1
  %v1179 = vadd.f32 %v1177, %v1178
  %v1180 = vadd.f32 %v938, %v946
  %v1181 = vadd.f32 %v1180, %v954
  %v1182 = vadd.f32 %v1181, %v962
  %v1183 = vadd.f32 %v1182, %v970
  %v1184 = vadd.f32 %v1183, %v978
  %v1185 = vadd.f32 %v1184, %v986
  %v1186 = vadd.f32 %v1185, %v994
  %v1187 = vrot.slane %v1186, 4
  %v1188 = vadd.f32 %v1186, %v1187
  %v1189 = vrot.slane %v1188, 2
  %v1190 = vadd.f32 %v1188, %v1189
  %v1191 = vrot.slane %v1190, 1
  %v1192 = vadd.f32 %v1190, %v1191
  %v1193 = vadd.f32 %v939, %v947
  %v1194 = vadd.f32 %v1193, %v955
  %v1195 = vadd.f32 %v1194, %v963
  %v1196 = vadd.f32 %v1195, %v971
  %v1197 = vadd.f32 %v1196, %v979
  %v1198 = vadd.f32 %v1197, %v987
  %v1199 = vadd.f32 %v1198, %v995
  %v1200 = vrot.slane %v1199, 4
  %v1201 = vadd.f32 %v1199, %v1200
  %v1202 = vrot.slane %v1201, 2
  %v1203 = vadd.f32 %v1201, %v1202
  %v1204 = vrot.slane %v1203, 1
  %v1205 = vadd.f32 %v1203, %v1204
  %v1222 = vcombine.low %v1010, %v1023
  %v1223 = vcombine.low %v1036, %v1049
  %v1225 = vunpack.c.l.s4 1983009808
  %v1226 = vunpack.c.0.s8 %v1225
  %v1227 = vlaneseq
  %v1228 = vshrl.u32 %v1227, 7
  %v1229 = vsub.s32 %v1226, %v1228
  %v1230 = vrot.slane %v1222, %v1229
  %v1232 = vunpack.c.l.s4 1983009808
  %v1233 = vunpack.c.0.s8 %v1232
  %v1234 = vlaneseq
  %v1235 = vshrl.u32 %v1234, 7
  %v1236 = vsub.s32 %v1233, %v1235
  %v1237 = vrot.slane %v1223, %v1236
  %v1238 = vcombine.low %v1230, %v1237
  %v1239 = vcombine.low %v1062, %v1075
  %v1240 = vcombine.low %v1088, %v1101
  %v1242 = vunpack.c.l.s4 1983009808
  %v1243 = vunpack.c.0.s8 %v1242
  %v1244 = vlaneseq
  %v1245 = vshrl.u32 %v1244, 7
  %v1246 = vsub.s32 %v1243, %v1245
  %v1247 = vrot.slane %v1239, %v1246
  %v1249 = vunpack.c.l.s4 1983009808
  %v1250 = vunpack.c.0.s8 %v1249
  %v1251 = vlaneseq
  %v1252 = vshrl.u32 %v1251, 7
  %v1253 = vsub.s32 %v1250, %v1252
  %v1254 = vrot.slane %v1240, %v1253
  %v1255 = vcombine.low %v1247, %v1254
  %v1256 = vcombine.low %v1114, %v1127
  %v1257 = vcombine.low %v1140, %v1153
  %v1259 = vunpack.c.l.s4 1983009808
  %v1260 = vunpack.c.0.s8 %v1259
  %v1261 = vlaneseq
  %v1262 = vshrl.u32 %v1261, 7
  %v1263 = vsub.s32 %v1260, %v1262
  %v1264 = vrot.slane %v1256, %v1263
  %v1266 = vunpack.c.l.s4 1983009808
  %v1267 = vunpack.c.0.s8 %v1266
  %v1268 = vlaneseq
  %v1269 = vshrl.u32 %v1268, 7
  %v1270 = vsub.s32 %v1267, %v1269
  %v1271 = vrot.slane %v1257, %v1270
  %v1272 = vcombine.low %v1264, %v1271
  %v1273 = vcombine.low %v1166, %v1179
  %v1274 = vcombine.low %v1192, %v1205
  %v1276 = vunpack.c.l.s4 1983009808
  %v1277 = vunpack.c.0.s8 %v1276
  %v1278 = vlaneseq
  %v1279 = vshrl.u32 %v1278, 7
  %v1280 = vsub.s32 %v1277, %v1279
  %v1281 = vrot.slane %v1273, %v1280
  %v1283 = vunpack.c.l.s4 1983009808
  %v1284 = vunpack.c.0.s8 %v1283
  %v1285 = vlaneseq
  %v1286 = vshrl.u32 %v1285, 7
  %v1287 = vsub.s32 %v1284, %v1286
  %v1288 = vrot.slane %v1274, %v1287
  %v1289 = vcombine.low %v1281, %v1288
  %vm1290 = vcmask 1044484
  %v1291 = vsel %vm1290, %v1238, %v1238
  %vm1292 = vcmask 1046534
  %v1293 = vsel %vm1292, %v1238, %v1291
  %v1294 = vrot.slane %v1272, 7
  %vm1295 = vcmask 1041409
  %v1296 = vsel %vm1295, %v1294, %v1293
  %vm1297 = vcmask 1043459
  %v1298 = vsel %vm1297, %v1294, %v1296
  %vm1299 = vcmask 1045509
  %v1300 = vsel %vm1299, %v1294, %v1298
  %vm1301 = vcmask 1047559
  %v1302 = vsel %vm1301, %v1294, %v1300
  %v1303 = vsel %vm1290, %v1255, %v1255
  %v1304 = vsel %vm1292, %v1255, %v1303
  %v1305 = vrot.slane %v1289, 7
  %v1306 = vsel %vm1295, %v1305, %v1304
  %v1307 = vsel %vm1297, %v1305, %v1306
  %v1308 = vsel %vm1299, %v1305, %v1307
  %v1309 = vsel %vm1301, %v1305, %v1308
  %v1312 = vadd.f32 %v996, %v1302
  %v1313 = vadd.f32 %v997, %v1309
  %1314 = vst [vmem:[#allocation2] sm:$0xff] %v1312
  %1315 = vst [vmem:[#allocation2 + $0x8] sm:$0xff] %v1313
  // Predicated region
  $region42: #{sentinel_densenet_forward.1} parent=0 // pred_check
    %p1316 = pneg %p32
  $region43: #{sentinel_densenet_forward.1} parent=0 // pred_check_branch
    %1318 = sbr.rel (%p1316) target = $region45
  $region44: #{sentinel_densenet_forward.1} parent=0 // pred_region
    %v1319 = vld [vmem:[#allocation2] sm:$0xff]
    %v1320 = vld [vmem:[#allocation2 + $0x8] sm:$0xff]
    %v1321 = vmul.f32 %v1319, 0.015625
    %v1322 = vmul.f32 %v1320, 0.015625
    %v1323 = vld [vmem:[%s3] sm:$0xff]
    %v1324 = vld [vmem:[%s3 + $0x8] sm:$0xff]
    %v1325 = vld [vmem:[%s3 + $0x10] sm:$0xff]
    %v1326 = vld [vmem:[%s3 + $0x18] sm:$0xff]
    %v1327 = vld [vmem:[%s3 + $0x20] sm:$0xff]
    %v1328 = vld [vmem:[%s3 + $0x28] sm:$0xff]
    %v1329 = vld [vmem:[%s3 + $0x30] sm:$0xff]
    %v1330 = vld [vmem:[%s3 + $0x38] sm:$0xff]
    %v1331 = vld [vmem:[%s3 + $0x40] sm:$0xff]
    %v1332 = vld [vmem:[%s3 + $0x48] sm:$0xff]
    %v1333 = vld [vmem:[%s3 + $0x50] sm:$0xff]
    %v1334 = vld [vmem:[%s3 + $0x58] sm:$0xff]
    %v1335 = vld [vmem:[%s3 + $0x60] sm:$0xff]
    %v1336 = vld [vmem:[%s3 + $0x68] sm:$0xff]
    %v1337 = vld [vmem:[%s3 + $0x70] sm:$0xff]
    %v1338 = vld [vmem:[%s3 + $0x78] sm:$0xff]
    %v1339 = vld [vmem:[%s3 + $0x80] sm:$0xff]
    %v1340 = vld [vmem:[%s3 + $0x88] sm:$0xff]
    %v1341 = vld [vmem:[%s3 + $0x90] sm:$0xff]
    %v1342 = vld [vmem:[%s3 + $0x98] sm:$0xff]
    %v1343 = vld [vmem:[%s3 + $0xa0] sm:$0xff]
    %v1344 = vld [vmem:[%s3 + $0xa8] sm:$0xff]
    %v1345 = vld [vmem:[%s3 + $0xb0] sm:$0xff]
    %v1346 = vld [vmem:[%s3 + $0xb8] sm:$0xff]
    %v1347 = vld [vmem:[%s3 + $0xc0] sm:$0xff]
    %v1348 = vld [vmem:[%s3 + $0xc8] sm:$0xff]
    %v1349 = vld [vmem:[%s3 + $0xd0] sm:$0xff]
    %v1350 = vld [vmem:[%s3 + $0xd8] sm:$0xff]
    %v1351 = vld [vmem:[%s3 + $0xe0] sm:$0xff]
    %v1352 = vld [vmem:[%s3 + $0xe8] sm:$0xff]
    %v1353 = vld [vmem:[%s3 + $0xf0] sm:$0xff]
    %v1354 = vld [vmem:[%s3 + $0xf8] sm:$0xff]
    %v1355 = vld [vmem:[%s3 + $0x100] sm:$0xff]
    %v1356 = vld [vmem:[%s3 + $0x108] sm:$0xff]
    %v1357 = vld [vmem:[%s3 + $0x110] sm:$0xff]
    %v1358 = vld [vmem:[%s3 + $0x118] sm:$0xff]
    %v1359 = vld [vmem:[%s3 + $0x120] sm:$0xff]
    %v1360 = vld [vmem:[%s3 + $0x128] sm:$0xff]
    %v1361 = vld [vmem:[%s3 + $0x130] sm:$0xff]
    %v1362 = vld [vmem:[%s3 + $0x138] sm:$0xff]
    %v1363 = vld [vmem:[%s3 + $0x140] sm:$0xff]
    %v1364 = vld [vmem:[%s3 + $0x148] sm:$0xff]
    %v1365 = vld [vmem:[%s3 + $0x150] sm:$0xff]
    %v1366 = vld [vmem:[%s3 + $0x158] sm:$0xff]
    %v1367 = vld [vmem:[%s3 + $0x160] sm:$0xff]
    %v1368 = vld [vmem:[%s3 + $0x168] sm:$0xff]
    %v1369 = vld [vmem:[%s3 + $0x170] sm:$0xff]
    %v1370 = vld [vmem:[%s3 + $0x178] sm:$0xff]
    %v1371 = vld [vmem:[%s3 + $0x180] sm:$0xff]
    %v1372 = vld [vmem:[%s3 + $0x188] sm:$0xff]
    %v1373 = vld [vmem:[%s3 + $0x190] sm:$0xff]
    %v1374 = vld [vmem:[%s3 + $0x198] sm:$0xff]
    %v1375 = vld [vmem:[%s3 + $0x1a0] sm:$0xff]
    %v1376 = vld [vmem:[%s3 + $0x1a8] sm:$0xff]
    %v1377 = vld [vmem:[%s3 + $0x1b0] sm:$0xff]
    %v1378 = vld [vmem:[%s3 + $0x1b8] sm:$0xff]
    %v1379 = vld [vmem:[%s3 + $0x1c0] sm:$0xff]
    %v1380 = vld [vmem:[%s3 + $0x1c8] sm:$0xff]
    %v1381 = vld [vmem:[%s3 + $0x1d0] sm:$0xff]
    %v1382 = vld [vmem:[%s3 + $0x1d8] sm:$0xff]
    %v1383 = vld [vmem:[%s3 + $0x1e0] sm:$0xff]
    %v1384 = vld [vmem:[%s3 + $0x1e8] sm:$0xff]
    %v1385 = vld [vmem:[%s3 + $0x1f0] sm:$0xff]
    %v1386 = vld [vmem:[%s3 + $0x1f8] sm:$0xff]
    %v1387 = vld [vmem:[%s3 + $0x200] sm:$0xff]
    %v1388 = vld [vmem:[%s3 + $0x208] sm:$0xff]
    %v1389 = vld [vmem:[%s3 + $0x210] sm:$0xff]
    %v1390 = vld [vmem:[%s3 + $0x218] sm:$0xff]
    %v1391 = vld [vmem:[%s3 + $0x220] sm:$0xff]
    %v1392 = vld [vmem:[%s3 + $0x228] sm:$0xff]
    %v1393 = vld [vmem:[%s3 + $0x230] sm:$0xff]
    %v1394 = vld [vmem:[%s3 + $0x238] sm:$0xff]
    %v1395 = vld [vmem:[%s3 + $0x240] sm:$0xff]
    %v1396 = vld [vmem:[%s3 + $0x248] sm:$0xff]
    %v1397 = vld [vmem:[%s3 + $0x250] sm:$0xff]
    %v1398 = vld [vmem:[%s3 + $0x258] sm:$0xff]
    %v1399 = vld [vmem:[%s3 + $0x260] sm:$0xff]
    %v1400 = vld [vmem:[%s3 + $0x268] sm:$0xff]
    %v1401 = vld [vmem:[%s3 + $0x270] sm:$0xff]
    %v1402 = vld [vmem:[%s3 + $0x278] sm:$0xff]
    %v1403 = vld [vmem:[%s3 + $0x280] sm:$0xff]
    %v1404 = vld [vmem:[%s3 + $0x288] sm:$0xff]
    %v1405 = vld [vmem:[%s3 + $0x290] sm:$0xff]
    %v1406 = vld [vmem:[%s3 + $0x298] sm:$0xff]
    %v1407 = vld [vmem:[%s3 + $0x2a0] sm:$0xff]
    %v1408 = vld [vmem:[%s3 + $0x2a8] sm:$0xff]
    %v1409 = vld [vmem:[%s3 + $0x2b0] sm:$0xff]
    %v1410 = vld [vmem:[%s3 + $0x2b8] sm:$0xff]
    %v1411 = vld [vmem:[%s3 + $0x2c0] sm:$0xff]
    %v1412 = vld [vmem:[%s3 + $0x2c8] sm:$0xff]
    %v1413 = vld [vmem:[%s3 + $0x2d0] sm:$0xff]
    %v1414 = vld [vmem:[%s3 + $0x2d8] sm:$0xff]
    %v1415 = vld [vmem:[%s3 + $0x2e0] sm:$0xff]
    %v1416 = vld [vmem:[%s3 + $0x2e8] sm:$0xff]
    %v1417 = vld [vmem:[%s3 + $0x2f0] sm:$0xff]
    %v1418 = vld [vmem:[%s3 + $0x2f8] sm:$0xff]
    %v1419 = vld [vmem:[%s3 + $0x300] sm:$0xff]
    %v1420 = vld [vmem:[%s3 + $0x308] sm:$0xff]
    %v1421 = vld [vmem:[%s3 + $0x310] sm:$0xff]
    %v1422 = vld [vmem:[%s3 + $0x318] sm:$0xff]
    %v1423 = vld [vmem:[%s3 + $0x320] sm:$0xff]
    %v1424 = vld [vmem:[%s3 + $0x328] sm:$0xff]
    %v1425 = vld [vmem:[%s3 + $0x330] sm:$0xff]
    %v1426 = vld [vmem:[%s3 + $0x338] sm:$0xff]
    %v1427 = vld [vmem:[%s3 + $0x340] sm:$0xff]
    %v1428 = vld [vmem:[%s3 + $0x348] sm:$0xff]
    %v1429 = vld [vmem:[%s3 + $0x350] sm:$0xff]
    %v1430 = vld [vmem:[%s3 + $0x358] sm:$0xff]
    %v1431 = vld [vmem:[%s3 + $0x360] sm:$0xff]
    %v1432 = vld [vmem:[%s3 + $0x368] sm:$0xff]
    %v1433 = vld [vmem:[%s3 + $0x370] sm:$0xff]
    %v1434 = vld [vmem:[%s3 + $0x378] sm:$0xff]
    %v1435 = vld [vmem:[%s3 + $0x380] sm:$0xff]
    %v1436 = vld [vmem:[%s3 + $0x388] sm:$0xff]
    %v1437 = vld [vmem:[%s3 + $0x390] sm:$0xff]
    %v1438 = vld [vmem:[%s3 + $0x398] sm:$0xff]
    %v1439 = vld [vmem:[%s3 + $0x3a0] sm:$0xff]
    %v1440 = vld [vmem:[%s3 + $0x3a8] sm:$0xff]
    %v1441 = vld [vmem:[%s3 + $0x3b0] sm:$0xff]
    %v1442 = vld [vmem:[%s3 + $0x3b8] sm:$0xff]
    %v1443 = vld [vmem:[%s3 + $0x3c0] sm:$0xff]
    %v1444 = vld [vmem:[%s3 + $0x3c8] sm:$0xff]
    %v1445 = vld [vmem:[%s3 + $0x3d0] sm:$0xff]
    %v1446 = vld [vmem:[%s3 + $0x3d8] sm:$0xff]
    %v1447 = vld [vmem:[%s3 + $0x3e0] sm:$0xff]
    %v1448 = vld [vmem:[%s3 + $0x3e8] sm:$0xff]
    %v1449 = vld [vmem:[%s3 + $0x3f0] sm:$0xff]
    %v1450 = vld [vmem:[%s3 + $0x3f8] sm:$0xff]
    %v1451 = vld [vmem:[%s3 + $0x400] sm:$0xff]
    %v1452 = vld [vmem:[%s3 + $0x408] sm:$0xff]
    %v1453 = vld [vmem:[%s3 + $0x410] sm:$0xff]
    %v1454 = vld [vmem:[%s3 + $0x418] sm:$0xff]
    %v1455 = vld [vmem:[%s3 + $0x420] sm:$0xff]
    %v1456 = vld [vmem:[%s3 + $0x428] sm:$0xff]
    %v1457 = vld [vmem:[%s3 + $0x430] sm:$0xff]
    %v1458 = vld [vmem:[%s3 + $0x438] sm:$0xff]
    %v1459 = vld [vmem:[%s3 + $0x440] sm:$0xff]
    %v1460 = vld [vmem:[%s3 + $0x448] sm:$0xff]
    %v1461 = vld [vmem:[%s3 + $0x450] sm:$0xff]
    %v1462 = vld [vmem:[%s3 + $0x458] sm:$0xff]
    %v1463 = vld [vmem:[%s3 + $0x460] sm:$0xff]
    %v1464 = vld [vmem:[%s3 + $0x468] sm:$0xff]
    %v1465 = vld [vmem:[%s3 + $0x470] sm:$0xff]
    %v1466 = vld [vmem:[%s3 + $0x478] sm:$0xff]
    %v1467 = vld [vmem:[%s3 + $0x480] sm:$0xff]
    %v1468 = vld [vmem:[%s3 + $0x488] sm:$0xff]
    %v1469 = vld [vmem:[%s3 + $0x490] sm:$0xff]
    %v1470 = vld [vmem:[%s3 + $0x498] sm:$0xff]
    %v1471 = vld [vmem:[%s3 + $0x4a0] sm:$0xff]
    %v1472 = vld [vmem:[%s3 + $0x4a8] sm:$0xff]
    %v1473 = vld [vmem:[%s3 + $0x4b0] sm:$0xff]
    %v1474 = vld [vmem:[%s3 + $0x4b8] sm:$0xff]
    %v1475 = vld [vmem:[%s3 + $0x4c0] sm:$0xff]
    %v1476 = vld [vmem:[%s3 + $0x4c8] sm:$0xff]
    %v1477 = vld [vmem:[%s3 + $0x4d0] sm:$0xff]
    %v1478 = vld [vmem:[%s3 + $0x4d8] sm:$0xff]
    %v1479 = vld [vmem:[%s3 + $0x4e0] sm:$0xff]
    %v1480 = vld [vmem:[%s3 + $0x4e8] sm:$0xff]
    %v1481 = vld [vmem:[%s3 + $0x4f0] sm:$0xff]
    %v1482 = vld [vmem:[%s3 + $0x4f8] sm:$0xff]
    %v1483 = vld [vmem:[%s3 + $0x500] sm:$0xff]
    %v1484 = vld [vmem:[%s3 + $0x508] sm:$0xff]
    %v1485 = vld [vmem:[%s3 + $0x510] sm:$0xff]
    %v1486 = vld [vmem:[%s3 + $0x518] sm:$0xff]
    %v1487 = vld [vmem:[%s3 + $0x520] sm:$0xff]
    %v1488 = vld [vmem:[%s3 + $0x528] sm:$0xff]
    %v1489 = vld [vmem:[%s3 + $0x530] sm:$0xff]
    %v1490 = vld [vmem:[%s3 + $0x538] sm:$0xff]
    %v1491 = vld [vmem:[%s3 + $0x540] sm:$0xff]
    %v1492 = vld [vmem:[%s3 + $0x548] sm:$0xff]
    %v1493 = vld [vmem:[%s3 + $0x550] sm:$0xff]
    %v1494 = vld [vmem:[%s3 + $0x558] sm:$0xff]
    %v1495 = vld [vmem:[%s3 + $0x560] sm:$0xff]
    %v1496 = vld [vmem:[%s3 + $0x568] sm:$0xff]
    %v1497 = vld [vmem:[%s3 + $0x570] sm:$0xff]
    %v1498 = vld [vmem:[%s3 + $0x578] sm:$0xff]
    %v1499 = vld [vmem:[%s3 + $0x580] sm:$0xff]
    %v1500 = vld [vmem:[%s3 + $0x588] sm:$0xff]
    %v1501 = vld [vmem:[%s3 + $0x590] sm:$0xff]
    %v1502 = vld [vmem:[%s3 + $0x598] sm:$0xff]
    %v1503 = vld [vmem:[%s3 + $0x5a0] sm:$0xff]
    %v1504 = vld [vmem:[%s3 + $0x5a8] sm:$0xff]
    %v1505 = vld [vmem:[%s3 + $0x5b0] sm:$0xff]
    %v1506 = vld [vmem:[%s3 + $0x5b8] sm:$0xff]
    %v1507 = vld [vmem:[%s3 + $0x5c0] sm:$0xff]
    %v1508 = vld [vmem:[%s3 + $0x5c8] sm:$0xff]
    %v1509 = vld [vmem:[%s3 + $0x5d0] sm:$0xff]
    %v1510 = vld [vmem:[%s3 + $0x5d8] sm:$0xff]
    %v1511 = vld [vmem:[%s3 + $0x5e0] sm:$0xff]
    %v1512 = vld [vmem:[%s3 + $0x5e8] sm:$0xff]
    %v1513 = vld [vmem:[%s3 + $0x5f0] sm:$0xff]
    %v1514 = vld [vmem:[%s3 + $0x5f8] sm:$0xff]
    %v1515 = vld [vmem:[%s3 + $0x600] sm:$0xff]
    %v1516 = vld [vmem:[%s3 + $0x608] sm:$0xff]
    %v1517 = vld [vmem:[%s3 + $0x610] sm:$0xff]
    %v1518 = vld [vmem:[%s3 + $0x618] sm:$0xff]
    %v1519 = vld [vmem:[%s3 + $0x620] sm:$0xff]
    %v1520 = vld [vmem:[%s3 + $0x628] sm:$0xff]
    %v1521 = vld [vmem:[%s3 + $0x630] sm:$0xff]
    %v1522 = vld [vmem:[%s3 + $0x638] sm:$0xff]
    %v1523 = vld [vmem:[%s3 + $0x640] sm:$0xff]
    %v1524 = vld [vmem:[%s3 + $0x648] sm:$0xff]
    %v1525 = vld [vmem:[%s3 + $0x650] sm:$0xff]
    %v1526 = vld [vmem:[%s3 + $0x658] sm:$0xff]
    %v1527 = vld [vmem:[%s3 + $0x660] sm:$0xff]
    %v1528 = vld [vmem:[%s3 + $0x668] sm:$0xff]
    %v1529 = vld [vmem:[%s3 + $0x670] sm:$0xff]
    %v1530 = vld [vmem:[%s3 + $0x678] sm:$0xff]
    %v1531 = vld [vmem:[%s3 + $0x680] sm:$0xff]
    %v1532 = vld [vmem:[%s3 + $0x688] sm:$0xff]
    %v1533 = vld [vmem:[%s3 + $0x690] sm:$0xff]
    %v1534 = vld [vmem:[%s3 + $0x698] sm:$0xff]
    %v1535 = vld [vmem:[%s3 + $0x6a0] sm:$0xff]
    %v1536 = vld [vmem:[%s3 + $0x6a8] sm:$0xff]
    %v1537 = vld [vmem:[%s3 + $0x6b0] sm:$0xff]
    %v1538 = vld [vmem:[%s3 + $0x6b8] sm:$0xff]
    %v1539 = vld [vmem:[%s3 + $0x6c0] sm:$0xff]
    %v1540 = vld [vmem:[%s3 + $0x6c8] sm:$0xff]
    %v1541 = vld [vmem:[%s3 + $0x6d0] sm:$0xff]
    %v1542 = vld [vmem:[%s3 + $0x6d8] sm:$0xff]
    %v1543 = vld [vmem:[%s3 + $0x6e0] sm:$0xff]
    %v1544 = vld [vmem:[%s3 + $0x6e8] sm:$0xff]
    %v1545 = vld [vmem:[%s3 + $0x6f0] sm:$0xff]
    %v1546 = vld [vmem:[%s3 + $0x6f8] sm:$0xff]
    %v1547 = vld [vmem:[%s3 + $0x700] sm:$0xff]
    %v1548 = vld [vmem:[%s3 + $0x708] sm:$0xff]
    %v1549 = vld [vmem:[%s3 + $0x710] sm:$0xff]
    %v1550 = vld [vmem:[%s3 + $0x718] sm:$0xff]
    %v1551 = vld [vmem:[%s3 + $0x720] sm:$0xff]
    %v1552 = vld [vmem:[%s3 + $0x728] sm:$0xff]
    %v1553 = vld [vmem:[%s3 + $0x730] sm:$0xff]
    %v1554 = vld [vmem:[%s3 + $0x738] sm:$0xff]
    %v1555 = vld [vmem:[%s3 + $0x740] sm:$0xff]
    %v1556 = vld [vmem:[%s3 + $0x748] sm:$0xff]
    %v1557 = vld [vmem:[%s3 + $0x750] sm:$0xff]
    %v1558 = vld [vmem:[%s3 + $0x758] sm:$0xff]
    %v1559 = vld [vmem:[%s3 + $0x760] sm:$0xff]
    %v1560 = vld [vmem:[%s3 + $0x768] sm:$0xff]
    %v1561 = vld [vmem:[%s3 + $0x770] sm:$0xff]
    %v1562 = vld [vmem:[%s3 + $0x778] sm:$0xff]
    %v1563 = vld [vmem:[%s3 + $0x780] sm:$0xff]
    %v1564 = vld [vmem:[%s3 + $0x788] sm:$0xff]
    %v1565 = vld [vmem:[%s3 + $0x790] sm:$0xff]
    %v1566 = vld [vmem:[%s3 + $0x798] sm:$0xff]
    %v1567 = vld [vmem:[%s3 + $0x7a0] sm:$0xff]
    %v1568 = vld [vmem:[%s3 + $0x7a8] sm:$0xff]
    %v1569 = vld [vmem:[%s3 + $0x7b0] sm:$0xff]
    %v1570 = vld [vmem:[%s3 + $0x7b8] sm:$0xff]
    %v1571 = vld [vmem:[%s3 + $0x7c0] sm:$0xff]
    %v1572 = vld [vmem:[%s3 + $0x7c8] sm:$0xff]
    %v1573 = vld [vmem:[%s3 + $0x7d0] sm:$0xff]
    %v1574 = vld [vmem:[%s3 + $0x7d8] sm:$0xff]
    %v1575 = vld [vmem:[%s3 + $0x7e0] sm:$0xff]
    %v1576 = vld [vmem:[%s3 + $0x7e8] sm:$0xff]
    %v1577 = vld [vmem:[%s3 + $0x7f0] sm:$0xff]
    %v1578 = vld [vmem:[%s3 + $0x7f8] sm:$0xff]
    %v1579 = vld [vmem:[%s3 + $0x800] sm:$0xff]
    %v1580 = vld [vmem:[%s3 + $0x808] sm:$0xff]
    %v1581 = vld [vmem:[%s3 + $0x810] sm:$0xff]
    %v1582 = vld [vmem:[%s3 + $0x818] sm:$0xff]
    %v1583 = vld [vmem:[%s3 + $0x820] sm:$0xff]
    %v1584 = vld [vmem:[%s3 + $0x828] sm:$0xff]
    %v1585 = vld [vmem:[%s3 + $0x830] sm:$0xff]
    %v1586 = vld [vmem:[%s3 + $0x838] sm:$0xff]
    %v1587 = vld [vmem:[%s3 + $0x840] sm:$0xff]
    %v1588 = vld [vmem:[%s3 + $0x848] sm:$0xff]
    %v1589 = vld [vmem:[%s3 + $0x850] sm:$0xff]
    %v1590 = vld [vmem:[%s3 + $0x858] sm:$0xff]
    %v1591 = vld [vmem:[%s3 + $0x860] sm:$0xff]
    %v1592 = vld [vmem:[%s3 + $0x868] sm:$0xff]
    %v1593 = vld [vmem:[%s3 + $0x870] sm:$0xff]
    %v1594 = vld [vmem:[%s3 + $0x878] sm:$0xff]
    %v1595 = vld [vmem:[%s3 + $0x880] sm:$0xff]
    %v1596 = vld [vmem:[%s3 + $0x888] sm:$0xff]
    %v1597 = vld [vmem:[%s3 + $0x890] sm:$0xff]
    %v1598 = vld [vmem:[%s3 + $0x898] sm:$0xff]
    %v1599 = vld [vmem:[%s3 + $0x8a0] sm:$0xff]
    %v1600 = vld [vmem:[%s3 + $0x8a8] sm:$0xff]
    %v1601 = vld [vmem:[%s3 + $0x8b0] sm:$0xff]
    %v1602 = vld [vmem:[%s3 + $0x8b8] sm:$0xff]
    %v1603 = vld [vmem:[%s3 + $0x8c0] sm:$0xff]
    %v1604 = vld [vmem:[%s3 + $0x8c8] sm:$0xff]
    %v1605 = vld [vmem:[%s3 + $0x8d0] sm:$0xff]
    %v1606 = vld [vmem:[%s3 + $0x8d8] sm:$0xff]
    %v1607 = vld [vmem:[%s3 + $0x8e0] sm:$0xff]
    %v1608 = vld [vmem:[%s3 + $0x8e8] sm:$0xff]
    %v1609 = vld [vmem:[%s3 + $0x8f0] sm:$0xff]
    %v1610 = vld [vmem:[%s3 + $0x8f8] sm:$0xff]
    %v1611 = vld [vmem:[%s3 + $0x900] sm:$0xff]
    %v1612 = vld [vmem:[%s3 + $0x908] sm:$0xff]
    %v1613 = vld [vmem:[%s3 + $0x910] sm:$0xff]
    %v1614 = vld [vmem:[%s3 + $0x918] sm:$0xff]
    %v1615 = vld [vmem:[%s3 + $0x920] sm:$0xff]
    %v1616 = vld [vmem:[%s3 + $0x928] sm:$0xff]
    %v1617 = vld [vmem:[%s3 + $0x930] sm:$0xff]
    %v1618 = vld [vmem:[%s3 + $0x938] sm:$0xff]
    %v1619 = vld [vmem:[%s3 + $0x940] sm:$0xff]
    %v1620 = vld [vmem:[%s3 + $0x948] sm:$0xff]
    %v1621 = vld [vmem:[%s3 + $0x950] sm:$0xff]
    %v1622 = vld [vmem:[%s3 + $0x958] sm:$0xff]
    %v1623 = vld [vmem:[%s3 + $0x960] sm:$0xff]
    %v1624 = vld [vmem:[%s3 + $0x968] sm:$0xff]
    %v1625 = vld [vmem:[%s3 + $0x970] sm:$0xff]
    %v1626 = vld [vmem:[%s3 + $0x978] sm:$0xff]
    %v1627 = vld [vmem:[%s3 + $0x980] sm:$0xff]
    %v1628 = vld [vmem:[%s3 + $0x988] sm:$0xff]
    %v1629 = vld [vmem:[%s3 + $0x990] sm:$0xff]
    %v1630 = vld [vmem:[%s3 + $0x998] sm:$0xff]
    %v1631 = vld [vmem:[%s3 + $0x9a0] sm:$0xff]
    %v1632 = vld [vmem:[%s3 + $0x9a8] sm:$0xff]
    %v1633 = vld [vmem:[%s3 + $0x9b0] sm:$0xff]
    %v1634 = vld [vmem:[%s3 + $0x9b8] sm:$0xff]
    %v1635 = vld [vmem:[%s3 + $0x9c0] sm:$0xff]
    %v1636 = vld [vmem:[%s3 + $0x9c8] sm:$0xff]
    %v1637 = vld [vmem:[%s3 + $0x9d0] sm:$0xff]
    %v1638 = vld [vmem:[%s3 + $0x9d8] sm:$0xff]
    %v1639 = vld [vmem:[%s3 + $0x9e0] sm:$0xff]
    %v1640 = vld [vmem:[%s3 + $0x9e8] sm:$0xff]
    %v1641 = vld [vmem:[%s3 + $0x9f0] sm:$0xff]
    %v1642 = vld [vmem:[%s3 + $0x9f8] sm:$0xff]
    %v1643 = vld [vmem:[%s3 + $0xa00] sm:$0xff]
    %v1644 = vld [vmem:[%s3 + $0xa08] sm:$0xff]
    %v1645 = vld [vmem:[%s3 + $0xa10] sm:$0xff]
    %v1646 = vld [vmem:[%s3 + $0xa18] sm:$0xff]
    %v1647 = vld [vmem:[%s3 + $0xa20] sm:$0xff]
    %v1648 = vld [vmem:[%s3 + $0xa28] sm:$0xff]
    %v1649 = vld [vmem:[%s3 + $0xa30] sm:$0xff]
    %v1650 = vld [vmem:[%s3 + $0xa38] sm:$0xff]
    %v1651 = vld [vmem:[%s3 + $0xa40] sm:$0xff]
    %v1652 = vld [vmem:[%s3 + $0xa48] sm:$0xff]
    %v1653 = vld [vmem:[%s3 + $0xa50] sm:$0xff]
    %v1654 = vld [vmem:[%s3 + $0xa58] sm:$0xff]
    %v1655 = vld [vmem:[%s3 + $0xa60] sm:$0xff]
    %v1656 = vld [vmem:[%s3 + $0xa68] sm:$0xff]
    %v1657 = vld [vmem:[%s3 + $0xa70] sm:$0xff]
    %v1658 = vld [vmem:[%s3 + $0xa78] sm:$0xff]
    %v1659 = vld [vmem:[%s3 + $0xa80] sm:$0xff]
    %v1660 = vld [vmem:[%s3 + $0xa88] sm:$0xff]
    %v1661 = vld [vmem:[%s3 + $0xa90] sm:$0xff]
    %v1662 = vld [vmem:[%s3 + $0xa98] sm:$0xff]
    %v1663 = vld [vmem:[%s3 + $0xaa0] sm:$0xff]
    %v1664 = vld [vmem:[%s3 + $0xaa8] sm:$0xff]
    %v1665 = vld [vmem:[%s3 + $0xab0] sm:$0xff]
    %v1666 = vld [vmem:[%s3 + $0xab8] sm:$0xff]
    %v1667 = vld [vmem:[%s3 + $0xac0] sm:$0xff]
    %v1668 = vld [vmem:[%s3 + $0xac8] sm:$0xff]
    %v1669 = vld [vmem:[%s3 + $0xad0] sm:$0xff]
    %v1670 = vld [vmem:[%s3 + $0xad8] sm:$0xff]
    %v1671 = vld [vmem:[%s3 + $0xae0] sm:$0xff]
    %v1672 = vld [vmem:[%s3 + $0xae8] sm:$0xff]
    %v1673 = vld [vmem:[%s3 + $0xaf0] sm:$0xff]
    %v1674 = vld [vmem:[%s3 + $0xaf8] sm:$0xff]
    %v1675 = vld [vmem:[%s3 + $0xb00] sm:$0xff]
    %v1676 = vld [vmem:[%s3 + $0xb08] sm:$0xff]
    %v1677 = vld [vmem:[%s3 + $0xb10] sm:$0xff]
    %v1678 = vld [vmem:[%s3 + $0xb18] sm:$0xff]
    %v1679 = vld [vmem:[%s3 + $0xb20] sm:$0xff]
    %v1680 = vld [vmem:[%s3 + $0xb28] sm:$0xff]
    %v1681 = vld [vmem:[%s3 + $0xb30] sm:$0xff]
    %v1682 = vld [vmem:[%s3 + $0xb38] sm:$0xff]
    %v1683 = vld [vmem:[%s3 + $0xb40] sm:$0xff]
    %v1684 = vld [vmem:[%s3 + $0xb48] sm:$0xff]
    %v1685 = vld [vmem:[%s3 + $0xb50] sm:$0xff]
    %v1686 = vld [vmem:[%s3 + $0xb58] sm:$0xff]
    %v1687 = vld [vmem:[%s3 + $0xb60] sm:$0xff]
    %v1688 = vld [vmem:[%s3 + $0xb68] sm:$0xff]
    %v1689 = vld [vmem:[%s3 + $0xb70] sm:$0xff]
    %v1690 = vld [vmem:[%s3 + $0xb78] sm:$0xff]
    %v1691 = vld [vmem:[%s3 + $0xb80] sm:$0xff]
    %v1692 = vld [vmem:[%s3 + $0xb88] sm:$0xff]
    %v1693 = vld [vmem:[%s3 + $0xb90] sm:$0xff]
    %v1694 = vld [vmem:[%s3 + $0xb98] sm:$0xff]
    %v1695 = vld [vmem:[%s3 + $0xba0] sm:$0xff]
    %v1696 = vld [vmem:[%s3 + $0xba8] sm:$0xff]
    %v1697 = vld [vmem:[%s3 + $0xbb0] sm:$0xff]
    %v1698 = vld [vmem:[%s3 + $0xbb8] sm:$0xff]
    %v1699 = vld [vmem:[%s3 + $0xbc0] sm:$0xff]
    %v1700 = vld [vmem:[%s3 + $0xbc8] sm:$0xff]
    %v1701 = vld [vmem:[%s3 + $0xbd0] sm:$0xff]
    %v1702 = vld [vmem:[%s3 + $0xbd8] sm:$0xff]
    %v1703 = vld [vmem:[%s3 + $0xbe0] sm:$0xff]
    %v1704 = vld [vmem:[%s3 + $0xbe8] sm:$0xff]
    %v1705 = vld [vmem:[%s3 + $0xbf0] sm:$0xff]
    %v1706 = vld [vmem:[%s3 + $0xbf8] sm:$0xff]
    %v1707 = vld [vmem:[%s3 + $0xc00] sm:$0xff]
    %v1708 = vld [vmem:[%s3 + $0xc08] sm:$0xff]
    %v1709 = vld [vmem:[%s3 + $0xc10] sm:$0xff]
    %v1710 = vld [vmem:[%s3 + $0xc18] sm:$0xff]
    %v1711 = vld [vmem:[%s3 + $0xc20] sm:$0xff]
    %v1712 = vld [vmem:[%s3 + $0xc28] sm:$0xff]
    %v1713 = vld [vmem:[%s3 + $0xc30] sm:$0xff]
    %v1714 = vld [vmem:[%s3 + $0xc38] sm:$0xff]
    %v1715 = vld [vmem:[%s3 + $0xc40] sm:$0xff]
    %v1716 = vld [vmem:[%s3 + $0xc48] sm:$0xff]
    %v1717 = vld [vmem:[%s3 + $0xc50] sm:$0xff]
    %v1718 = vld [vmem:[%s3 + $0xc58] sm:$0xff]
    %v1719 = vld [vmem:[%s3 + $0xc60] sm:$0xff]
    %v1720 = vld [vmem:[%s3 + $0xc68] sm:$0xff]
    %v1721 = vld [vmem:[%s3 + $0xc70] sm:$0xff]
    %v1722 = vld [vmem:[%s3 + $0xc78] sm:$0xff]
    %v1723 = vld [vmem:[%s3 + $0xc80] sm:$0xff]
    %v1724 = vld [vmem:[%s3 + $0xc88] sm:$0xff]
    %v1725 = vld [vmem:[%s3 + $0xc90] sm:$0xff]
    %v1726 = vld [vmem:[%s3 + $0xc98] sm:$0xff]
    %v1727 = vld [vmem:[%s3 + $0xca0] sm:$0xff]
    %v1728 = vld [vmem:[%s3 + $0xca8] sm:$0xff]
    %v1729 = vld [vmem:[%s3 + $0xcb0] sm:$0xff]
    %v1730 = vld [vmem:[%s3 + $0xcb8] sm:$0xff]
    %v1731 = vld [vmem:[%s3 + $0xcc0] sm:$0xff]
    %v1732 = vld [vmem:[%s3 + $0xcc8] sm:$0xff]
    %v1733 = vld [vmem:[%s3 + $0xcd0] sm:$0xff]
    %v1734 = vld [vmem:[%s3 + $0xcd8] sm:$0xff]
    %v1735 = vld [vmem:[%s3 + $0xce0] sm:$0xff]
    %v1736 = vld [vmem:[%s3 + $0xce8] sm:$0xff]
    %v1737 = vld [vmem:[%s3 + $0xcf0] sm:$0xff]
    %v1738 = vld [vmem:[%s3 + $0xcf8] sm:$0xff]
    %v1739 = vld [vmem:[%s3 + $0xd00] sm:$0xff]
    %v1740 = vld [vmem:[%s3 + $0xd08] sm:$0xff]
    %v1741 = vld [vmem:[%s3 + $0xd10] sm:$0xff]
    %v1742 = vld [vmem:[%s3 + $0xd18] sm:$0xff]
    %v1743 = vld [vmem:[%s3 + $0xd20] sm:$0xff]
    %v1744 = vld [vmem:[%s3 + $0xd28] sm:$0xff]
    %v1745 = vld [vmem:[%s3 + $0xd30] sm:$0xff]
    %v1746 = vld [vmem:[%s3 + $0xd38] sm:$0xff]
    %v1747 = vld [vmem:[%s3 + $0xd40] sm:$0xff]
    %v1748 = vld [vmem:[%s3 + $0xd48] sm:$0xff]
    %v1749 = vld [vmem:[%s3 + $0xd50] sm:$0xff]
    %v1750 = vld [vmem:[%s3 + $0xd58] sm:$0xff]
    %v1751 = vld [vmem:[%s3 + $0xd60] sm:$0xff]
    %v1752 = vld [vmem:[%s3 + $0xd68] sm:$0xff]
    %v1753 = vld [vmem:[%s3 + $0xd70] sm:$0xff]
    %v1754 = vld [vmem:[%s3 + $0xd78] sm:$0xff]
    %v1755 = vld [vmem:[%s3 + $0xd80] sm:$0xff]
    %v1756 = vld [vmem:[%s3 + $0xd88] sm:$0xff]
    %v1757 = vld [vmem:[%s3 + $0xd90] sm:$0xff]
    %v1758 = vld [vmem:[%s3 + $0xd98] sm:$0xff]
    %v1759 = vld [vmem:[%s3 + $0xda0] sm:$0xff]
    %v1760 = vld [vmem:[%s3 + $0xda8] sm:$0xff]
    %v1761 = vld [vmem:[%s3 + $0xdb0] sm:$0xff]
    %v1762 = vld [vmem:[%s3 + $0xdb8] sm:$0xff]
    %v1763 = vld [vmem:[%s3 + $0xdc0] sm:$0xff]
    %v1764 = vld [vmem:[%s3 + $0xdc8] sm:$0xff]
    %v1765 = vld [vmem:[%s3 + $0xdd0] sm:$0xff]
    %v1766 = vld [vmem:[%s3 + $0xdd8] sm:$0xff]
    %v1767 = vld [vmem:[%s3 + $0xde0] sm:$0xff]
    %v1768 = vld [vmem:[%s3 + $0xde8] sm:$0xff]
    %v1769 = vld [vmem:[%s3 + $0xdf0] sm:$0xff]
    %v1770 = vld [vmem:[%s3 + $0xdf8] sm:$0xff]
    %v1771 = vld [vmem:[%s3 + $0xe00] sm:$0xff]
    %v1772 = vld [vmem:[%s3 + $0xe08] sm:$0xff]
    %v1773 = vld [vmem:[%s3 + $0xe10] sm:$0xff]
    %v1774 = vld [vmem:[%s3 + $0xe18] sm:$0xff]
    %v1775 = vld [vmem:[%s3 + $0xe20] sm:$0xff]
    %v1776 = vld [vmem:[%s3 + $0xe28] sm:$0xff]
    %v1777 = vld [vmem:[%s3 + $0xe30] sm:$0xff]
    %v1778 = vld [vmem:[%s3 + $0xe38] sm:$0xff]
    %v1779 = vld [vmem:[%s3 + $0xe40] sm:$0xff]
    %v1780 = vld [vmem:[%s3 + $0xe48] sm:$0xff]
    %v1781 = vld [vmem:[%s3 + $0xe50] sm:$0xff]
    %v1782 = vld [vmem:[%s3 + $0xe58] sm:$0xff]
    %v1783 = vld [vmem:[%s3 + $0xe60] sm:$0xff]
    %v1784 = vld [vmem:[%s3 + $0xe68] sm:$0xff]
    %v1785 = vld [vmem:[%s3 + $0xe70] sm:$0xff]
    %v1786 = vld [vmem:[%s3 + $0xe78] sm:$0xff]
    %v1787 = vld [vmem:[%s3 + $0xe80] sm:$0xff]
    %v1788 = vld [vmem:[%s3 + $0xe88] sm:$0xff]
    %v1789 = vld [vmem:[%s3 + $0xe90] sm:$0xff]
    %v1790 = vld [vmem:[%s3 + $0xe98] sm:$0xff]
    %v1791 = vld [vmem:[%s3 + $0xea0] sm:$0xff]
    %v1792 = vld [vmem:[%s3 + $0xea8] sm:$0xff]
    %v1793 = vld [vmem:[%s3 + $0xeb0] sm:$0xff]
    %v1794 = vld [vmem:[%s3 + $0xeb8] sm:$0xff]
    %v1795 = vld [vmem:[%s3 + $0xec0] sm:$0xff]
    %v1796 = vld [vmem:[%s3 + $0xec8] sm:$0xff]
    %v1797 = vld [vmem:[%s3 + $0xed0] sm:$0xff]
    %v1798 = vld [vmem:[%s3 + $0xed8] sm:$0xff]
    %v1799 = vld [vmem:[%s3 + $0xee0] sm:$0xff]
    %v1800 = vld [vmem:[%s3 + $0xee8] sm:$0xff]
    %v1801 = vld [vmem:[%s3 + $0xef0] sm:$0xff]
    %v1802 = vld [vmem:[%s3 + $0xef8] sm:$0xff]
    %v1803 = vld [vmem:[%s3 + $0xf00] sm:$0xff]
    %v1804 = vld [vmem:[%s3 + $0xf08] sm:$0xff]
    %v1805 = vld [vmem:[%s3 + $0xf10] sm:$0xff]
    %v1806 = vld [vmem:[%s3 + $0xf18] sm:$0xff]
    %v1807 = vld [vmem:[%s3 + $0xf20] sm:$0xff]
    %v1808 = vld [vmem:[%s3 + $0xf28] sm:$0xff]
    %v1809 = vld [vmem:[%s3 + $0xf30] sm:$0xff]
    %v1810 = vld [vmem:[%s3 + $0xf38] sm:$0xff]
    %v1811 = vld [vmem:[%s3 + $0xf40] sm:$0xff]
    %v1812 = vld [vmem:[%s3 + $0xf48] sm:$0xff]
    %v1813 = vld [vmem:[%s3 + $0xf50] sm:$0xff]
    %v1814 = vld [vmem:[%s3 + $0xf58] sm:$0xff]
    %v1815 = vld [vmem:[%s3 + $0xf60] sm:$0xff]
    %v1816 = vld [vmem:[%s3 + $0xf68] sm:$0xff]
    %v1817 = vld [vmem:[%s3 + $0xf70] sm:$0xff]
    %v1818 = vld [vmem:[%s3 + $0xf78] sm:$0xff]
    %v1819 = vld [vmem:[%s3 + $0xf80] sm:$0xff]
    %v1820 = vld [vmem:[%s3 + $0xf88] sm:$0xff]
    %v1821 = vld [vmem:[%s3 + $0xf90] sm:$0xff]
    %v1822 = vld [vmem:[%s3 + $0xf98] sm:$0xff]
    %v1823 = vld [vmem:[%s3 + $0xfa0] sm:$0xff]
    %v1824 = vld [vmem:[%s3 + $0xfa8] sm:$0xff]
    %v1825 = vld [vmem:[%s3 + $0xfb0] sm:$0xff]
    %v1826 = vld [vmem:[%s3 + $0xfb8] sm:$0xff]
    %v1827 = vld [vmem:[%s3 + $0xfc0] sm:$0xff]
    %v1828 = vld [vmem:[%s3 + $0xfc8] sm:$0xff]
    %v1829 = vld [vmem:[%s3 + $0xfd0] sm:$0xff]
    %v1830 = vld [vmem:[%s3 + $0xfd8] sm:$0xff]
    %v1831 = vld [vmem:[%s3 + $0xfe0] sm:$0xff]
    %v1832 = vld [vmem:[%s3 + $0xfe8] sm:$0xff]
    %v1833 = vld [vmem:[%s3 + $0xff0] sm:$0xff]
    %v1834 = vld [vmem:[%s3 + $0xff8] sm:$0xff]
    %v1835 = vld [vmem:[%s4] sm:$0xf]
    %v1837 = vlaneseq
    %v1838 = vshrl.u32 %v1837, 7
    %v1839 = vsub.s32 0, %v1838
    %v1840 = vrot.slane %v1835, %v1839
    %v1841 = vlaneseq
    %v1842 = vshrl.u32 %v1841, 7
    %v1843 = vsub.s32 1, %v1842
    %v1844 = vrot.slane %v1835, %v1843
    %v1845 = vlaneseq
    %v1846 = vshrl.u32 %v1845, 7
    %v1847 = vsub.s32 2, %v1846
    %v1848 = vrot.slane %v1835, %v1847
    %v1849 = vlaneseq
    %v1850 = vshrl.u32 %v1849, 7
    %v1851 = vsub.s32 3, %v1850
    %v1852 = vrot.slane %v1835, %v1851
    %v1859 = vcombine.high %v1321, %v1321
    %v1861 = vunpack.c.l.s4 1983009808
    %v1862 = vunpack.c.0.s8 %v1861
    %v1863 = vlaneseq
    %v1864 = vshrl.u32 %v1863, 7
    %v1865 = vsub.s32 %v1862, %v1864
    %v1866 = vrot.slane %v1321, %v1865
    %v1868 = vunpack.c.l.s4 1983009808
    %v1869 = vunpack.c.0.s8 %v1868
    %v1870 = vlaneseq
    %v1871 = vshrl.u32 %v1870, 7
    %v1872 = vsub.s32 %v1869, %v1871
    %v1873 = vrot.slane %v1859, %v1872
    %v1874 = vcombine.high %v1866, %v1866
    %v1875 = vcombine.high %v1873, %v1873
    %v1876 = vcombine.high %v1322, %v1322
    %v1878 = vunpack.c.l.s4 1983009808
    %v1879 = vunpack.c.0.s8 %v1878
    %v1880 = vlaneseq
    %v1881 = vshrl.u32 %v1880, 7
    %v1882 = vsub.s32 %v1879, %v1881
    %v1883 = vrot.slane %v1322, %v1882
    %v1885 = vunpack.c.l.s4 1983009808
    %v1886 = vunpack.c.0.s8 %v1885
    %v1887 = vlaneseq
    %v1888 = vshrl.u32 %v1887, 7
    %v1889 = vsub.s32 %v1886, %v1888
    %v1890 = vrot.slane %v1876, %v1889
    %v1891 = vcombine.high %v1883, %v1883
    %v1892 = vcombine.high %v1890, %v1890
    %1901 = vmatprep.subr.mxu0 %v1384
    %1902 = vmatpush1.msra.mxu0 %v1383
    %1903 = vmatprep.subr.mxu0 %v1380
    %1904 = vmatpush1.msra.mxu0 %v1379
    %1905 = vmatprep.subr.mxu0 %v1376
    %1906 = vmatpush1.msra.mxu0 %v1375
    %1907 = vmatprep.subr.mxu0 %v1372
    %1908 = vmatpush1.msra.mxu0 %v1371
    %1909 = vmatprep.subr.mxu0 %v1368
    %1910 = vmatpush1.msra.mxu0 %v1367
    %1911 = vmatprep.subr.mxu0 %v1364
    %1912 = vmatpush1.msra.mxu0 %v1363
    %1913 = vmatprep.subr.mxu0 %v1360
    %1914 = vmatpush1.msra.mxu0 %v1359
    %1915 = vmatprep.subr.mxu0 %v1356
    %1916 = vmatpush1.msra.mxu0 %v1355
    %1917 = vmatprep.subr.mxu0 %v1352
    %1918 = vmatpush1.msra.mxu0 %v1351
    %1919 = vmatprep.subr.mxu0 %v1348
    %1920 = vmatpush1.msra.mxu0 %v1347
    %1921 = vmatprep.subr.mxu0 %v1344
    %1922 = vmatpush1.msra.mxu0 %v1343
    %1923 = vmatprep.subr.mxu0 %v1340
    %1924 = vmatpush1.msra.mxu0 %v1339
    %1925 = vmatprep.subr.mxu0 %v1336
    %1926 = vmatpush1.msra.mxu0 %v1335
    %1927 = vmatprep.subr.mxu0 %v1332
    %1928 = vmatpush1.msra.mxu0 %v1331
    %1929 = vmatprep.subr.mxu0 %v1328
    %1930 = vmatpush1.msra.mxu0 %v1327
    %1931 = vmatprep.subr.mxu0 %v1324
    %1932 = vmatpush1.msra.mxu0 %v1323
    %1933 = vmatprep.subr.mxu0 %v1448
    %1934 = vmatpush2.msra.mxu0 %v1447
    %1935 = vmatprep.subr.mxu0 %v1444
    %1936 = vmatpush2.msra.mxu0 %v1443
    %1937 = vmatprep.subr.mxu0 %v1440
    %1938 = vmatpush2.msra.mxu0 %v1439
    %1939 = vmatprep.subr.mxu0 %v1436
    %1940 = vmatpush2.msra.mxu0 %v1435
    %1941 = vmatprep.subr.mxu0 %v1432
    %1942 = vmatpush2.msra.mxu0 %v1431
    %1943 = vmatprep.subr.mxu0 %v1428
    %1944 = vmatpush2.msra.mxu0 %v1427
    %1945 = vmatprep.subr.mxu0 %v1424
    %1946 = vmatpush2.msra.mxu0 %v1423
    %1947 = vmatprep.subr.mxu0 %v1420
    %1948 = vmatpush2.msra.mxu0 %v1419
    %1949 = vmatprep.subr.mxu0 %v1416
    %1950 = vmatpush2.msra.mxu0 %v1415
    %1951 = vmatprep.subr.mxu0 %v1412
    %1952 = vmatpush2.msra.mxu0 %v1411
    %1953 = vmatprep.subr.mxu0 %v1408
    %1954 = vmatpush2.msra.mxu0 %v1407
    %1955 = vmatprep.subr.mxu0 %v1404
    %1956 = vmatpush2.msra.mxu0 %v1403
    %1957 = vmatprep.subr.mxu0 %v1400
    %1958 = vmatpush2.msra.mxu0 %v1399
    %1959 = vmatprep.subr.mxu0 %v1396
    %1960 = vmatpush2.msra.mxu0 %v1395
    %1961 = vmatprep.subr.mxu0 %v1392
    %1962 = vmatpush2.msra.mxu0 %v1391
    %1963 = vmatprep.subr.mxu0 %v1388
    %1964 = vmatpush2.msra.mxu0 %v1387
    %1965 = vmatprep.mubr.f32.mxu0 %v1874
    %1966 = vmatmul.mubr.f32.gmra.mxu0 %v1866
    %v1967 = vpop.f32.mrf.mxu0
    %v1968 = vadd.f32 %v1840, %v1967
    %v1969 = vpop.f32.mrf.mxu0
    %v1970 = vadd.f32 %v1844, %v1969
    %1971 = vdwg.mxu0
    %1972 = vmatprep.subr.mxu0 %v1512
    %1973 = vmatpush1.msra.mxu0 %v1511
    %1974 = vmatprep.subr.mxu0 %v1508
    %1975 = vmatpush1.msra.mxu0 %v1507
    %1976 = vmatprep.subr.mxu0 %v1504
    %1977 = vmatpush1.msra.mxu0 %v1503
    %1978 = vmatprep.subr.mxu0 %v1500
    %1979 = vmatpush1.msra.mxu0 %v1499
    %1980 = vmatprep.subr.mxu0 %v1496
    %1981 = vmatpush1.msra.mxu0 %v1495
    %1982 = vmatprep.subr.mxu0 %v1492
    %1983 = vmatpush1.msra.mxu0 %v1491
    %1984 = vmatprep.subr.mxu0 %v1488
    %1985 = vmatpush1.msra.mxu0 %v1487
    %1986 = vmatprep.subr.mxu0 %v1484
    %1987 = vmatpush1.msra.mxu0 %v1483
    %1988 = vmatprep.subr.mxu0 %v1480
    %1989 = vmatpush1.msra.mxu0 %v1479
    %1990 = vmatprep.subr.mxu0 %v1476
    %1991 = vmatpush1.msra.mxu0 %v1475
    %1992 = vmatprep.subr.mxu0 %v1472
    %1993 = vmatpush1.msra.mxu0 %v1471
    %1994 = vmatprep.subr.mxu0 %v1468
    %1995 = vmatpush1.msra.mxu0 %v1467
    %1996 = vmatprep.subr.mxu0 %v1464
    %1997 = vmatpush1.msra.mxu0 %v1463
    %1998 = vmatprep.subr.mxu0 %v1460
    %1999 = vmatpush1.msra.mxu0 %v1459
    %2000 = vmatprep.subr.mxu0 %v1456
    %2001 = vmatpush1.msra.mxu0 %v1455
    %2002 = vmatprep.subr.mxu0 %v1452
    %2003 = vmatpush1.msra.mxu0 %v1451
    %2004 = vmatprep.subr.mxu0 %v1576
    %2005 = vmatpush2.msra.mxu0 %v1575
    %2006 = vmatprep.subr.mxu0 %v1572
    %2007 = vmatpush2.msra.mxu0 %v1571
    %2008 = vmatprep.subr.mxu0 %v1568
    %2009 = vmatpush2.msra.mxu0 %v1567
    %2010 = vmatprep.subr.mxu0 %v1564
    %2011 = vmatpush2.msra.mxu0 %v1563
    %2012 = vmatprep.subr.mxu0 %v1560
    %2013 = vmatpush2.msra.mxu0 %v1559
    %2014 = vmatprep.subr.mxu0 %v1556
    %2015 = vmatpush2.msra.mxu0 %v1555
    %2016 = vmatprep.subr.mxu0 %v1552
    %2017 = vmatpush2.msra.mxu0 %v1551
    %2018 = vmatprep.subr.mxu0 %v1548
    %2019 = vmatpush2.msra.mxu0 %v1547
    %2020 = vmatprep.subr.mxu0 %v1544
    %2021 = vmatpush2.msra.mxu0 %v1543
    %2022 = vmatprep.subr.mxu0 %v1540
    %2023 = vmatpush2.msra.mxu0 %v1539
    %2024 = vmatprep.subr.mxu0 %v1536
    %2025 = vmatpush2.msra.mxu0 %v1535
    %2026 = vmatprep.subr.mxu0 %v1532
    %2027 = vmatpush2.msra.mxu0 %v1531
    %2028 = vmatprep.subr.mxu0 %v1528
    %2029 = vmatpush2.msra.mxu0 %v1527
    %2030 = vmatprep.subr.mxu0 %v1524
    %2031 = vmatpush2.msra.mxu0 %v1523
    %2032 = vmatprep.subr.mxu0 %v1520
    %2033 = vmatpush2.msra.mxu0 %v1519
    %2034 = vmatprep.subr.mxu0 %v1516
    %2035 = vmatpush2.msra.mxu0 %v1515
    %2036 = vmatprep.mubr.f32.mxu0 %v1875
    %2037 = vmatmul.mubr.f32.gmra.mxu0 %v1873
    %v2038 = vpop.f32.mrf.mxu0
    %v2039 = vadd.f32 %v1968, %v2038
    %v2040 = vpop.f32.mrf.mxu0
    %v2041 = vadd.f32 %v1970, %v2040
    %2042 = vdwg.mxu0
    %2043 = vmatprep.subr.mxu0 %v1640
    %2044 = vmatpush1.msra.mxu0 %v1639
    %2045 = vmatprep.subr.mxu0 %v1636
    %2046 = vmatpush1.msra.mxu0 %v1635
    %2047 = vmatprep.subr.mxu0 %v1632
    %2048 = vmatpush1.msra.mxu0 %v1631
    %2049 = vmatprep.subr.mxu0 %v1628
    %2050 = vmatpush1.msra.mxu0 %v1627
    %2051 = vmatprep.subr.mxu0 %v1624
    %2052 = vmatpush1.msra.mxu0 %v1623
    %2053 = vmatprep.subr.mxu0 %v1620
    %2054 = vmatpush1.msra.mxu0 %v1619
    %2055 = vmatprep.subr.mxu0 %v1616
    %2056 = vmatpush1.msra.mxu0 %v1615
    %2057 = vmatprep.subr.mxu0 %v1612
    %2058 = vmatpush1.msra.mxu0 %v1611
    %2059 = vmatprep.subr.mxu0 %v1608
    %2060 = vmatpush1.msra.mxu0 %v1607
    %2061 = vmatprep.subr.mxu0 %v1604
    %2062 = vmatpush1.msra.mxu0 %v1603
    %2063 = vmatprep.subr.mxu0 %v1600
    %2064 = vmatpush1.msra.mxu0 %v1599
    %2065 = vmatprep.subr.mxu0 %v1596
    %2066 = vmatpush1.msra.mxu0 %v1595
    %2067 = vmatprep.subr.mxu0 %v1592
    %2068 = vmatpush1.msra.mxu0 %v1591
    %2069 = vmatprep.subr.mxu0 %v1588
    %2070 = vmatpush1.msra.mxu0 %v1587
    %2071 = vmatprep.subr.mxu0 %v1584
    %2072 = vmatpush1.msra.mxu0 %v1583
    %2073 = vmatprep.subr.mxu0 %v1580
    %2074 = vmatpush1.msra.mxu0 %v1579
    %2075 = vmatprep.subr.mxu0 %v1704
    %2076 = vmatpush2.msra.mxu0 %v1703
    %2077 = vmatprep.subr.mxu0 %v1700
    %2078 = vmatpush2.msra.mxu0 %v1699
    %2079 = vmatprep.subr.mxu0 %v1696
    %2080 = vmatpush2.msra.mxu0 %v1695
    %2081 = vmatprep.subr.mxu0 %v1692
    %2082 = vmatpush2.msra.mxu0 %v1691
    %2083 = vmatprep.subr.mxu0 %v1688
    %2084 = vmatpush2.msra.mxu0 %v1687
    %2085 = vmatprep.subr.mxu0 %v1684
    %2086 = vmatpush2.msra.mxu0 %v1683
    %2087 = vmatprep.subr.mxu0 %v1680
    %2088 = vmatpush2.msra.mxu0 %v1679
    %2089 = vmatprep.subr.mxu0 %v1676
    %2090 = vmatpush2.msra.mxu0 %v1675
    %2091 = vmatprep.subr.mxu0 %v1672
    %2092 = vmatpush2.msra.mxu0 %v1671
    %2093 = vmatprep.subr.mxu0 %v1668
    %2094 = vmatpush2.msra.mxu0 %v1667
    %2095 = vmatprep.subr.mxu0 %v1664
    %2096 = vmatpush2.msra.mxu0 %v1663
    %2097 = vmatprep.subr.mxu0 %v1660
    %2098 = vmatpush2.msra.mxu0 %v1659
    %2099 = vmatprep.subr.mxu0 %v1656
    %2100 = vmatpush2.msra.mxu0 %v1655
    %2101 = vmatprep.subr.mxu0 %v1652
    %2102 = vmatpush2.msra.mxu0 %v1651
    %2103 = vmatprep.subr.mxu0 %v1648
    %2104 = vmatpush2.msra.mxu0 %v1647
    %2105 = vmatprep.subr.mxu0 %v1644
    %2106 = vmatpush2.msra.mxu0 %v1643
    %2107 = vmatprep.mubr.f32.mxu0 %v1891
    %2108 = vmatmul.mubr.f32.gmra.mxu0 %v1883
    %v2109 = vpop.f32.mrf.mxu0
    %v2110 = vadd.f32 %v2039, %v2109
    %v2111 = vpop.f32.mrf.mxu0
    %v2112 = vadd.f32 %v2041, %v2111
    %2113 = vdwg.mxu0
    %2114 = vmatprep.subr.mxu0 %v1768
    %2115 = vmatpush1.msra.mxu0 %v1767
    %2116 = vmatprep.subr.mxu0 %v1764
    %2117 = vmatpush1.msra.mxu0 %v1763
    %2118 = vmatprep.subr.mxu0 %v1760
    %2119 = vmatpush1.msra.mxu0 %v1759
    %2120 = vmatprep.subr.mxu0 %v1756
    %2121 = vmatpush1.msra.mxu0 %v1755
    %2122 = vmatprep.subr.mxu0 %v1752
    %2123 = vmatpush1.msra.mxu0 %v1751
    %2124 = vmatprep.subr.mxu0 %v1748
    %2125 = vmatpush1.msra.mxu0 %v1747
    %2126 = vmatprep.subr.mxu0 %v1744
    %2127 = vmatpush1.msra.mxu0 %v1743
    %2128 = vmatprep.subr.mxu0 %v1740
    %2129 = vmatpush1.msra.mxu0 %v1739
    %2130 = vmatprep.subr.mxu0 %v1736
    %2131 = vmatpush1.msra.mxu0 %v1735
    %2132 = vmatprep.subr.mxu0 %v1732
    %2133 = vmatpush1.msra.mxu0 %v1731
    %2134 = vmatprep.subr.mxu0 %v1728
    %2135 = vmatpush1.msra.mxu0 %v1727
    %2136 = vmatprep.subr.mxu0 %v1724
    %2137 = vmatpush1.msra.mxu0 %v1723
    %2138 = vmatprep.subr.mxu0 %v1720
    %2139 = vmatpush1.msra.mxu0 %v1719
    %2140 = vmatprep.subr.mxu0 %v1716
    %2141 = vmatpush1.msra.mxu0 %v1715
    %2142 = vmatprep.subr.mxu0 %v1712
    %2143 = vmatpush1.msra.mxu0 %v1711
    %2144 = vmatprep.subr.mxu0 %v1708
    %2145 = vmatpush1.msra.mxu0 %v1707
    %2146 = vmatprep.subr.mxu0 %v1832
    %2147 = vmatpush2.msra.mxu0 %v1831
    %2148 = vmatprep.subr.mxu0 %v1828
    %2149 = vmatpush2.msra.mxu0 %v1827
    %2150 = vmatprep.subr.mxu0 %v1824
    %2151 = vmatpush2.msra.mxu0 %v1823
    %2152 = vmatprep.subr.mxu0 %v1820
    %2153 = vmatpush2.msra.mxu0 %v1819
    %2154 = vmatprep.subr.mxu0 %v1816
    %2155 = vmatpush2.msra.mxu0 %v1815
    %2156 = vmatprep.subr.mxu0 %v1812
    %2157 = vmatpush2.msra.mxu0 %v1811
    %2158 = vmatprep.subr.mxu0 %v1808
    %2159 = vmatpush2.msra.mxu0 %v1807
    %2160 = vmatprep.subr.mxu0 %v1804
    %2161 = vmatpush2.msra.mxu0 %v1803
    %2162 = vmatprep.subr.mxu0 %v1800
    %2163 = vmatpush2.msra.mxu0 %v1799
    %2164 = vmatprep.subr.mxu0 %v1796
    %2165 = vmatpush2.msra.mxu0 %v1795
    %2166 = vmatprep.subr.mxu0 %v1792
    %2167 = vmatpush2.msra.mxu0 %v1791
    %2168 = vmatprep.subr.mxu0 %v1788
    %2169 = vmatpush2.msra.mxu0 %v1787
    %2170 = vmatprep.subr.mxu0 %v1784
    %2171 = vmatpush2.msra.mxu0 %v1783
    %2172 = vmatprep.subr.mxu0 %v1780
    %2173 = vmatpush2.msra.mxu0 %v1779
    %2174 = vmatprep.subr.mxu0 %v1776
    %2175 = vmatpush2.msra.mxu0 %v1775
    %2176 = vmatprep.subr.mxu0 %v1772
    %2177 = vmatpush2.msra.mxu0 %v1771
    %2178 = vmatprep.mubr.f32.mxu0 %v1892
    %2179 = vmatmul.mubr.f32.gmra.mxu0 %v1890
    %v2180 = vpop.f32.mrf.mxu0
    %v2181 = vadd.f32 %v2110, %v2180
    %v2182 = vpop.f32.mrf.mxu0
    %v2183 = vadd.f32 %v2112, %v2182
    %2184 = vdwg.mxu0
    %2185 = vmatprep.subr.mxu0 %v1386
    %2186 = vmatpush1.msra.mxu0 %v1385
    %2187 = vmatprep.subr.mxu0 %v1382
    %2188 = vmatpush1.msra.mxu0 %v1381
    %2189 = vmatprep.subr.mxu0 %v1378
    %2190 = vmatpush1.msra.mxu0 %v1377
    %2191 = vmatprep.subr.mxu0 %v1374
    %2192 = vmatpush1.msra.mxu0 %v1373
    %2193 = vmatprep.subr.mxu0 %v1370
    %2194 = vmatpush1.msra.mxu0 %v1369
    %2195 = vmatprep.subr.mxu0 %v1366
    %2196 = vmatpush1.msra.mxu0 %v1365
    %2197 = vmatprep.subr.mxu0 %v1362
    %2198 = vmatpush1.msra.mxu0 %v1361
    %2199 = vmatprep.subr.mxu0 %v1358
    %2200 = vmatpush1.msra.mxu0 %v1357
    %2201 = vmatprep.subr.mxu0 %v1354
    %2202 = vmatpush1.msra.mxu0 %v1353
    %2203 = vmatprep.subr.mxu0 %v1350
    %2204 = vmatpush1.msra.mxu0 %v1349
    %2205 = vmatprep.subr.mxu0 %v1346
    %2206 = vmatpush1.msra.mxu0 %v1345
    %2207 = vmatprep.subr.mxu0 %v1342
    %2208 = vmatpush1.msra.mxu0 %v1341
    %2209 = vmatprep.subr.mxu0 %v1338
    %2210 = vmatpush1.msra.mxu0 %v1337
    %2211 = vmatprep.subr.mxu0 %v1334
    %2212 = vmatpush1.msra.mxu0 %v1333
    %2213 = vmatprep.subr.mxu0 %v1330
    %2214 = vmatpush1.msra.mxu0 %v1329
    %2215 = vmatprep.subr.mxu0 %v1326
    %2216 = vmatpush1.msra.mxu0 %v1325
    %2217 = vmatprep.subr.mxu0 %v1450
    %2218 = vmatpush2.msra.mxu0 %v1449
    %2219 = vmatprep.subr.mxu0 %v1446
    %2220 = vmatpush2.msra.mxu0 %v1445
    %2221 = vmatprep.subr.mxu0 %v1442
    %2222 = vmatpush2.msra.mxu0 %v1441
    %2223 = vmatprep.subr.mxu0 %v1438
    %2224 = vmatpush2.msra.mxu0 %v1437
    %2225 = vmatprep.subr.mxu0 %v1434
    %2226 = vmatpush2.msra.mxu0 %v1433
    %2227 = vmatprep.subr.mxu0 %v1430
    %2228 = vmatpush2.msra.mxu0 %v1429
    %2229 = vmatprep.subr.mxu0 %v1426
    %2230 = vmatpush2.msra.mxu0 %v1425
    %2231 = vmatprep.subr.mxu0 %v1422
    %2232 = vmatpush2.msra.mxu0 %v1421
    %2233 = vmatprep.subr.mxu0 %v1418
    %2234 = vmatpush2.msra.mxu0 %v1417
    %2235 = vmatprep.subr.mxu0 %v1414
    %2236 = vmatpush2.msra.mxu0 %v1413
    %2237 = vmatprep.subr.mxu0 %v1410
    %2238 = vmatpush2.msra.mxu0 %v1409
    %2239 = vmatprep.subr.mxu0 %v1406
    %2240 = vmatpush2.msra.mxu0 %v1405
    %2241 = vmatprep.subr.mxu0 %v1402
    %2242 = vmatpush2.msra.mxu0 %v1401
    %2243 = vmatprep.subr.mxu0 %v1398
    %2244 = vmatpush2.msra.mxu0 %v1397
    %2245 = vmatprep.subr.mxu0 %v1394
    %2246 = vmatpush2.msra.mxu0 %v1393
    %2247 = vmatprep.subr.mxu0 %v1390
    %2248 = vmatpush2.msra.mxu0 %v1389
    %2249 = vmatprep.mubr.f32.mxu0 %v1874
    %2250 = vmatmul.mubr.f32.gmra.mxu0 %v1866
    %v2251 = vpop.f32.mrf.mxu0
    %v2252 = vadd.f32 %v1848, %v2251
    %v2253 = vpop.f32.mrf.mxu0
    %v2254 = vadd.f32 %v1852, %v2253
    %2255 = vdwg.mxu0
    %2256 = vmatprep.subr.mxu0 %v1514
    %2257 = vmatpush1.msra.mxu0 %v1513
    %2258 = vmatprep.subr.mxu0 %v1510
    %2259 = vmatpush1.msra.mxu0 %v1509
    %2260 = vmatprep.subr.mxu0 %v1506
    %2261 = vmatpush1.msra.mxu0 %v1505
    %2262 = vmatprep.subr.mxu0 %v1502
    %2263 = vmatpush1.msra.mxu0 %v1501
    %2264 = vmatprep.subr.mxu0 %v1498
    %2265 = vmatpush1.msra.mxu0 %v1497
    %2266 = vmatprep.subr.mxu0 %v1494
    %2267 = vmatpush1.msra.mxu0 %v1493
    %2268 = vmatprep.subr.mxu0 %v1490
    %2269 = vmatpush1.msra.mxu0 %v1489
    %2270 = vmatprep.subr.mxu0 %v1486
    %2271 = vmatpush1.msra.mxu0 %v1485
    %2272 = vmatprep.subr.mxu0 %v1482
    %2273 = vmatpush1.msra.mxu0 %v1481
    %2274 = vmatprep.subr.mxu0 %v1478
    %2275 = vmatpush1.msra.mxu0 %v1477
    %2276 = vmatprep.subr.mxu0 %v1474
    %2277 = vmatpush1.msra.mxu0 %v1473
    %2278 = vmatprep.subr.mxu0 %v1470
    %2279 = vmatpush1.msra.mxu0 %v1469
    %2280 = vmatprep.subr.mxu0 %v1466
    %2281 = vmatpush1.msra.mxu0 %v1465
    %2282 = vmatprep.subr.mxu0 %v1462
    %2283 = vmatpush1.msra.mxu0 %v1461
    %2284 = vmatprep.subr.mxu0 %v1458
    %2285 = vmatpush1.msra.mxu0 %v1457
    %2286 = vmatprep.subr.mxu0 %v1454
    %2287 = vmatpush1.msra.mxu0 %v1453
    %2288 = vmatprep.subr.mxu0 %v1578
    %2289 = vmatpush2.msra.mxu0 %v1577
    %2290 = vmatprep.subr.mxu0 %v1574
    %2291 = vmatpush2.msra.mxu0 %v1573
    %2292 = vmatprep.subr.mxu0 %v1570
    %2293 = vmatpush2.msra.mxu0 %v1569
    %2294 = vmatprep.subr.mxu0 %v1566
    %2295 = vmatpush2.msra.mxu0 %v1565
    %2296 = vmatprep.subr.mxu0 %v1562
    %2297 = vmatpush2.msra.mxu0 %v1561
    %2298 = vmatprep.subr.mxu0 %v1558
    %2299 = vmatpush2.msra.mxu0 %v1557
    %2300 = vmatprep.subr.mxu0 %v1554
    %2301 = vmatpush2.msra.mxu0 %v1553
    %2302 = vmatprep.subr.mxu0 %v1550
    %2303 = vmatpush2.msra.mxu0 %v1549
    %2304 = vmatprep.subr.mxu0 %v1546
    %2305 = vmatpush2.msra.mxu0 %v1545
    %2306 = vmatprep.subr.mxu0 %v1542
    %2307 = vmatpush2.msra.mxu0 %v1541
    %2308 = vmatprep.subr.mxu0 %v1538
    %2309 = vmatpush2.msra.mxu0 %v1537
    %2310 = vmatprep.subr.mxu0 %v1534
    %2311 = vmatpush2.msra.mxu0 %v1533
    %2312 = vmatprep.subr.mxu0 %v1530
    %2313 = vmatpush2.msra.mxu0 %v1529
    %2314 = vmatprep.subr.mxu0 %v1526
    %2315 = vmatpush2.msra.mxu0 %v1525
    %2316 = vmatprep.subr.mxu0 %v1522
    %2317 = vmatpush2.msra.mxu0 %v1521
    %2318 = vmatprep.subr.mxu0 %v1518
    %2319 = vmatpush2.msra.mxu0 %v1517
    %2320 = vmatprep.mubr.f32.mxu0 %v1875
    %2321 = vmatmul.mubr.f32.gmra.mxu0 %v1873
    %v2322 = vpop.f32.mrf.mxu0
    %v2323 = vadd.f32 %v2252, %v2322
    %v2324 = vpop.f32.mrf.mxu0
    %v2325 = vadd.f32 %v2254, %v2324
    %2326 = vdwg.mxu0
    %2327 = vmatprep.subr.mxu0 %v1642
    %2328 = vmatpush1.msra.mxu0 %v1641
    %2329 = vmatprep.subr.mxu0 %v1638
    %2330 = vmatpush1.msra.mxu0 %v1637
    %2331 = vmatprep.subr.mxu0 %v1634
    %2332 = vmatpush1.msra.mxu0 %v1633
    %2333 = vmatprep.subr.mxu0 %v1630
    %2334 = vmatpush1.msra.mxu0 %v1629
    %2335 = vmatprep.subr.mxu0 %v1626
    %2336 = vmatpush1.msra.mxu0 %v1625
    %2337 = vmatprep.subr.mxu0 %v1622
    %2338 = vmatpush1.msra.mxu0 %v1621
    %2339 = vmatprep.subr.mxu0 %v1618
    %2340 = vmatpush1.msra.mxu0 %v1617
    %2341 = vmatprep.subr.mxu0 %v1614
    %2342 = vmatpush1.msra.mxu0 %v1613
    %2343 = vmatprep.subr.mxu0 %v1610
    %2344 = vmatpush1.msra.mxu0 %v1609
    %2345 = vmatprep.subr.mxu0 %v1606
    %2346 = vmatpush1.msra.mxu0 %v1605
    %2347 = vmatprep.subr.mxu0 %v1602
    %2348 = vmatpush1.msra.mxu0 %v1601
    %2349 = vmatprep.subr.mxu0 %v1598
    %2350 = vmatpush1.msra.mxu0 %v1597
    %2351 = vmatprep.subr.mxu0 %v1594
    %2352 = vmatpush1.msra.mxu0 %v1593
    %2353 = vmatprep.subr.mxu0 %v1590
    %2354 = vmatpush1.msra.mxu0 %v1589
    %2355 = vmatprep.subr.mxu0 %v1586
    %2356 = vmatpush1.msra.mxu0 %v1585
    %2357 = vmatprep.subr.mxu0 %v1582
    %2358 = vmatpush1.msra.mxu0 %v1581
    %2359 = vmatprep.subr.mxu0 %v1706
    %2360 = vmatpush2.msra.mxu0 %v1705
    %2361 = vmatprep.subr.mxu0 %v1702
    %2362 = vmatpush2.msra.mxu0 %v1701
    %2363 = vmatprep.subr.mxu0 %v1698
    %2364 = vmatpush2.msra.mxu0 %v1697
    %2365 = vmatprep.subr.mxu0 %v1694
    %2366 = vmatpush2.msra.mxu0 %v1693
    %2367 = vmatprep.subr.mxu0 %v1690
    %2368 = vmatpush2.msra.mxu0 %v1689
    %2369 = vmatprep.subr.mxu0 %v1686
    %2370 = vmatpush2.msra.mxu0 %v1685
    %2371 = vmatprep.subr.mxu0 %v1682
    %2372 = vmatpush2.msra.mxu0 %v1681
    %2373 = vmatprep.subr.mxu0 %v1678
    %2374 = vmatpush2.msra.mxu0 %v1677
    %2375 = vmatprep.subr.mxu0 %v1674
    %2376 = vmatpush2.msra.mxu0 %v1673
    %2377 = vmatprep.subr.mxu0 %v1670
    %2378 = vmatpush2.msra.mxu0 %v1669
    %2379 = vmatprep.subr.mxu0 %v1666
    %2380 = vmatpush2.msra.mxu0 %v1665
    %2381 = vmatprep.subr.mxu0 %v1662
    %2382 = vmatpush2.msra.mxu0 %v1661
    %2383 = vmatprep.subr.mxu0 %v1658
    %2384 = vmatpush2.msra.mxu0 %v1657
    %2385 = vmatprep.subr.mxu0 %v1654
    %2386 = vmatpush2.msra.mxu0 %v1653
    %2387 = vmatprep.subr.mxu0 %v1650
    %2388 = vmatpush2.msra.mxu0 %v1649
    %2389 = vmatprep.subr.mxu0 %v1646
    %2390 = vmatpush2.msra.mxu0 %v1645
    %2391 = vmatprep.mubr.f32.mxu0 %v1891
    %2392 = vmatmul.mubr.f32.gmra.mxu0 %v1883
    %v2393 = vpop.f32.mrf.mxu0
    %v2394 = vadd.f32 %v2323, %v2393
    %v2395 = vpop.f32.mrf.mxu0
    %v2396 = vadd.f32 %v2325, %v2395
    %2397 = vdwg.mxu0
    %2398 = vmatprep.subr.mxu0 %v1770
    %2399 = vmatpush1.msra.mxu0 %v1769
    %2400 = vmatprep.subr.mxu0 %v1766
    %2401 = vmatpush1.msra.mxu0 %v1765
    %2402 = vmatprep.subr.mxu0 %v1762
    %2403 = vmatpush1.msra.mxu0 %v1761
    %2404 = vmatprep.subr.mxu0 %v1758
    %2405 = vmatpush1.msra.mxu0 %v1757
    %2406 = vmatprep.subr.mxu0 %v1754
    %2407 = vmatpush1.msra.mxu0 %v1753
    %2408 = vmatprep.subr.mxu0 %v1750
    %2409 = vmatpush1.msra.mxu0 %v1749
    %2410 = vmatprep.subr.mxu0 %v1746
    %2411 = vmatpush1.msra.mxu0 %v1745
    %2412 = vmatprep.subr.mxu0 %v1742
    %2413 = vmatpush1.msra.mxu0 %v1741
    %2414 = vmatprep.subr.mxu0 %v1738
    %2415 = vmatpush1.msra.mxu0 %v1737
    %2416 = vmatprep.subr.mxu0 %v1734
    %2417 = vmatpush1.msra.mxu0 %v1733
    %2418 = vmatprep.subr.mxu0 %v1730
    %2419 = vmatpush1.msra.mxu0 %v1729
    %2420 = vmatprep.subr.mxu0 %v1726
    %2421 = vmatpush1.msra.mxu0 %v1725
    %2422 = vmatprep.subr.mxu0 %v1722
    %2423 = vmatpush1.msra.mxu0 %v1721
    %2424 = vmatprep.subr.mxu0 %v1718
    %2425 = vmatpush1.msra.mxu0 %v1717
    %2426 = vmatprep.subr.mxu0 %v1714
    %2427 = vmatpush1.msra.mxu0 %v1713
    %2428 = vmatprep.subr.mxu0 %v1710
    %2429 = vmatpush1.msra.mxu0 %v1709
    %2430 = vmatprep.subr.mxu0 %v1834
    %2431 = vmatpush2.msra.mxu0 %v1833
    %2432 = vmatprep.subr.mxu0 %v1830
    %2433 = vmatpush2.msra.mxu0 %v1829
    %2434 = vmatprep.subr.mxu0 %v1826
    %2435 = vmatpush2.msra.mxu0 %v1825
    %2436 = vmatprep.subr.mxu0 %v1822
    %2437 = vmatpush2.msra.mxu0 %v1821
    %2438 = vmatprep.subr.mxu0 %v1818
    %2439 = vmatpush2.msra.mxu0 %v1817
    %2440 = vmatprep.subr.mxu0 %v1814
    %2441 = vmatpush2.msra.mxu0 %v1813
    %2442 = vmatprep.subr.mxu0 %v1810
    %2443 = vmatpush2.msra.mxu0 %v1809
    %2444 = vmatprep.subr.mxu0 %v1806
    %2445 = vmatpush2.msra.mxu0 %v1805
    %2446 = vmatprep.subr.mxu0 %v1802
    %2447 = vmatpush2.msra.mxu0 %v1801
    %2448 = vmatprep.subr.mxu0 %v1798
    %2449 = vmatpush2.msra.mxu0 %v1797
    %2450 = vmatprep.subr.mxu0 %v1794
    %2451 = vmatpush2.msra.mxu0 %v1793
    %2452 = vmatprep.subr.mxu0 %v1790
    %2453 = vmatpush2.msra.mxu0 %v1789
    %2454 = vmatprep.subr.mxu0 %v1786
    %2455 = vmatpush2.msra.mxu0 %v1785
    %2456 = vmatprep.subr.mxu0 %v1782
    %2457 = vmatpush2.msra.mxu0 %v1781
    %2458 = vmatprep.subr.mxu0 %v1778
    %2459 = vmatpush2.msra.mxu0 %v1777
    %2460 = vmatprep.subr.mxu0 %v1774
    %2461 = vmatpush2.msra.mxu0 %v1773
    %2462 = vmatprep.mubr.f32.mxu0 %v1892
    %2463 = vmatmul.mubr.f32.gmra.mxu0 %v1890
    %v2464 = vpop.f32.mrf.mxu0
    %v2465 = vadd.f32 %v2394, %v2464
    %v2466 = vpop.f32.mrf.mxu0
    %v2467 = vadd.f32 %v2396, %v2466
    %2468 = vdwg.mxu0
    %v2469 = vmax.f32 %v2181, 0.0
    %v2470 = vmax.f32 %v2183, 0.0
    %v2471 = vmax.f32 %v2465, 0.0
    %v2472 = vmax.f32 %v2467, 0.0
    %v2473 = vld [vmem:[%s5] sm:$0xff]
    %v2474 = vld [vmem:[%s5 + $0x8] sm:$0xff]
    %v2475 = vld [vmem:[%s5 + $0x10] sm:$0xff]
    %v2476 = vld [vmem:[%s5 + $0x18] sm:$0xff]
    %v2477 = vld [vmem:[%s5 + $0x20] sm:$0xff]
    %v2478 = vld [vmem:[%s5 + $0x28] sm:$0xff]
    %v2479 = vld [vmem:[%s5 + $0x30] sm:$0xff]
    %v2480 = vld [vmem:[%s5 + $0x38] sm:$0xff]
    %v2481 = vld [vmem:[%s5 + $0x40] sm:$0xff]
    %v2482 = vld [vmem:[%s5 + $0x48] sm:$0xff]
    %v2483 = vld [vmem:[%s5 + $0x50] sm:$0xff]
    %v2484 = vld [vmem:[%s5 + $0x58] sm:$0xff]
    %v2485 = vld [vmem:[%s5 + $0x60] sm:$0xff]
    %v2486 = vld [vmem:[%s5 + $0x68] sm:$0xff]
    %v2487 = vld [vmem:[%s5 + $0x70] sm:$0xff]
    %v2488 = vld [vmem:[%s5 + $0x78] sm:$0xff]
    %v2489 = vld [vmem:[%s5 + $0x80] sm:$0xff]
    %v2490 = vld [vmem:[%s5 + $0x88] sm:$0xff]
    %v2491 = vld [vmem:[%s5 + $0x90] sm:$0xff]
    %v2492 = vld [vmem:[%s5 + $0x98] sm:$0xff]
    %v2493 = vld [vmem:[%s5 + $0xa0] sm:$0xff]
    %v2494 = vld [vmem:[%s5 + $0xa8] sm:$0xff]
    %v2495 = vld [vmem:[%s5 + $0xb0] sm:$0xff]
    %v2496 = vld [vmem:[%s5 + $0xb8] sm:$0xff]
    %v2497 = vld [vmem:[%s5 + $0xc0] sm:$0xff]
    %v2498 = vld [vmem:[%s5 + $0xc8] sm:$0xff]
    %v2499 = vld [vmem:[%s5 + $0xd0] sm:$0xff]
    %v2500 = vld [vmem:[%s5 + $0xd8] sm:$0xff]
    %v2501 = vld [vmem:[%s5 + $0xe0] sm:$0xff]
    %v2502 = vld [vmem:[%s5 + $0xe8] sm:$0xff]
    %v2503 = vld [vmem:[%s5 + $0xf0] sm:$0xff]
    %v2504 = vld [vmem:[%s5 + $0xf8] sm:$0xff]
    %v2505 = vld [vmem:[%s5 + $0x100] sm:$0xff]
    %v2506 = vld [vmem:[%s5 + $0x108] sm:$0xff]
    %v2507 = vld [vmem:[%s5 + $0x110] sm:$0xff]
    %v2508 = vld [vmem:[%s5 + $0x118] sm:$0xff]
    %v2509 = vld [vmem:[%s5 + $0x120] sm:$0xff]
    %v2510 = vld [vmem:[%s5 + $0x128] sm:$0xff]
    %v2511 = vld [vmem:[%s5 + $0x130] sm:$0xff]
    %v2512 = vld [vmem:[%s5 + $0x138] sm:$0xff]
    %v2513 = vld [vmem:[%s5 + $0x140] sm:$0xff]
    %v2514 = vld [vmem:[%s5 + $0x148] sm:$0xff]
    %v2515 = vld [vmem:[%s5 + $0x150] sm:$0xff]
    %v2516 = vld [vmem:[%s5 + $0x158] sm:$0xff]
    %v2517 = vld [vmem:[%s5 + $0x160] sm:$0xff]
    %v2518 = vld [vmem:[%s5 + $0x168] sm:$0xff]
    %v2519 = vld [vmem:[%s5 + $0x170] sm:$0xff]
    %v2520 = vld [vmem:[%s5 + $0x178] sm:$0xff]
    %v2521 = vld [vmem:[%s5 + $0x180] sm:$0xff]
    %v2522 = vld [vmem:[%s5 + $0x188] sm:$0xff]
    %v2523 = vld [vmem:[%s5 + $0x190] sm:$0xff]
    %v2524 = vld [vmem:[%s5 + $0x198] sm:$0xff]
    %v2525 = vld [vmem:[%s5 + $0x1a0] sm:$0xff]
    %v2526 = vld [vmem:[%s5 + $0x1a8] sm:$0xff]
    %v2527 = vld [vmem:[%s5 + $0x1b0] sm:$0xff]
    %v2528 = vld [vmem:[%s5 + $0x1b8] sm:$0xff]
    %v2529 = vld [vmem:[%s5 + $0x1c0] sm:$0xff]
    %v2530 = vld [vmem:[%s5 + $0x1c8] sm:$0xff]
    %v2531 = vld [vmem:[%s5 + $0x1d0] sm:$0xff]
    %v2532 = vld [vmem:[%s5 + $0x1d8] sm:$0xff]
    %v2533 = vld [vmem:[%s5 + $0x1e0] sm:$0xff]
    %v2534 = vld [vmem:[%s5 + $0x1e8] sm:$0xff]
    %v2535 = vld [vmem:[%s5 + $0x1f0] sm:$0xff]
    %v2536 = vld [vmem:[%s5 + $0x1f8] sm:$0xff]
    %v2537 = vld [vmem:[%s5 + $0x200] sm:$0xff]
    %v2538 = vld [vmem:[%s5 + $0x208] sm:$0xff]
    %v2539 = vld [vmem:[%s5 + $0x210] sm:$0xff]
    %v2540 = vld [vmem:[%s5 + $0x218] sm:$0xff]
    %v2541 = vld [vmem:[%s5 + $0x220] sm:$0xff]
    %v2542 = vld [vmem:[%s5 + $0x228] sm:$0xff]
    %v2543 = vld [vmem:[%s5 + $0x230] sm:$0xff]
    %v2544 = vld [vmem:[%s5 + $0x238] sm:$0xff]
    %v2545 = vld [vmem:[%s5 + $0x240] sm:$0xff]
    %v2546 = vld [vmem:[%s5 + $0x248] sm:$0xff]
    %v2547 = vld [vmem:[%s5 + $0x250] sm:$0xff]
    %v2548 = vld [vmem:[%s5 + $0x258] sm:$0xff]
    %v2549 = vld [vmem:[%s5 + $0x260] sm:$0xff]
    %v2550 = vld [vmem:[%s5 + $0x268] sm:$0xff]
    %v2551 = vld [vmem:[%s5 + $0x270] sm:$0xff]
    %v2552 = vld [vmem:[%s5 + $0x278] sm:$0xff]
    %v2553 = vld [vmem:[%s5 + $0x280] sm:$0xff]
    %v2554 = vld [vmem:[%s5 + $0x288] sm:$0xff]
    %v2555 = vld [vmem:[%s5 + $0x290] sm:$0xff]
    %v2556 = vld [vmem:[%s5 + $0x298] sm:$0xff]
    %v2557 = vld [vmem:[%s5 + $0x2a0] sm:$0xff]
    %v2558 = vld [vmem:[%s5 + $0x2a8] sm:$0xff]
    %v2559 = vld [vmem:[%s5 + $0x2b0] sm:$0xff]
    %v2560 = vld [vmem:[%s5 + $0x2b8] sm:$0xff]
    %v2561 = vld [vmem:[%s5 + $0x2c0] sm:$0xff]
    %v2562 = vld [vmem:[%s5 + $0x2c8] sm:$0xff]
    %v2563 = vld [vmem:[%s5 + $0x2d0] sm:$0xff]
    %v2564 = vld [vmem:[%s5 + $0x2d8] sm:$0xff]
    %v2565 = vld [vmem:[%s5 + $0x2e0] sm:$0xff]
    %v2566 = vld [vmem:[%s5 + $0x2e8] sm:$0xff]
    %v2567 = vld [vmem:[%s5 + $0x2f0] sm:$0xff]
    %v2568 = vld [vmem:[%s5 + $0x2f8] sm:$0xff]
    %v2569 = vld [vmem:[%s5 + $0x300] sm:$0xff]
    %v2570 = vld [vmem:[%s5 + $0x308] sm:$0xff]
    %v2571 = vld [vmem:[%s5 + $0x310] sm:$0xff]
    %v2572 = vld [vmem:[%s5 + $0x318] sm:$0xff]
    %v2573 = vld [vmem:[%s5 + $0x320] sm:$0xff]
    %v2574 = vld [vmem:[%s5 + $0x328] sm:$0xff]
    %v2575 = vld [vmem:[%s5 + $0x330] sm:$0xff]
    %v2576 = vld [vmem:[%s5 + $0x338] sm:$0xff]
    %v2577 = vld [vmem:[%s5 + $0x340] sm:$0xff]
    %v2578 = vld [vmem:[%s5 + $0x348] sm:$0xff]
    %v2579 = vld [vmem:[%s5 + $0x350] sm:$0xff]
    %v2580 = vld [vmem:[%s5 + $0x358] sm:$0xff]
    %v2581 = vld [vmem:[%s5 + $0x360] sm:$0xff]
    %v2582 = vld [vmem:[%s5 + $0x368] sm:$0xff]
    %v2583 = vld [vmem:[%s5 + $0x370] sm:$0xff]
    %v2584 = vld [vmem:[%s5 + $0x378] sm:$0xff]
    %v2585 = vld [vmem:[%s5 + $0x380] sm:$0xff]
    %v2586 = vld [vmem:[%s5 + $0x388] sm:$0xff]
    %v2587 = vld [vmem:[%s5 + $0x390] sm:$0xff]
    %v2588 = vld [vmem:[%s5 + $0x398] sm:$0xff]
    %v2589 = vld [vmem:[%s5 + $0x3a0] sm:$0xff]
    %v2590 = vld [vmem:[%s5 + $0x3a8] sm:$0xff]
    %v2591 = vld [vmem:[%s5 + $0x3b0] sm:$0xff]
    %v2592 = vld [vmem:[%s5 + $0x3b8] sm:$0xff]
    %v2593 = vld [vmem:[%s5 + $0x3c0] sm:$0xff]
    %v2594 = vld [vmem:[%s5 + $0x3c8] sm:$0xff]
    %v2595 = vld [vmem:[%s5 + $0x3d0] sm:$0xff]
    %v2596 = vld [vmem:[%s5 + $0x3d8] sm:$0xff]
    %v2597 = vld [vmem:[%s5 + $0x3e0] sm:$0xff]
    %v2598 = vld [vmem:[%s5 + $0x3e8] sm:$0xff]
    %v2599 = vld [vmem:[%s5 + $0x3f0] sm:$0xff]
    %v2600 = vld [vmem:[%s5 + $0x3f8] sm:$0xff]
    %v2601 = vld [vmem:[%s6] sm:$0x3]
    %v2603 = vlaneseq
    %v2604 = vshrl.u32 %v2603, 7
    %v2605 = vsub.s32 0, %v2604
    %v2606 = vrot.slane %v2601, %v2605
    %v2607 = vlaneseq
    %v2608 = vshrl.u32 %v2607, 7
    %v2609 = vsub.s32 1, %v2608
    %v2610 = vrot.slane %v2601, %v2609
    %2613 = vmatprep.subr.mxu0 %v2504
    %2614 = vmatpush1.msra.mxu0 %v2503
    %2615 = vmatprep.subr.mxu0 %v2502
    %2616 = vmatpush1.msra.mxu0 %v2501
    %2617 = vmatprep.subr.mxu0 %v2500
    %2618 = vmatpush1.msra.mxu0 %v2499
    %2619 = vmatprep.subr.mxu0 %v2498
    %2620 = vmatpush1.msra.mxu0 %v2497
    %2621 = vmatprep.subr.mxu0 %v2496
    %2622 = vmatpush1.msra.mxu0 %v2495
    %2623 = vmatprep.subr.mxu0 %v2494
    %2624 = vmatpush1.msra.mxu0 %v2493
    %2625 = vmatprep.subr.mxu0 %v2492
    %2626 = vmatpush1.msra.mxu0 %v2491
    %2627 = vmatprep.subr.mxu0 %v2490
    %2628 = vmatpush1.msra.mxu0 %v2489
    %2629 = vmatprep.subr.mxu0 %v2488
    %2630 = vmatpush1.msra.mxu0 %v2487
    %2631 = vmatprep.subr.mxu0 %v2486
    %2632 = vmatpush1.msra.mxu0 %v2485
    %2633 = vmatprep.subr.mxu0 %v2484
    %2634 = vmatpush1.msra.mxu0 %v2483
    %2635 = vmatprep.subr.mxu0 %v2482
    %2636 = vmatpush1.msra.mxu0 %v2481
    %2637 = vmatprep.subr.mxu0 %v2480
    %2638 = vmatpush1.msra.mxu0 %v2479
    %2639 = vmatprep.subr.mxu0 %v2478
    %2640 = vmatpush1.msra.mxu0 %v2477
    %2641 = vmatprep.subr.mxu0 %v2476
    %2642 = vmatpush1.msra.mxu0 %v2475
    %2643 = vmatprep.subr.mxu0 %v2474
    %2644 = vmatpush1.msra.mxu0 %v2473
    %2645 = vmatprep.subr.mxu0 %v2536
    %2646 = vmatpush2.msra.mxu0 %v2535
    %2647 = vmatprep.subr.mxu0 %v2534
    %2648 = vmatpush2.msra.mxu0 %v2533
    %2649 = vmatprep.subr.mxu0 %v2532
    %2650 = vmatpush2.msra.mxu0 %v2531
    %2651 = vmatprep.subr.mxu0 %v2530
    %2652 = vmatpush2.msra.mxu0 %v2529
    %2653 = vmatprep.subr.mxu0 %v2528
    %2654 = vmatpush2.msra.mxu0 %v2527
    %2655 = vmatprep.subr.mxu0 %v2526
    %2656 = vmatpush2.msra.mxu0 %v2525
    %2657 = vmatprep.subr.mxu0 %v2524
    %2658 = vmatpush2.msra.mxu0 %v2523
    %2659 = vmatprep.subr.mxu0 %v2522
    %2660 = vmatpush2.msra.mxu0 %v2521
    %2661 = vmatprep.subr.mxu0 %v2520
    %2662 = vmatpush2.msra.mxu0 %v2519
    %2663 = vmatprep.subr.mxu0 %v2518
    %2664 = vmatpush2.msra.mxu0 %v2517
    %2665 = vmatprep.subr.mxu0 %v2516
    %2666 = vmatpush2.msra.mxu0 %v2515
    %2667 = vmatprep.subr.mxu0 %v2514
    %2668 = vmatpush2.msra.mxu0 %v2513
    %2669 = vmatprep.subr.mxu0 %v2512
    %2670 = vmatpush2.msra.mxu0 %v2511
    %2671 = vmatprep.subr.mxu0 %v2510
    %2672 = vmatpush2.msra.mxu0 %v2509
    %2673 = vmatprep.subr.mxu0 %v2508
    %2674 = vmatpush2.msra.mxu0 %v2507
    %2675 = vmatprep.subr.mxu0 %v2506
    %2676 = vmatpush2.msra.mxu0 %v2505
    %2677 = vmatprep.mubr.f32.mxu0 %v2470
    %2678 = vmatmul.mubr.f32.gmra.mxu0 %v2469
    %v2679 = vpop.f32.mrf.mxu0
    %v2680 = vadd.f32 %v2606, %v2679
    %v2681 = vpop.f32.mrf.mxu0
    %v2682 = vadd.f32 %v2610, %v2681
    %2683 = vdwg.mxu0
    %2684 = vmatprep.subr.mxu0 %v2568
    %2685 = vmatpush1.msra.mxu0 %v2567
    %2686 = vmatprep.subr.mxu0 %v2566
    %2687 = vmatpush1.msra.mxu0 %v2565
    %2688 = vmatprep.subr.mxu0 %v2564
    %2689 = vmatpush1.msra.mxu0 %v2563
    %2690 = vmatprep.subr.mxu0 %v2562
    %2691 = vmatpush1.msra.mxu0 %v2561
    %2692 = vmatprep.subr.mxu0 %v2560
    %2693 = vmatpush1.msra.mxu0 %v2559
    %2694 = vmatprep.subr.mxu0 %v2558
    %2695 = vmatpush1.msra.mxu0 %v2557
    %2696 = vmatprep.subr.mxu0 %v2556
    %2697 = vmatpush1.msra.mxu0 %v2555
    %2698 = vmatprep.subr.mxu0 %v2554
    %2699 = vmatpush1.msra.mxu0 %v2553
    %2700 = vmatprep.subr.mxu0 %v2552
    %2701 = vmatpush1.msra.mxu0 %v2551
    %2702 = vmatprep.subr.mxu0 %v2550
    %2703 = vmatpush1.msra.mxu0 %v2549
    %2704 = vmatprep.subr.mxu0 %v2548
    %2705 = vmatpush1.msra.mxu0 %v2547
    %2706 = vmatprep.subr.mxu0 %v2546
    %2707 = vmatpush1.msra.mxu0 %v2545
    %2708 = vmatprep.subr.mxu0 %v2544
    %2709 = vmatpush1.msra.mxu0 %v2543
    %2710 = vmatprep.subr.mxu0 %v2542
    %2711 = vmatpush1.msra.mxu0 %v2541
    %2712 = vmatprep.subr.mxu0 %v2540
    %2713 = vmatpush1.msra.mxu0 %v2539
    %2714 = vmatprep.subr.mxu0 %v2538
    %2715 = vmatpush1.msra.mxu0 %v2537
    %2716 = vmatprep.subr.mxu0 %v2600
    %2717 = vmatpush2.msra.mxu0 %v2599
    %2718 = vmatprep.subr.mxu0 %v2598
    %2719 = vmatpush2.msra.mxu0 %v2597
    %2720 = vmatprep.subr.mxu0 %v2596
    %2721 = vmatpush2.msra.mxu0 %v2595
    %2722 = vmatprep.subr.mxu0 %v2594
    %2723 = vmatpush2.msra.mxu0 %v2593
    %2724 = vmatprep.subr.mxu0 %v2592
    %2725 = vmatpush2.msra.mxu0 %v2591
    %2726 = vmatprep.subr.mxu0 %v2590
    %2727 = vmatpush2.msra.mxu0 %v2589
    %2728 = vmatprep.subr.mxu0 %v2588
    %2729 = vmatpush2.msra.mxu0 %v2587
    %2730 = vmatprep.subr.mxu0 %v2586
    %2731 = vmatpush2.msra.mxu0 %v2585
    %2732 = vmatprep.subr.mxu0 %v2584
    %2733 = vmatpush2.msra.mxu0 %v2583
    %2734 = vmatprep.subr.mxu0 %v2582
    %2735 = vmatpush2.msra.mxu0 %v2581
    %2736 = vmatprep.subr.mxu0 %v2580
    %2737 = vmatpush2.msra.mxu0 %v2579
    %2738 = vmatprep.subr.mxu0 %v2578
    %2739 = vmatpush2.msra.mxu0 %v2577
    %2740 = vmatprep.subr.mxu0 %v2576
    %2741 = vmatpush2.msra.mxu0 %v2575
    %2742 = vmatprep.subr.mxu0 %v2574
    %2743 = vmatpush2.msra.mxu0 %v2573
    %2744 = vmatprep.subr.mxu0 %v2572
    %2745 = vmatpush2.msra.mxu0 %v2571
    %2746 = vmatprep.subr.mxu0 %v2570
    %2747 = vmatpush2.msra.mxu0 %v2569
    %2748 = vmatprep.mubr.f32.mxu0 %v2472
    %2749 = vmatmul.mubr.f32.gmra.mxu0 %v2471
    %v2750 = vpop.f32.mrf.mxu0
    %v2751 = vadd.f32 %v2680, %v2750
    %v2752 = vpop.f32.mrf.mxu0
    %v2753 = vadd.f32 %v2682, %v2752
    %2754 = vdwg.mxu0
    %v2755 = vmax.f32 %v2751, 0.0
    %v2756 = vmax.f32 %v2753, 0.0
    %v2757 = vld [vmem:[%s7] sm:$0xff]
    %v2758 = vld [vmem:[%s7 + $0x8] sm:$0xff]
    %v2759 = vld [vmem:[%s7 + $0x10] sm:$0xff]
    %v2760 = vld [vmem:[%s7 + $0x18] sm:$0xff]
    %v2761 = vld [vmem:[%s7 + $0x20] sm:$0xff]
    %v2762 = vld [vmem:[%s7 + $0x28] sm:$0xff]
    %v2763 = vld [vmem:[%s7 + $0x30] sm:$0xff]
    %v2764 = vld [vmem:[%s7 + $0x38] sm:$0xff]
    %v2765 = vld [vmem:[%s7 + $0x40] sm:$0xff]
    %v2766 = vld [vmem:[%s7 + $0x48] sm:$0xff]
    %v2767 = vld [vmem:[%s7 + $0x50] sm:$0xff]
    %v2768 = vld [vmem:[%s7 + $0x58] sm:$0xff]
    %v2769 = vld [vmem:[%s7 + $0x60] sm:$0xff]
    %v2770 = vld [vmem:[%s7 + $0x68] sm:$0xff]
    %v2771 = vld [vmem:[%s7 + $0x70] sm:$0xff]
    %v2772 = vld [vmem:[%s7 + $0x78] sm:$0xff]
    %v2773 = vld [vmem:[%s7 + $0x80] sm:$0xff]
    %v2774 = vld [vmem:[%s7 + $0x88] sm:$0xff]
    %v2775 = vld [vmem:[%s7 + $0x90] sm:$0xff]
    %v2776 = vld [vmem:[%s7 + $0x98] sm:$0xff]
    %v2777 = vld [vmem:[%s7 + $0xa0] sm:$0xff]
    %v2778 = vld [vmem:[%s7 + $0xa8] sm:$0xff]
    %v2779 = vld [vmem:[%s7 + $0xb0] sm:$0xff]
    %v2780 = vld [vmem:[%s7 + $0xb8] sm:$0xff]
    %v2781 = vld [vmem:[%s7 + $0xc0] sm:$0xff]
    %v2782 = vld [vmem:[%s7 + $0xc8] sm:$0xff]
    %v2783 = vld [vmem:[%s7 + $0xd0] sm:$0xff]
    %v2784 = vld [vmem:[%s7 + $0xd8] sm:$0xff]
    %v2785 = vld [vmem:[%s7 + $0xe0] sm:$0xff]
    %v2786 = vld [vmem:[%s7 + $0xe8] sm:$0xff]
    %v2787 = vld [vmem:[%s7 + $0xf0] sm:$0xff]
    %v2788 = vld [vmem:[%s7 + $0xf8] sm:$0xff]
    %v2789 = vld [vmem:[%s8] sm:$0x1]
    %v2791 = vlaneseq
    %v2792 = vshrl.u32 %v2791, 7
    %v2793 = vsub.s32 0, %v2792
    %v2794 = vrot.slane %v2789, %v2793
    %2796 = vmatprep.subr.mxu0 0.0
    %2797 = vmatpush1.msra.mxu0 %v2772
    %2798 = vmatprep.subr.mxu0 0.0
    %2799 = vmatpush1.msra.mxu0 %v2771
    %2800 = vmatprep.subr.mxu0 0.0
    %2801 = vmatpush1.msra.mxu0 %v2770
    %2802 = vmatprep.subr.mxu0 0.0
    %2803 = vmatpush1.msra.mxu0 %v2769
    %2804 = vmatprep.subr.mxu0 0.0
    %2805 = vmatpush1.msra.mxu0 %v2768
    %2806 = vmatprep.subr.mxu0 0.0
    %2807 = vmatpush1.msra.mxu0 %v2767
    %2808 = vmatprep.subr.mxu0 0.0
    %2809 = vmatpush1.msra.mxu0 %v2766
    %2810 = vmatprep.subr.mxu0 0.0
    %2811 = vmatpush1.msra.mxu0 %v2765
    %2812 = vmatprep.subr.mxu0 0.0
    %2813 = vmatpush1.msra.mxu0 %v2764
    %2814 = vmatprep.subr.mxu0 0.0
    %2815 = vmatpush1.msra.mxu0 %v2763
    %2816 = vmatprep.subr.mxu0 0.0
    %2817 = vmatpush1.msra.mxu0 %v2762
    %2818 = vmatprep.subr.mxu0 0.0
    %2819 = vmatpush1.msra.mxu0 %v2761
    %2820 = vmatprep.subr.mxu0 0.0
    %2821 = vmatpush1.msra.mxu0 %v2760
    %2822 = vmatprep.subr.mxu0 0.0
    %2823 = vmatpush1.msra.mxu0 %v2759
    %2824 = vmatprep.subr.mxu0 0.0
    %2825 = vmatpush1.msra.mxu0 %v2758
    %2826 = vmatprep.subr.mxu0 0.0
    %2827 = vmatpush1.msra.mxu0 %v2757
    %2828 = vmatprep.subr.mxu0 0.0
    %2829 = vmatpush2.msra.mxu0 %v2788
    %2830 = vmatprep.subr.mxu0 0.0
    %2831 = vmatpush2.msra.mxu0 %v2787
    %2832 = vmatprep.subr.mxu0 0.0
    %2833 = vmatpush2.msra.mxu0 %v2786
    %2834 = vmatprep.subr.mxu0 0.0
    %2835 = vmatpush2.msra.mxu0 %v2785
    %2836 = vmatprep.subr.mxu0 0.0
    %2837 = vmatpush2.msra.mxu0 %v2784
    %2838 = vmatprep.subr.mxu0 0.0
    %2839 = vmatpush2.msra.mxu0 %v2783
    %2840 = vmatprep.subr.mxu0 0.0
    %2841 = vmatpush2.msra.mxu0 %v2782
    %2842 = vmatprep.subr.mxu0 0.0
    %2843 = vmatpush2.msra.mxu0 %v2781
    %2844 = vmatprep.subr.mxu0 0.0
    %2845 = vmatpush2.msra.mxu0 %v2780
    %2846 = vmatprep.subr.mxu0 0.0
    %2847 = vmatpush2.msra.mxu0 %v2779
    %2848 = vmatprep.subr.mxu0 0.0
    %2849 = vmatpush2.msra.mxu0 %v2778
    %2850 = vmatprep.subr.mxu0 0.0
    %2851 = vmatpush2.msra.mxu0 %v2777
    %2852 = vmatprep.subr.mxu0 0.0
    %2853 = vmatpush2.msra.mxu0 %v2776
    %2854 = vmatprep.subr.mxu0 0.0
    %2855 = vmatpush2.msra.mxu0 %v2775
    %2856 = vmatprep.subr.mxu0 0.0
    %2857 = vmatpush2.msra.mxu0 %v2774
    %2858 = vmatprep.subr.mxu0 0.0
    %2859 = vmatpush2.msra.mxu0 %v2773
    %2860 = vmatprep.mubr.f32.mxu0 %v2756
    %2861 = vmatmul.mubr.f32.gmra.mxu0 %v2755
    %v2862 = vpop.f32.mrf.mxu0
    %v2863 = vadd.f32 %v2794, %v2862
    %v2864 = vpop.f32.mrf.mxu0
    %2865 = vdwg.mxu0
    %2866 = vst [vmem:[%s9] sm:$0x3] %v2863
  $region45: #{sentinel_densenet_forward.1} parent=0 // pred_fallthru
    _
  // Predicated region
  $region46: #{sentinel_densenet_forward.1} parent=0 // pred_check
    _
  $region47: #{sentinel_densenet_forward.1} parent=0 // pred_check_branch
    %2868 = sbr.rel (0) target = $region49
  $region48: #{sentinel_densenet_forward.1} parent=0 // pred_region
    _
  $region49: #{sentinel_densenet_forward.1} parent=0 // pred_fallthru
    _
  // Predicated region
  $region50: #{sentinel_densenet_forward.1} parent=0 // pred_check
    _
  $region51: #{sentinel_densenet_forward.1} parent=0 // pred_check_branch
    %2870 = sbr.rel (0) target = $region53
  $region52: #{sentinel_densenet_forward.1} parent=0 // pred_region
    _
  $region53: #{sentinel_densenet_forward.1} parent=0 // pred_fallthru
    _

</llo_original>
